<compile_context>
chip_gen: v7x
topology: tpu7x:2x2x1
jax: 0.10.0
libtpu: 0.0.40
codegen_flags: <defaults>
</compile_context>

<pallas_src>
import functools
import math

import jax
import jax.numpy as jnp
import numpy as np
from jax.experimental import pallas as pl
from jax.experimental.pallas import tpu as pltpu

# ----- small synthetic config (stand-in for the wrapped Llama checkpoint) -----
BATCH = 2
SEQ_IN = 8
MAX_SEQ_LEN = 16          # max_seq_len of WrappedLlamaModel
HIDDEN = 32
N_HEADS = 4
HEAD_DIM = HIDDEN // N_HEADS
FFN_DIM = 64
VOCAB = 64
N_LAYERS = 2
EPS = 1e-5

_COMPILER_PARAMS = pltpu.CompilerParams(
    dimension_semantics=("parallel",),            # batch axis -> both TCs on v7x
    vmem_limit_bytes=32 * 1024 * 1024,
)


# ----------------------------- fused Pallas kernel ----------------------------
def _fused_llama_kernel(h_ref, rms_ref, wqkv_ref, wo_ref, w13_ref, w2_ref,
                        wout_ref, cos_ref, sin_ref, o_ref,
                        *, n_layers, n_heads, head_dim, eps):
    """Entire Llama forward for one batch element, fully resident on-chip."""
    S, H = h_ref.shape[1], h_ref.shape[2]
    half = head_dim // 2
    scale = 1.0 / math.sqrt(head_dim)

    # causal mask generated in-kernel, hoisted out of all loops
    row = jax.lax.broadcasted_iota(jnp.int32, (S, S), 0)
    col = jax.lax.broadcasted_iota(jnp.int32, (S, S), 1)
    causal = col <= row

    cos = cos_ref[...]                                     # (S, head_dim) f32
    sin = sin_ref[...]

    def rmsnorm(x, w):                                     # f32 reduce, rsqrt on EUP
        var = jnp.mean(x * x, axis=-1, keepdims=True)
        return (x * jax.lax.rsqrt(var + eps) * w).astype(jnp.bfloat16)

    def rope(xh):                                          # (S, head_dim) f32
        # TODO(synk): at production head_dim=128 use pltpu.roll (XLU slot) instead of
        # the sub-lane slice+concat rotate-half below.
        xr = jnp.concatenate([-xh[:, half:], xh[:, :half]], axis=-1)
        return xh * cos + xr * sin

    # residual stream stays in f32 vregs for the whole forward (no HBM round trips)
    x = h_ref[0].astype(jnp.float32)                       # (S, H)

    for l in range(n_layers):                              # static unroll; weights VMEM-resident
        # -------- attention block: RMSNorm -> QKV -> RoPE -> causal softmax -> Wo -> +res
        xn = rmsnorm(x, rms_ref[2 * l])
        q = jnp.dot(xn, wqkv_ref[3 * l + 0], preferred_element_type=jnp.float32)
        k = jnp.dot(xn, wqkv_ref[3 * l + 1], preferred_element_type=jnp.float32)
        v = jnp.dot(xn, wqkv_ref[3 * l + 2], preferred_element_type=jnp.float32)

        heads = []
        for hd in range(n_heads):                          # per-head column slices (no masking)
            lo = hd * head_dim
            qh = rope(q[:, lo:lo + head_dim]).astype(jnp.bfloat16)
            kh = rope(k[:, lo:lo + head_dim]).astype(jnp.bfloat16)
            vh = v[:, lo:lo + head_dim].astype(jnp.bfloat16)
            s = jax.lax.dot_general(qh, kh, (((1,), (1,)), ((), ())),
                                    preferred_element_type=jnp.float32) * scale
            s = jnp.where(causal, s, -1e9)                 # hard causal mask
            m = jnp.max(s, axis=-1, keepdims=True)
            p = jnp.exp(s - m)
            p = p / jnp.sum(p, axis=-1, keepdims=True)
            heads.append(jnp.dot(p.astype(jnp.bfloat16), vh,
                                 preferred_element_type=jnp.float32))
        o = jnp.concatenate(heads, axis=-1).astype(jnp.bfloat16)      # (S, H)
        x = x + jnp.dot(o, wo_ref[l], preferred_element_type=jnp.float32)

        # -------- FFN block: RMSNorm -> SwiGLU -> +res
        xn = rmsnorm(x, rms_ref[2 * l + 1])
        g = jnp.dot(xn, w13_ref[2 * l + 0], preferred_element_type=jnp.float32)
        u = jnp.dot(xn, w13_ref[2 * l + 1], preferred_element_type=jnp.float32)
        act = ((g * jax.nn.sigmoid(g)) * u).astype(jnp.bfloat16)      # SwiGLU
        x = x + jnp.dot(act, w2_ref[l], preferred_element_type=jnp.float32)

    # -------- final RMSNorm + output projection (logits in f32)
    # TODO(synk): at production VOCAB, tile N lane-dense (>=128) and emit bf16 logits.
    xn = rmsnorm(x, rms_ref[2 * n_layers])
    o_ref[0] = jnp.dot(xn, wout_ref[...], preferred_element_type=jnp.float32)


# ------------------------------ kernel wrapper --------------------------------
def llama_forward_fused(h0, rms_stack, wqkv, wo, w13, w2, w_out, cos, sin):
    B, S, H = h0.shape
    V = w_out.shape[1]
    L = N_LAYERS
    F = FFN_DIM
    kern = functools.partial(_fused_llama_kernel, n_layers=N_LAYERS,
                             n_heads=N_HEADS, head_dim=HEAD_DIM, eps=EPS)
    return pl.pallas_call(
        kern,
        out_shape=jax.ShapeDtypeStruct((B, S, V), jnp.float32),
        grid=(B,),
        in_specs=[
            pl.BlockSpec((1, S, H), lambda b: (b, 0, 0)),              # residual stream in
            pl.BlockSpec((2 * L + 1, 1, H), lambda b: (0, 0, 0)),      # all RMSNorm weights
            pl.BlockSpec((3 * L, H, H), lambda b: (0, 0, 0)),          # q|k|v per layer
            pl.BlockSpec((L, H, H), lambda b: (0, 0, 0)),              # Wo per layer
            pl.BlockSpec((2 * L, H, F), lambda b: (0, 0, 0)),          # gate|up per layer
            pl.BlockSpec((L, F, H), lambda b: (0, 0, 0)),              # down per layer
            pl.BlockSpec((H, V), lambda b: (0, 0)),                    # output projection
            pl.BlockSpec((S, HEAD_DIM), lambda b: (0, 0)),             # RoPE cos
            pl.BlockSpec((S, HEAD_DIM), lambda b: (0, 0)),             # RoPE sin
        ],
        out_specs=pl.BlockSpec((1, S, V), lambda b: (b, 0, 0)),
        compiler_params=_COMPILER_PARAMS,
    )(h0, rms_stack, wqkv, wo, w13, w2, w_out, cos, sin)


# ----------------------------- plain-JAX glue ---------------------------------
def rope_tables(seq_len, head_dim):
    half = head_dim // 2
    inv_freq = 1.0 / (10000.0 ** (jnp.arange(half, dtype=jnp.float32) / half))
    ang = jnp.arange(seq_len, dtype=jnp.float32)[:, None] * inv_freq[None, :]   # (S, half)
    cos_h, sin_h = jnp.cos(ang), jnp.sin(ang)
    cos = jnp.concatenate([cos_h, cos_h], axis=-1)      # (S, head_dim)
    sin = jnp.concatenate([sin_h, sin_h], axis=-1)
    return cos, sin


def init_params(key):
    def norm(k, shape, scale=0.02):
        return (scale * jax.random.normal(k, shape, dtype=jnp.float32)).astype(jnp.bfloat16)

    keys = jax.random.split(key, 2 + N_LAYERS)
    wqkv, wo, w13, w2 = [], [], [], []
    for l in range(N_LAYERS):
        ks = jax.random.split(keys[2 + l], 7)
        wqkv += [norm(ks[0], (HIDDEN, HIDDEN)),          # q
                 norm(ks[1], (HIDDEN, HIDDEN)),          # k
                 norm(ks[2], (HIDDEN, HIDDEN))]          # v
        wo.append(norm(ks[3], (HIDDEN, HIDDEN)))
        w13 += [norm(ks[4], (HIDDEN, FFN_DIM)),          # gate
                norm(ks[5], (HIDDEN, FFN_DIM))]          # up
        w2.append(norm(ks[6], (FFN_DIM, HIDDEN)))

    cos, sin = rope_tables(MAX_SEQ_LEN, HEAD_DIM)        # hoisted once at init
    return {
        "emb": norm(keys[0], (VOCAB, HIDDEN)),
        "w_out": norm(keys[1], (HIDDEN, VOCAB)),
        "rms": jnp.ones((2 * N_LAYERS + 1, 1, HIDDEN), jnp.float32),
        "wqkv": jnp.stack(wqkv, axis=0),                 # (3L, H, H)
        "wo": jnp.stack(wo, axis=0),                     # (L, H, H)
        "w13": jnp.stack(w13, axis=0),                   # (2L, H, F)
        "w2": jnp.stack(w2, axis=0),                     # (L, F, H)
        "cos": cos,
        "sin": sin,
    }


@jax.jit
def wrapped_llama_forward(params, tokens, input_pos=None):
    """Mirror of WrappedLlamaModel.forward (use_kv_cache=False). input_pos ignored."""
    B, T = tokens.shape
    if T != MAX_SEQ_LEN:
        tokens = jnp.pad(tokens, ((0, 0), (MAX_SEQ_LEN - T, 0)))     # left-pad, like F.pad((pad, 0))
    # TODO(synk): exact mask fill value of the wrapped executorch checkpoint is unknown; a hard
    # causal mask (-1e9) is generated inside the fused kernel instead of a bf16 (S,S) operand.
    h = jnp.take(params["emb"], tokens, axis=0)                      # (B, S, H) bf16 gather (XLA glue)
    logits = llama_forward_fused(h, params["rms"], params["wqkv"], params["wo"],
                                 params["w13"], params["w2"], params["w_out"],
                                 params["cos"], params["sin"])
    return logits, [], []                                            # use_kv_cache=False -> no caches


# ----------------------------- pure-JAX reference ------------------------------
def reference_forward(params, tokens):
    B, T = tokens.shape
    if T != MAX_SEQ_LEN:
        tokens = jnp.pad(tokens, ((0, 0), (MAX_SEQ_LEN - T, 0)))
    S = MAX_SEQ_LEN
    half = HEAD_DIM // 2
    cos, sin = params["cos"], params["sin"]
    causal = jnp.tril(jnp.ones((S, S), dtype=bool))
    scale = 1.0 / math.sqrt(HEAD_DIM)

    def rmsnorm(x, w):
        return (x * jax.lax.rsqrt(jnp.mean(x * x, -1, keepdims=True) + EPS) * w).astype(jnp.bfloat16)

    def rope(x4):                                        # (B, S, nh, D) f32
        xr = jnp.concatenate([-x4[..., half:], x4[..., :half]], axis=-1)
        return x4 * cos[None, :, None, :] + xr * sin[None, :, None, :]

    x = jnp.take(params["emb"], tokens, axis=0).astype(jnp.float32).reshape(B * S, HIDDEN)
    for l in range(N_LAYERS):
        xn = rmsnorm(x, params["rms"][2 * l])
        q = jnp.dot(xn, params["wqkv"][3 * l + 0], preferred_element_type=jnp.float32)
        k = jnp.dot(xn, params["wqkv"][3 * l + 1], preferred_element_type=jnp.float32)
        v = jnp.dot(xn, params["wqkv"][3 * l + 2], preferred_element_type=jnp.float32)
        q = rope(q.reshape(B, S, N_HEADS, HEAD_DIM)).astype(jnp.bfloat16)
        k = rope(k.reshape(B, S, N_HEADS, HEAD_DIM)).astype(jnp.bfloat16)
        v = v.reshape(B, S, N_HEADS, HEAD_DIM).astype(jnp.bfloat16)
        sc = jnp.einsum("bqhd,bkhd->bhqk", q, k, preferred_element_type=jnp.float32) * scale
        sc = jnp.where(causal[None, None], sc, -1e9)
        p = jnp.exp(sc - jnp.max(sc, axis=-1, keepdims=True))
        p = p / jnp.sum(p, axis=-1, keepdims=True)
        o = jnp.einsum("bhqk,bkhd->bqhd", p.astype(jnp.bfloat16), v,
                       preferred_element_type=jnp.float32)
        o = o.reshape(B * S, HIDDEN).astype(jnp.bfloat16)
        x = x + jnp.dot(o, params["wo"][l], preferred_element_type=jnp.float32)

        xn = rmsnorm(x, params["rms"][2 * l + 1])
        g = jnp.dot(xn, params["w13"][2 * l + 0], preferred_element_type=jnp.float32)
        u = jnp.dot(xn, params["w13"][2 * l + 1], preferred_element_type=jnp.float32)
        ff = jnp.dot(((g * jax.nn.sigmoid(g)) * u).astype(jnp.bfloat16), params["w2"][l],
                     preferred_element_type=jnp.float32)
        x = x + ff

    xn = rmsnorm(x, params["rms"][2 * N_LAYERS])
    return jnp.dot(xn, params["w_out"], preferred_element_type=jnp.float32).reshape(B, S, VOCAB)


# ------------------------------------ main -------------------------------------
if __name__ == "__main__":
    key = jax.random.PRNGKey(0)
    pkey, tkey = jax.random.split(key)
    params = init_params(pkey)
    tokens = jax.random.randint(tkey, (BATCH, SEQ_IN), 0, VOCAB, dtype=jnp.int32)

    logits, k_caches, v_caches = wrapped_llama_forward(params, tokens, None)
    logits = jax.block_until_ready(logits)

    assert logits.shape == (BATCH, MAX_SEQ_LEN, VOCAB)
    assert k_caches == [] and v_caches == []
    assert bool(jnp.all(jnp.isfinite(logits)))

    ref = jax.block_until_ready(reference_forward(params, tokens))
    np.testing.assert_allclose(np.asarray(logits), np.asarray(ref), rtol=5e-2, atol=1e-2)

    print("KERNEL_OK")
</pallas_src>

<mosaic_0001>
module attributes {stable_mosaic.version = 11 : i64} {
  func.func @_fused_llama_kernel(%arg0: i32, %arg1: memref<1x16x32xbf16, #tpu.memory_space<vmem>>, %arg2: memref<5x1x32xf32, #tpu.memory_space<vmem>>, %arg3: memref<6x32x32xbf16, #tpu.memory_space<vmem>>, %arg4: memref<2x32x32xbf16, #tpu.memory_space<vmem>>, %arg5: memref<4x32x64xbf16, #tpu.memory_space<vmem>>, %arg6: memref<2x64x32xbf16, #tpu.memory_space<vmem>>, %arg7: memref<32x64xbf16, #tpu.memory_space<vmem>>, %arg8: memref<16x8xf32, #tpu.memory_space<vmem>>, %arg9: memref<16x8xf32, #tpu.memory_space<vmem>>, %arg10: memref<1x16x64xf32, #tpu.memory_space<vmem>>) attributes {dimension_semantics = [#tpu.dimension_semantics<parallel>], iteration_bounds = array<i64: 2>, scalar_prefetch = 0 : i64, scratch_operands = 0 : i64, tpu.core_type = #tpu.core_type<tc>, window_params = [{transform_indices = @transform_0, window_bounds = array<i64: 1, 16, 32>}, {pipeline_mode = #tpu.pipeline_mode<synchronous>, transform_indices = @transform_1, window_bounds = array<i64: 5, 1, 32>}, {pipeline_mode = #tpu.pipeline_mode<synchronous>, transform_indices = @transform_2, window_bounds = array<i64: 6, 32, 32>}, {pipeline_mode = #tpu.pipeline_mode<synchronous>, transform_indices = @transform_3, window_bounds = array<i64: 2, 32, 32>}, {pipeline_mode = #tpu.pipeline_mode<synchronous>, transform_indices = @transform_4, window_bounds = array<i64: 4, 32, 64>}, {pipeline_mode = #tpu.pipeline_mode<synchronous>, transform_indices = @transform_5, window_bounds = array<i64: 2, 64, 32>}, {pipeline_mode = #tpu.pipeline_mode<synchronous>, transform_indices = @transform_6, window_bounds = array<i64: 32, 64>}, {pipeline_mode = #tpu.pipeline_mode<synchronous>, transform_indices = @transform_7, window_bounds = array<i64: 16, 8>}, {pipeline_mode = #tpu.pipeline_mode<synchronous>, transform_indices = @transform_8, window_bounds = array<i64: 16, 8>}, {transform_indices = @transform_9, window_bounds = array<i64: 1, 16, 64>}]} {
    %0 = tpu.iota {dimensions = array<i32: 0>} : vector<16x16xi32>
    %1 = tpu.iota {dimensions = array<i32: 1>} : vector<16x16xi32>
    %2 = arith.cmpi sle, %1, %0 : vector<16x16xi32>
    %c0 = arith.constant 0 : index
    %c0_0 = arith.constant 0 : index
    %3 = vector.load %arg8[%c0, %c0_0] : memref<16x8xf32, #tpu.memory_space<vmem>>, vector<16x8xf32>
    %c0_1 = arith.constant 0 : index
    %c0_2 = arith.constant 0 : index
    %4 = vector.load %arg9[%c0_1, %c0_2] : memref<16x8xf32, #tpu.memory_space<vmem>>, vector<16x8xf32>
    %c0_3 = arith.constant 0 : index
    %c0_4 = arith.constant 0 : index
    %c0_5 = arith.constant 0 : index
    %5 = vector.load %arg1[%c0_3, %c0_4, %c0_5] : memref<1x16x32xbf16, #tpu.memory_space<vmem>>, vector<1x16x32xbf16>
    %6 = vector.shape_cast %5 : vector<1x16x32xbf16> to vector<16x32xbf16>
    %7 = arith.extf %6 : vector<16x32xbf16> to vector<16x32xf32>
    %c0_6 = arith.constant 0 : index
    %c0_7 = arith.constant 0 : index
    %c0_8 = arith.constant 0 : index
    %8 = vector.load %arg2[%c0_6, %c0_7, %c0_8] : memref<5x1x32xf32, #tpu.memory_space<vmem>>, vector<1x1x32xf32>
    %9 = vector.shape_cast %8 : vector<1x1x32xf32> to vector<1x32xf32>
    %10 = arith.mulf %7, %7 : vector<16x32xf32>
    %cst = arith.constant dense<0.000000e+00> : vector<16xf32>
    %11 = vector.multi_reduction <add>, %10, %cst [1] : vector<16x32xf32> to vector<16xf32>
    %12 = vector.shape_cast %11 : vector<16xf32> to vector<16x1xf32>
    %cst_9 = arith.constant 3.200000e+01 : f32
    %13 = vector.broadcast %cst_9 : f32 to vector<16x1xf32>
    %14 = arith.divf %12, %13 : vector<16x1xf32>
    %cst_10 = arith.constant 9.99999974E-6 : f32
    %15 = vector.broadcast %cst_10 : f32 to vector<16x1xf32>
    %16 = arith.addf %14, %15 : vector<16x1xf32>
    %17 = math.rsqrt %16 : vector<16x1xf32>
    %18 = vector.broadcast %17 : vector<16x1xf32> to vector<16x32xf32>
    %19 = arith.mulf %7, %18 : vector<16x32xf32>
    %20 = vector.broadcast %9 : vector<1x32xf32> to vector<16x32xf32>
    %21 = arith.mulf %19, %20 : vector<16x32xf32>
    %22 = arith.truncf %21 : vector<16x32xf32> to vector<16x32xbf16>
    %c0_11 = arith.constant 0 : index
    %c0_12 = arith.constant 0 : index
    %c0_13 = arith.constant 0 : index
    %23 = vector.load %arg3[%c0_11, %c0_12, %c0_13] : memref<6x32x32xbf16, #tpu.memory_space<vmem>>, vector<1x32x32xbf16>
    %24 = vector.shape_cast %23 : vector<1x32x32xbf16> to vector<32x32xbf16>
    %cst_14 = arith.constant dense<0.000000e+00> : vector<16x32xf32>
    %25 = tpu.matmul %22, %24, %cst_14 {dimension_numbers = #tpu.dot_dimension_numbers<[1], [0], [0], [1], [0, 0, 1, 1], [], []>} : vector<16x32xbf16>, vector<32x32xbf16>, vector<16x32xf32> -> vector<16x32xf32>
    %c1 = arith.constant 1 : index
    %c0_15 = arith.constant 0 : index
    %c0_16 = arith.constant 0 : index
    %26 = vector.load %arg3[%c1, %c0_15, %c0_16] : memref<6x32x32xbf16, #tpu.memory_space<vmem>>, vector<1x32x32xbf16>
    %27 = vector.shape_cast %26 : vector<1x32x32xbf16> to vector<32x32xbf16>
    %cst_17 = arith.constant dense<0.000000e+00> : vector<16x32xf32>
    %28 = tpu.matmul %22, %27, %cst_17 {dimension_numbers = #tpu.dot_dimension_numbers<[1], [0], [0], [1], [0, 0, 1, 1], [], []>} : vector<16x32xbf16>, vector<32x32xbf16>, vector<16x32xf32> -> vector<16x32xf32>
    %c2 = arith.constant 2 : index
    %c0_18 = arith.constant 0 : index
    %c0_19 = arith.constant 0 : index
    %29 = vector.load %arg3[%c2, %c0_18, %c0_19] : memref<6x32x32xbf16, #tpu.memory_space<vmem>>, vector<1x32x32xbf16>
    %30 = vector.shape_cast %29 : vector<1x32x32xbf16> to vector<32x32xbf16>
    %cst_20 = arith.constant dense<0.000000e+00> : vector<16x32xf32>
    %31 = tpu.matmul %22, %30, %cst_20 {dimension_numbers = #tpu.dot_dimension_numbers<[1], [0], [0], [1], [0, 0, 1, 1], [], []>} : vector<16x32xbf16>, vector<32x32xbf16>, vector<16x32xf32> -> vector<16x32xf32>
    %32 = vector.extract_strided_slice %25 {offsets = [0, 0], sizes = [16, 8], strides = [1, 1]} : vector<16x32xf32> to vector<16x8xf32>
    %33 = vector.extract_strided_slice %32 {offsets = [0, 4], sizes = [16, 4], strides = [1, 1]} : vector<16x8xf32> to vector<16x4xf32>
    %cst_21 = arith.constant 0.000000e+00 : f32
    %34 = vector.broadcast %cst_21 : f32 to vector<16x4xf32>
    %35 = arith.subf %34, %33 : vector<16x4xf32>
    %36 = vector.extract_strided_slice %32 {offsets = [0, 0], sizes = [16, 4], strides = [1, 1]} : vector<16x8xf32> to vector<16x4xf32>
    %37 = tpu.concatenate %35, %36 in 1 : vector<16x4xf32>, vector<16x4xf32> -> vector<16x8xf32>
    %38 = arith.mulf %32, %3 : vector<16x8xf32>
    %39 = arith.mulf %37, %4 : vector<16x8xf32>
    %40 = arith.addf %38, %39 : vector<16x8xf32>
    %41 = arith.truncf %40 : vector<16x8xf32> to vector<16x8xbf16>
    %42 = vector.extract_strided_slice %28 {offsets = [0, 0], sizes = [16, 8], strides = [1, 1]} : vector<16x32xf32> to vector<16x8xf32>
    %43 = vector.extract_strided_slice %42 {offsets = [0, 4], sizes = [16, 4], strides = [1, 1]} : vector<16x8xf32> to vector<16x4xf32>
    %cst_22 = arith.constant 0.000000e+00 : f32
    %44 = vector.broadcast %cst_22 : f32 to vector<16x4xf32>
    %45 = arith.subf %44, %43 : vector<16x4xf32>
    %46 = vector.extract_strided_slice %42 {offsets = [0, 0], sizes = [16, 4], strides = [1, 1]} : vector<16x8xf32> to vector<16x4xf32>
    %47 = tpu.concatenate %45, %46 in 1 : vector<16x4xf32>, vector<16x4xf32> -> vector<16x8xf32>
    %48 = arith.mulf %42, %3 : vector<16x8xf32>
    %49 = arith.mulf %47, %4 : vector<16x8xf32>
    %50 = arith.addf %48, %49 : vector<16x8xf32>
    %51 = arith.truncf %50 : vector<16x8xf32> to vector<16x8xbf16>
    %52 = vector.extract_strided_slice %31 {offsets = [0, 0], sizes = [16, 8], strides = [1, 1]} : vector<16x32xf32> to vector<16x8xf32>
    %53 = arith.truncf %52 : vector<16x8xf32> to vector<16x8xbf16>
    %cst_23 = arith.constant dense<0.000000e+00> : vector<16x16xf32>
    %54 = tpu.matmul %41, %51, %cst_23 {dimension_numbers = #tpu.dot_dimension_numbers<[1], [1], [0], [0], [0, 0, 1, 0], [], []>} : vector<16x8xbf16>, vector<16x8xbf16>, vector<16x16xf32> -> vector<16x16xf32>
    %cst_24 = arith.constant 0.353553385 : f32
    %55 = vector.broadcast %cst_24 : f32 to vector<16x16xf32>
    %56 = arith.mulf %54, %55 : vector<16x16xf32>
    %cst_25 = arith.constant -1.000000e+09 : f32
    %57 = vector.broadcast %cst_25 : f32 to vector<16x16xf32>
    %58 = arith.select %2, %56, %57 : vector<16x16xi1>, vector<16x16xf32>
    %cst_26 = arith.constant dense<0xFF800000> : vector<16xf32>
    %59 = vector.multi_reduction <maximumf>, %58, %cst_26 [1] : vector<16x16xf32> to vector<16xf32>
    %60 = vector.shape_cast %59 : vector<16xf32> to vector<16x1xf32>
    %61 = vector.broadcast %60 : vector<16x1xf32> to vector<16x16xf32>
    %62 = arith.subf %58, %61 : vector<16x16xf32>
    %63 = math.exp %62 : vector<16x16xf32>
    %cst_27 = arith.constant dense<0.000000e+00> : vector<16xf32>
    %64 = vector.multi_reduction <add>, %63, %cst_27 [1] : vector<16x16xf32> to vector<16xf32>
    %65 = vector.shape_cast %64 : vector<16xf32> to vector<16x1xf32>
    %66 = vector.broadcast %65 : vector<16x1xf32> to vector<16x16xf32>
    %67 = arith.divf %63, %66 : vector<16x16xf32>
    %68 = arith.truncf %67 : vector<16x16xf32> to vector<16x16xbf16>
    %cst_28 = arith.constant dense<0.000000e+00> : vector<16x8xf32>
    %69 = tpu.matmul %68, %53, %cst_28 {dimension_numbers = #tpu.dot_dimension_numbers<[1], [0], [0], [1], [0, 0, 1, 1], [], []>} : vector<16x16xbf16>, vector<16x8xbf16>, vector<16x8xf32> -> vector<16x8xf32>
    %70 = vector.extract_strided_slice %25 {offsets = [0, 8], sizes = [16, 8], strides = [1, 1]} : vector<16x32xf32> to vector<16x8xf32>
    %71 = vector.extract_strided_slice %70 {offsets = [0, 4], sizes = [16, 4], strides = [1, 1]} : vector<16x8xf32> to vector<16x4xf32>
    %cst_29 = arith.constant 0.000000e+00 : f32
    %72 = vector.broadcast %cst_29 : f32 to vector<16x4xf32>
    %73 = arith.subf %72, %71 : vector<16x4xf32>
    %74 = vector.extract_strided_slice %70 {offsets = [0, 0], sizes = [16, 4], strides = [1, 1]} : vector<16x8xf32> to vector<16x4xf32>
    %75 = tpu.concatenate %73, %74 in 1 : vector<16x4xf32>, vector<16x4xf32> -> vector<16x8xf32>
    %76 = arith.mulf %70, %3 : vector<16x8xf32>
    %77 = arith.mulf %75, %4 : vector<16x8xf32>
    %78 = arith.addf %76, %77 : vector<16x8xf32>
    %79 = arith.truncf %78 : vector<16x8xf32> to vector<16x8xbf16>
    %80 = vector.extract_strided_slice %28 {offsets = [0, 8], sizes = [16, 8], strides = [1, 1]} : vector<16x32xf32> to vector<16x8xf32>
    %81 = vector.extract_strided_slice %80 {offsets = [0, 4], sizes = [16, 4], strides = [1, 1]} : vector<16x8xf32> to vector<16x4xf32>
    %cst_30 = arith.constant 0.000000e+00 : f32
    %82 = vector.broadcast %cst_30 : f32 to vector<16x4xf32>
    %83 = arith.subf %82, %81 : vector<16x4xf32>
    %84 = vector.extract_strided_slice %80 {offsets = [0, 0], sizes = [16, 4], strides = [1, 1]} : vector<16x8xf32> to vector<16x4xf32>
    %85 = tpu.concatenate %83, %84 in 1 : vector<16x4xf32>, vector<16x4xf32> -> vector<16x8xf32>
    %86 = arith.mulf %80, %3 : vector<16x8xf32>
    %87 = arith.mulf %85, %4 : vector<16x8xf32>
    %88 = arith.addf %86, %87 : vector<16x8xf32>
    %89 = arith.truncf %88 : vector<16x8xf32> to vector<16x8xbf16>
    %90 = vector.extract_strided_slice %31 {offsets = [0, 8], sizes = [16, 8], strides = [1, 1]} : vector<16x32xf32> to vector<16x8xf32>
    %91 = arith.truncf %90 : vector<16x8xf32> to vector<16x8xbf16>
    %cst_31 = arith.constant dense<0.000000e+00> : vector<16x16xf32>
    %92 = tpu.matmul %79, %89, %cst_31 {dimension_numbers = #tpu.dot_dimension_numbers<[1], [1], [0], [0], [0, 0, 1, 0], [], []>} : vector<16x8xbf16>, vector<16x8xbf16>, vector<16x16xf32> -> vector<16x16xf32>
    %cst_32 = arith.constant 0.353553385 : f32
    %93 = vector.broadcast %cst_32 : f32 to vector<16x16xf32>
    %94 = arith.mulf %92, %93 : vector<16x16xf32>
    %cst_33 = arith.constant -1.000000e+09 : f32
    %95 = vector.broadcast %cst_33 : f32 to vector<16x16xf32>
    %96 = arith.select %2, %94, %95 : vector<16x16xi1>, vector<16x16xf32>
    %cst_34 = arith.constant dense<0xFF800000> : vector<16xf32>
    %97 = vector.multi_reduction <maximumf>, %96, %cst_34 [1] : vector<16x16xf32> to vector<16xf32>
    %98 = vector.shape_cast %97 : vector<16xf32> to vector<16x1xf32>
    %99 = vector.broadcast %98 : vector<16x1xf32> to vector<16x16xf32>
    %100 = arith.subf %96, %99 : vector<16x16xf32>
    %101 = math.exp %100 : vector<16x16xf32>
    %cst_35 = arith.constant dense<0.000000e+00> : vector<16xf32>
    %102 = vector.multi_reduction <add>, %101, %cst_35 [1] : vector<16x16xf32> to vector<16xf32>
    %103 = vector.shape_cast %102 : vector<16xf32> to vector<16x1xf32>
    %104 = vector.broadcast %103 : vector<16x1xf32> to vector<16x16xf32>
    %105 = arith.divf %101, %104 : vector<16x16xf32>
    %106 = arith.truncf %105 : vector<16x16xf32> to vector<16x16xbf16>
    %cst_36 = arith.constant dense<0.000000e+00> : vector<16x8xf32>
    %107 = tpu.matmul %106, %91, %cst_36 {dimension_numbers = #tpu.dot_dimension_numbers<[1], [0], [0], [1], [0, 0, 1, 1], [], []>} : vector<16x16xbf16>, vector<16x8xbf16>, vector<16x8xf32> -> vector<16x8xf32>
    %108 = vector.extract_strided_slice %25 {offsets = [0, 16], sizes = [16, 8], strides = [1, 1]} : vector<16x32xf32> to vector<16x8xf32>
    %109 = vector.extract_strided_slice %108 {offsets = [0, 4], sizes = [16, 4], strides = [1, 1]} : vector<16x8xf32> to vector<16x4xf32>
    %cst_37 = arith.constant 0.000000e+00 : f32
    %110 = vector.broadcast %cst_37 : f32 to vector<16x4xf32>
    %111 = arith.subf %110, %109 : vector<16x4xf32>
    %112 = vector.extract_strided_slice %108 {offsets = [0, 0], sizes = [16, 4], strides = [1, 1]} : vector<16x8xf32> to vector<16x4xf32>
    %113 = tpu.concatenate %111, %112 in 1 : vector<16x4xf32>, vector<16x4xf32> -> vector<16x8xf32>
    %114 = arith.mulf %108, %3 : vector<16x8xf32>
    %115 = arith.mulf %113, %4 : vector<16x8xf32>
    %116 = arith.addf %114, %115 : vector<16x8xf32>
    %117 = arith.truncf %116 : vector<16x8xf32> to vector<16x8xbf16>
    %118 = vector.extract_strided_slice %28 {offsets = [0, 16], sizes = [16, 8], strides = [1, 1]} : vector<16x32xf32> to vector<16x8xf32>
    %119 = vector.extract_strided_slice %118 {offsets = [0, 4], sizes = [16, 4], strides = [1, 1]} : vector<16x8xf32> to vector<16x4xf32>
    %cst_38 = arith.constant 0.000000e+00 : f32
    %120 = vector.broadcast %cst_38 : f32 to vector<16x4xf32>
    %121 = arith.subf %120, %119 : vector<16x4xf32>
    %122 = vector.extract_strided_slice %118 {offsets = [0, 0], sizes = [16, 4], strides = [1, 1]} : vector<16x8xf32> to vector<16x4xf32>
    %123 = tpu.concatenate %121, %122 in 1 : vector<16x4xf32>, vector<16x4xf32> -> vector<16x8xf32>
    %124 = arith.mulf %118, %3 : vector<16x8xf32>
    %125 = arith.mulf %123, %4 : vector<16x8xf32>
    %126 = arith.addf %124, %125 : vector<16x8xf32>
    %127 = arith.truncf %126 : vector<16x8xf32> to vector<16x8xbf16>
    %128 = vector.extract_strided_slice %31 {offsets = [0, 16], sizes = [16, 8], strides = [1, 1]} : vector<16x32xf32> to vector<16x8xf32>
    %129 = arith.truncf %128 : vector<16x8xf32> to vector<16x8xbf16>
    %cst_39 = arith.constant dense<0.000000e+00> : vector<16x16xf32>
    %130 = tpu.matmul %117, %127, %cst_39 {dimension_numbers = #tpu.dot_dimension_numbers<[1], [1], [0], [0], [0, 0, 1, 0], [], []>} : vector<16x8xbf16>, vector<16x8xbf16>, vector<16x16xf32> -> vector<16x16xf32>
    %cst_40 = arith.constant 0.353553385 : f32
    %131 = vector.broadcast %cst_40 : f32 to vector<16x16xf32>
    %132 = arith.mulf %130, %131 : vector<16x16xf32>
    %cst_41 = arith.constant -1.000000e+09 : f32
    %133 = vector.broadcast %cst_41 : f32 to vector<16x16xf32>
    %134 = arith.select %2, %132, %133 : vector<16x16xi1>, vector<16x16xf32>
    %cst_42 = arith.constant dense<0xFF800000> : vector<16xf32>
    %135 = vector.multi_reduction <maximumf>, %134, %cst_42 [1] : vector<16x16xf32> to vector<16xf32>
    %136 = vector.shape_cast %135 : vector<16xf32> to vector<16x1xf32>
    %137 = vector.broadcast %136 : vector<16x1xf32> to vector<16x16xf32>
    %138 = arith.subf %134, %137 : vector<16x16xf32>
    %139 = math.exp %138 : vector<16x16xf32>
    %cst_43 = arith.constant dense<0.000000e+00> : vector<16xf32>
    %140 = vector.multi_reduction <add>, %139, %cst_43 [1] : vector<16x16xf32> to vector<16xf32>
    %141 = vector.shape_cast %140 : vector<16xf32> to vector<16x1xf32>
    %142 = vector.broadcast %141 : vector<16x1xf32> to vector<16x16xf32>
    %143 = arith.divf %139, %142 : vector<16x16xf32>
    %144 = arith.truncf %143 : vector<16x16xf32> to vector<16x16xbf16>
    %cst_44 = arith.constant dense<0.000000e+00> : vector<16x8xf32>
    %145 = tpu.matmul %144, %129, %cst_44 {dimension_numbers = #tpu.dot_dimension_numbers<[1], [0], [0], [1], [0, 0, 1, 1], [], []>} : vector<16x16xbf16>, vector<16x8xbf16>, vector<16x8xf32> -> vector<16x8xf32>
    %146 = vector.extract_strided_slice %25 {offsets = [0, 24], sizes = [16, 8], strides = [1, 1]} : vector<16x32xf32> to vector<16x8xf32>
    %147 = vector.extract_strided_slice %146 {offsets = [0, 4], sizes = [16, 4], strides = [1, 1]} : vector<16x8xf32> to vector<16x4xf32>
    %cst_45 = arith.constant 0.000000e+00 : f32
    %148 = vector.broadcast %cst_45 : f32 to vector<16x4xf32>
    %149 = arith.subf %148, %147 : vector<16x4xf32>
    %150 = vector.extract_strided_slice %146 {offsets = [0, 0], sizes = [16, 4], strides = [1, 1]} : vector<16x8xf32> to vector<16x4xf32>
    %151 = tpu.concatenate %149, %150 in 1 : vector<16x4xf32>, vector<16x4xf32> -> vector<16x8xf32>
    %152 = arith.mulf %146, %3 : vector<16x8xf32>
    %153 = arith.mulf %151, %4 : vector<16x8xf32>
    %154 = arith.addf %152, %153 : vector<16x8xf32>
    %155 = arith.truncf %154 : vector<16x8xf32> to vector<16x8xbf16>
    %156 = vector.extract_strided_slice %28 {offsets = [0, 24], sizes = [16, 8], strides = [1, 1]} : vector<16x32xf32> to vector<16x8xf32>
    %157 = vector.extract_strided_slice %156 {offsets = [0, 4], sizes = [16, 4], strides = [1, 1]} : vector<16x8xf32> to vector<16x4xf32>
    %cst_46 = arith.constant 0.000000e+00 : f32
    %158 = vector.broadcast %cst_46 : f32 to vector<16x4xf32>
    %159 = arith.subf %158, %157 : vector<16x4xf32>
    %160 = vector.extract_strided_slice %156 {offsets = [0, 0], sizes = [16, 4], strides = [1, 1]} : vector<16x8xf32> to vector<16x4xf32>
    %161 = tpu.concatenate %159, %160 in 1 : vector<16x4xf32>, vector<16x4xf32> -> vector<16x8xf32>
    %162 = arith.mulf %156, %3 : vector<16x8xf32>
    %163 = arith.mulf %161, %4 : vector<16x8xf32>
    %164 = arith.addf %162, %163 : vector<16x8xf32>
    %165 = arith.truncf %164 : vector<16x8xf32> to vector<16x8xbf16>
    %166 = vector.extract_strided_slice %31 {offsets = [0, 24], sizes = [16, 8], strides = [1, 1]} : vector<16x32xf32> to vector<16x8xf32>
    %167 = arith.truncf %166 : vector<16x8xf32> to vector<16x8xbf16>
    %cst_47 = arith.constant dense<0.000000e+00> : vector<16x16xf32>
    %168 = tpu.matmul %155, %165, %cst_47 {dimension_numbers = #tpu.dot_dimension_numbers<[1], [1], [0], [0], [0, 0, 1, 0], [], []>} : vector<16x8xbf16>, vector<16x8xbf16>, vector<16x16xf32> -> vector<16x16xf32>
    %cst_48 = arith.constant 0.353553385 : f32
    %169 = vector.broadcast %cst_48 : f32 to vector<16x16xf32>
    %170 = arith.mulf %168, %169 : vector<16x16xf32>
    %cst_49 = arith.constant -1.000000e+09 : f32
    %171 = vector.broadcast %cst_49 : f32 to vector<16x16xf32>
    %172 = arith.select %2, %170, %171 : vector<16x16xi1>, vector<16x16xf32>
    %cst_50 = arith.constant dense<0xFF800000> : vector<16xf32>
    %173 = vector.multi_reduction <maximumf>, %172, %cst_50 [1] : vector<16x16xf32> to vector<16xf32>
    %174 = vector.shape_cast %173 : vector<16xf32> to vector<16x1xf32>
    %175 = vector.broadcast %174 : vector<16x1xf32> to vector<16x16xf32>
    %176 = arith.subf %172, %175 : vector<16x16xf32>
    %177 = math.exp %176 : vector<16x16xf32>
    %cst_51 = arith.constant dense<0.000000e+00> : vector<16xf32>
    %178 = vector.multi_reduction <add>, %177, %cst_51 [1] : vector<16x16xf32> to vector<16xf32>
    %179 = vector.shape_cast %178 : vector<16xf32> to vector<16x1xf32>
    %180 = vector.broadcast %179 : vector<16x1xf32> to vector<16x16xf32>
    %181 = arith.divf %177, %180 : vector<16x16xf32>
    %182 = arith.truncf %181 : vector<16x16xf32> to vector<16x16xbf16>
    %cst_52 = arith.constant dense<0.000000e+00> : vector<16x8xf32>
    %183 = tpu.matmul %182, %167, %cst_52 {dimension_numbers = #tpu.dot_dimension_numbers<[1], [0], [0], [1], [0, 0, 1, 1], [], []>} : vector<16x16xbf16>, vector<16x8xbf16>, vector<16x8xf32> -> vector<16x8xf32>
    %184 = tpu.concatenate %69, %107, %145, %183 in 1 : vector<16x8xf32>, vector<16x8xf32>, vector<16x8xf32>, vector<16x8xf32> -> vector<16x32xf32>
    %185 = arith.truncf %184 : vector<16x32xf32> to vector<16x32xbf16>
    %c0_53 = arith.constant 0 : index
    %c0_54 = arith.constant 0 : index
    %c0_55 = arith.constant 0 : index
    %186 = vector.load %arg4[%c0_53, %c0_54, %c0_55] : memref<2x32x32xbf16, #tpu.memory_space<vmem>>, vector<1x32x32xbf16>
    %187 = vector.shape_cast %186 : vector<1x32x32xbf16> to vector<32x32xbf16>
    %cst_56 = arith.constant dense<0.000000e+00> : vector<16x32xf32>
    %188 = tpu.matmul %185, %187, %cst_56 {dimension_numbers = #tpu.dot_dimension_numbers<[1], [0], [0], [1], [0, 0, 1, 1], [], []>} : vector<16x32xbf16>, vector<32x32xbf16>, vector<16x32xf32> -> vector<16x32xf32>
    %189 = arith.addf %7, %188 : vector<16x32xf32>
    %c1_57 = arith.constant 1 : index
    %c0_58 = arith.constant 0 : index
    %c0_59 = arith.constant 0 : index
    %190 = vector.load %arg2[%c1_57, %c0_58, %c0_59] : memref<5x1x32xf32, #tpu.memory_space<vmem>>, vector<1x1x32xf32>
    %191 = vector.shape_cast %190 : vector<1x1x32xf32> to vector<1x32xf32>
    %192 = arith.mulf %189, %189 : vector<16x32xf32>
    %cst_60 = arith.constant dense<0.000000e+00> : vector<16xf32>
    %193 = vector.multi_reduction <add>, %192, %cst_60 [1] : vector<16x32xf32> to vector<16xf32>
    %194 = vector.shape_cast %193 : vector<16xf32> to vector<16x1xf32>
    %cst_61 = arith.constant 3.200000e+01 : f32
    %195 = vector.broadcast %cst_61 : f32 to vector<16x1xf32>
    %196 = arith.divf %194, %195 : vector<16x1xf32>
    %cst_62 = arith.constant 9.99999974E-6 : f32
    %197 = vector.broadcast %cst_62 : f32 to vector<16x1xf32>
    %198 = arith.addf %196, %197 : vector<16x1xf32>
    %199 = math.rsqrt %198 : vector<16x1xf32>
    %200 = vector.broadcast %199 : vector<16x1xf32> to vector<16x32xf32>
    %201 = arith.mulf %189, %200 : vector<16x32xf32>
    %202 = vector.broadcast %191 : vector<1x32xf32> to vector<16x32xf32>
    %203 = arith.mulf %201, %202 : vector<16x32xf32>
    %204 = arith.truncf %203 : vector<16x32xf32> to vector<16x32xbf16>
    %c0_63 = arith.constant 0 : index
    %c0_64 = arith.constant 0 : index
    %c0_65 = arith.constant 0 : index
    %205 = vector.load %arg5[%c0_63, %c0_64, %c0_65] : memref<4x32x64xbf16, #tpu.memory_space<vmem>>, vector<1x32x64xbf16>
    %206 = vector.shape_cast %205 : vector<1x32x64xbf16> to vector<32x64xbf16>
    %cst_66 = arith.constant dense<0.000000e+00> : vector<16x64xf32>
    %207 = tpu.matmul %204, %206, %cst_66 {dimension_numbers = #tpu.dot_dimension_numbers<[1], [0], [0], [1], [0, 0, 1, 1], [], []>} : vector<16x32xbf16>, vector<32x64xbf16>, vector<16x64xf32> -> vector<16x64xf32>
    %c1_67 = arith.constant 1 : index
    %c0_68 = arith.constant 0 : index
    %c0_69 = arith.constant 0 : index
    %208 = vector.load %arg5[%c1_67, %c0_68, %c0_69] : memref<4x32x64xbf16, #tpu.memory_space<vmem>>, vector<1x32x64xbf16>
    %209 = vector.shape_cast %208 : vector<1x32x64xbf16> to vector<32x64xbf16>
    %cst_70 = arith.constant dense<0.000000e+00> : vector<16x64xf32>
    %210 = tpu.matmul %204, %209, %cst_70 {dimension_numbers = #tpu.dot_dimension_numbers<[1], [0], [0], [1], [0, 0, 1, 1], [], []>} : vector<16x32xbf16>, vector<32x64xbf16>, vector<16x64xf32> -> vector<16x64xf32>
    %211 = arith.negf %207 : vector<16x64xf32>
    %212 = math.exp %211 : vector<16x64xf32>
    %cst_71 = arith.constant 1.000000e+00 : f32
    %213 = vector.broadcast %cst_71 : f32 to vector<16x64xf32>
    %214 = arith.addf %213, %212 : vector<16x64xf32>
    %215 = arith.divf %213, %214 : vector<16x64xf32>
    %216 = arith.mulf %207, %215 : vector<16x64xf32>
    %217 = arith.mulf %216, %210 : vector<16x64xf32>
    %218 = arith.truncf %217 : vector<16x64xf32> to vector<16x64xbf16>
    %c0_72 = arith.constant 0 : index
    %c0_73 = arith.constant 0 : index
    %c0_74 = arith.constant 0 : index
    %219 = vector.load %arg6[%c0_72, %c0_73, %c0_74] : memref<2x64x32xbf16, #tpu.memory_space<vmem>>, vector<1x64x32xbf16>
    %220 = vector.shape_cast %219 : vector<1x64x32xbf16> to vector<64x32xbf16>
    %cst_75 = arith.constant dense<0.000000e+00> : vector<16x32xf32>
    %221 = tpu.matmul %218, %220, %cst_75 {dimension_numbers = #tpu.dot_dimension_numbers<[1], [0], [0], [1], [0, 0, 1, 1], [], []>} : vector<16x64xbf16>, vector<64x32xbf16>, vector<16x32xf32> -> vector<16x32xf32>
    %222 = arith.addf %189, %221 : vector<16x32xf32>
    %c2_76 = arith.constant 2 : index
    %c0_77 = arith.constant 0 : index
    %c0_78 = arith.constant 0 : index
    %223 = vector.load %arg2[%c2_76, %c0_77, %c0_78] : memref<5x1x32xf32, #tpu.memory_space<vmem>>, vector<1x1x32xf32>
    %224 = vector.shape_cast %223 : vector<1x1x32xf32> to vector<1x32xf32>
    %225 = arith.mulf %222, %222 : vector<16x32xf32>
    %cst_79 = arith.constant dense<0.000000e+00> : vector<16xf32>
    %226 = vector.multi_reduction <add>, %225, %cst_79 [1] : vector<16x32xf32> to vector<16xf32>
    %227 = vector.shape_cast %226 : vector<16xf32> to vector<16x1xf32>
    %cst_80 = arith.constant 3.200000e+01 : f32
    %228 = vector.broadcast %cst_80 : f32 to vector<16x1xf32>
    %229 = arith.divf %227, %228 : vector<16x1xf32>
    %cst_81 = arith.constant 9.99999974E-6 : f32
    %230 = vector.broadcast %cst_81 : f32 to vector<16x1xf32>
    %231 = arith.addf %229, %230 : vector<16x1xf32>
    %232 = math.rsqrt %231 : vector<16x1xf32>
    %233 = vector.broadcast %232 : vector<16x1xf32> to vector<16x32xf32>
    %234 = arith.mulf %222, %233 : vector<16x32xf32>
    %235 = vector.broadcast %224 : vector<1x32xf32> to vector<16x32xf32>
    %236 = arith.mulf %234, %235 : vector<16x32xf32>
    %237 = arith.truncf %236 : vector<16x32xf32> to vector<16x32xbf16>
    %c3 = arith.constant 3 : index
    %c0_82 = arith.constant 0 : index
    %c0_83 = arith.constant 0 : index
    %238 = vector.load %arg3[%c3, %c0_82, %c0_83] : memref<6x32x32xbf16, #tpu.memory_space<vmem>>, vector<1x32x32xbf16>
    %239 = vector.shape_cast %238 : vector<1x32x32xbf16> to vector<32x32xbf16>
    %cst_84 = arith.constant dense<0.000000e+00> : vector<16x32xf32>
    %240 = tpu.matmul %237, %239, %cst_84 {dimension_numbers = #tpu.dot_dimension_numbers<[1], [0], [0], [1], [0, 0, 1, 1], [], []>} : vector<16x32xbf16>, vector<32x32xbf16>, vector<16x32xf32> -> vector<16x32xf32>
    %c4 = arith.constant 4 : index
    %c0_85 = arith.constant 0 : index
    %c0_86 = arith.constant 0 : index
    %241 = vector.load %arg3[%c4, %c0_85, %c0_86] : memref<6x32x32xbf16, #tpu.memory_space<vmem>>, vector<1x32x32xbf16>
    %242 = vector.shape_cast %241 : vector<1x32x32xbf16> to vector<32x32xbf16>
    %cst_87 = arith.constant dense<0.000000e+00> : vector<16x32xf32>
    %243 = tpu.matmul %237, %242, %cst_87 {dimension_numbers = #tpu.dot_dimension_numbers<[1], [0], [0], [1], [0, 0, 1, 1], [], []>} : vector<16x32xbf16>, vector<32x32xbf16>, vector<16x32xf32> -> vector<16x32xf32>
    %c5 = arith.constant 5 : index
    %c0_88 = arith.constant 0 : index
    %c0_89 = arith.constant 0 : index
    %244 = vector.load %arg3[%c5, %c0_88, %c0_89] : memref<6x32x32xbf16, #tpu.memory_space<vmem>>, vector<1x32x32xbf16>
    %245 = vector.shape_cast %244 : vector<1x32x32xbf16> to vector<32x32xbf16>
    %cst_90 = arith.constant dense<0.000000e+00> : vector<16x32xf32>
    %246 = tpu.matmul %237, %245, %cst_90 {dimension_numbers = #tpu.dot_dimension_numbers<[1], [0], [0], [1], [0, 0, 1, 1], [], []>} : vector<16x32xbf16>, vector<32x32xbf16>, vector<16x32xf32> -> vector<16x32xf32>
    %247 = vector.extract_strided_slice %240 {offsets = [0, 0], sizes = [16, 8], strides = [1, 1]} : vector<16x32xf32> to vector<16x8xf32>
    %248 = vector.extract_strided_slice %247 {offsets = [0, 4], sizes = [16, 4], strides = [1, 1]} : vector<16x8xf32> to vector<16x4xf32>
    %cst_91 = arith.constant 0.000000e+00 : f32
    %249 = vector.broadcast %cst_91 : f32 to vector<16x4xf32>
    %250 = arith.subf %249, %248 : vector<16x4xf32>
    %251 = vector.extract_strided_slice %247 {offsets = [0, 0], sizes = [16, 4], strides = [1, 1]} : vector<16x8xf32> to vector<16x4xf32>
    %252 = tpu.concatenate %250, %251 in 1 : vector<16x4xf32>, vector<16x4xf32> -> vector<16x8xf32>
    %253 = arith.mulf %247, %3 : vector<16x8xf32>
    %254 = arith.mulf %252, %4 : vector<16x8xf32>
    %255 = arith.addf %253, %254 : vector<16x8xf32>
    %256 = arith.truncf %255 : vector<16x8xf32> to vector<16x8xbf16>
    %257 = vector.extract_strided_slice %243 {offsets = [0, 0], sizes = [16, 8], strides = [1, 1]} : vector<16x32xf32> to vector<16x8xf32>
    %258 = vector.extract_strided_slice %257 {offsets = [0, 4], sizes = [16, 4], strides = [1, 1]} : vector<16x8xf32> to vector<16x4xf32>
    %cst_92 = arith.constant 0.000000e+00 : f32
    %259 = vector.broadcast %cst_92 : f32 to vector<16x4xf32>
    %260 = arith.subf %259, %258 : vector<16x4xf32>
    %261 = vector.extract_strided_slice %257 {offsets = [0, 0], sizes = [16, 4], strides = [1, 1]} : vector<16x8xf32> to vector<16x4xf32>
    %262 = tpu.concatenate %260, %261 in 1 : vector<16x4xf32>, vector<16x4xf32> -> vector<16x8xf32>
    %263 = arith.mulf %257, %3 : vector<16x8xf32>
    %264 = arith.mulf %262, %4 : vector<16x8xf32>
    %265 = arith.addf %263, %264 : vector<16x8xf32>
    %266 = arith.truncf %265 : vector<16x8xf32> to vector<16x8xbf16>
    %267 = vector.extract_strided_slice %246 {offsets = [0, 0], sizes = [16, 8], strides = [1, 1]} : vector<16x32xf32> to vector<16x8xf32>
    %268 = arith.truncf %267 : vector<16x8xf32> to vector<16x8xbf16>
    %cst_93 = arith.constant dense<0.000000e+00> : vector<16x16xf32>
    %269 = tpu.matmul %256, %266, %cst_93 {dimension_numbers = #tpu.dot_dimension_numbers<[1], [1], [0], [0], [0, 0, 1, 0], [], []>} : vector<16x8xbf16>, vector<16x8xbf16>, vector<16x16xf32> -> vector<16x16xf32>
    %cst_94 = arith.constant 0.353553385 : f32
    %270 = vector.broadcast %cst_94 : f32 to vector<16x16xf32>
    %271 = arith.mulf %269, %270 : vector<16x16xf32>
    %cst_95 = arith.constant -1.000000e+09 : f32
    %272 = vector.broadcast %cst_95 : f32 to vector<16x16xf32>
    %273 = arith.select %2, %271, %272 : vector<16x16xi1>, vector<16x16xf32>
    %cst_96 = arith.constant dense<0xFF800000> : vector<16xf32>
    %274 = vector.multi_reduction <maximumf>, %273, %cst_96 [1] : vector<16x16xf32> to vector<16xf32>
    %275 = vector.shape_cast %274 : vector<16xf32> to vector<16x1xf32>
    %276 = vector.broadcast %275 : vector<16x1xf32> to vector<16x16xf32>
    %277 = arith.subf %273, %276 : vector<16x16xf32>
    %278 = math.exp %277 : vector<16x16xf32>
    %cst_97 = arith.constant dense<0.000000e+00> : vector<16xf32>
    %279 = vector.multi_reduction <add>, %278, %cst_97 [1] : vector<16x16xf32> to vector<16xf32>
    %280 = vector.shape_cast %279 : vector<16xf32> to vector<16x1xf32>
    %281 = vector.broadcast %280 : vector<16x1xf32> to vector<16x16xf32>
    %282 = arith.divf %278, %281 : vector<16x16xf32>
    %283 = arith.truncf %282 : vector<16x16xf32> to vector<16x16xbf16>
    %cst_98 = arith.constant dense<0.000000e+00> : vector<16x8xf32>
    %284 = tpu.matmul %283, %268, %cst_98 {dimension_numbers = #tpu.dot_dimension_numbers<[1], [0], [0], [1], [0, 0, 1, 1], [], []>} : vector<16x16xbf16>, vector<16x8xbf16>, vector<16x8xf32> -> vector<16x8xf32>
    %285 = vector.extract_strided_slice %240 {offsets = [0, 8], sizes = [16, 8], strides = [1, 1]} : vector<16x32xf32> to vector<16x8xf32>
    %286 = vector.extract_strided_slice %285 {offsets = [0, 4], sizes = [16, 4], strides = [1, 1]} : vector<16x8xf32> to vector<16x4xf32>
    %cst_99 = arith.constant 0.000000e+00 : f32
    %287 = vector.broadcast %cst_99 : f32 to vector<16x4xf32>
    %288 = arith.subf %287, %286 : vector<16x4xf32>
    %289 = vector.extract_strided_slice %285 {offsets = [0, 0], sizes = [16, 4], strides = [1, 1]} : vector<16x8xf32> to vector<16x4xf32>
    %290 = tpu.concatenate %288, %289 in 1 : vector<16x4xf32>, vector<16x4xf32> -> vector<16x8xf32>
    %291 = arith.mulf %285, %3 : vector<16x8xf32>
    %292 = arith.mulf %290, %4 : vector<16x8xf32>
    %293 = arith.addf %291, %292 : vector<16x8xf32>
    %294 = arith.truncf %293 : vector<16x8xf32> to vector<16x8xbf16>
    %295 = vector.extract_strided_slice %243 {offsets = [0, 8], sizes = [16, 8], strides = [1, 1]} : vector<16x32xf32> to vector<16x8xf32>
    %296 = vector.extract_strided_slice %295 {offsets = [0, 4], sizes = [16, 4], strides = [1, 1]} : vector<16x8xf32> to vector<16x4xf32>
    %cst_100 = arith.constant 0.000000e+00 : f32
    %297 = vector.broadcast %cst_100 : f32 to vector<16x4xf32>
    %298 = arith.subf %297, %296 : vector<16x4xf32>
    %299 = vector.extract_strided_slice %295 {offsets = [0, 0], sizes = [16, 4], strides = [1, 1]} : vector<16x8xf32> to vector<16x4xf32>
    %300 = tpu.concatenate %298, %299 in 1 : vector<16x4xf32>, vector<16x4xf32> -> vector<16x8xf32>
    %301 = arith.mulf %295, %3 : vector<16x8xf32>
    %302 = arith.mulf %300, %4 : vector<16x8xf32>
    %303 = arith.addf %301, %302 : vector<16x8xf32>
    %304 = arith.truncf %303 : vector<16x8xf32> to vector<16x8xbf16>
    %305 = vector.extract_strided_slice %246 {offsets = [0, 8], sizes = [16, 8], strides = [1, 1]} : vector<16x32xf32> to vector<16x8xf32>
    %306 = arith.truncf %305 : vector<16x8xf32> to vector<16x8xbf16>
    %cst_101 = arith.constant dense<0.000000e+00> : vector<16x16xf32>
    %307 = tpu.matmul %294, %304, %cst_101 {dimension_numbers = #tpu.dot_dimension_numbers<[1], [1], [0], [0], [0, 0, 1, 0], [], []>} : vector<16x8xbf16>, vector<16x8xbf16>, vector<16x16xf32> -> vector<16x16xf32>
    %cst_102 = arith.constant 0.353553385 : f32
    %308 = vector.broadcast %cst_102 : f32 to vector<16x16xf32>
    %309 = arith.mulf %307, %308 : vector<16x16xf32>
    %cst_103 = arith.constant -1.000000e+09 : f32
    %310 = vector.broadcast %cst_103 : f32 to vector<16x16xf32>
    %311 = arith.select %2, %309, %310 : vector<16x16xi1>, vector<16x16xf32>
    %cst_104 = arith.constant dense<0xFF800000> : vector<16xf32>
    %312 = vector.multi_reduction <maximumf>, %311, %cst_104 [1] : vector<16x16xf32> to vector<16xf32>
    %313 = vector.shape_cast %312 : vector<16xf32> to vector<16x1xf32>
    %314 = vector.broadcast %313 : vector<16x1xf32> to vector<16x16xf32>
    %315 = arith.subf %311, %314 : vector<16x16xf32>
    %316 = math.exp %315 : vector<16x16xf32>
    %cst_105 = arith.constant dense<0.000000e+00> : vector<16xf32>
    %317 = vector.multi_reduction <add>, %316, %cst_105 [1] : vector<16x16xf32> to vector<16xf32>
    %318 = vector.shape_cast %317 : vector<16xf32> to vector<16x1xf32>
    %319 = vector.broadcast %318 : vector<16x1xf32> to vector<16x16xf32>
    %320 = arith.divf %316, %319 : vector<16x16xf32>
    %321 = arith.truncf %320 : vector<16x16xf32> to vector<16x16xbf16>
    %cst_106 = arith.constant dense<0.000000e+00> : vector<16x8xf32>
    %322 = tpu.matmul %321, %306, %cst_106 {dimension_numbers = #tpu.dot_dimension_numbers<[1], [0], [0], [1], [0, 0, 1, 1], [], []>} : vector<16x16xbf16>, vector<16x8xbf16>, vector<16x8xf32> -> vector<16x8xf32>
    %323 = vector.extract_strided_slice %240 {offsets = [0, 16], sizes = [16, 8], strides = [1, 1]} : vector<16x32xf32> to vector<16x8xf32>
    %324 = vector.extract_strided_slice %323 {offsets = [0, 4], sizes = [16, 4], strides = [1, 1]} : vector<16x8xf32> to vector<16x4xf32>
    %cst_107 = arith.constant 0.000000e+00 : f32
    %325 = vector.broadcast %cst_107 : f32 to vector<16x4xf32>
    %326 = arith.subf %325, %324 : vector<16x4xf32>
    %327 = vector.extract_strided_slice %323 {offsets = [0, 0], sizes = [16, 4], strides = [1, 1]} : vector<16x8xf32> to vector<16x4xf32>
    %328 = tpu.concatenate %326, %327 in 1 : vector<16x4xf32>, vector<16x4xf32> -> vector<16x8xf32>
    %329 = arith.mulf %323, %3 : vector<16x8xf32>
    %330 = arith.mulf %328, %4 : vector<16x8xf32>
    %331 = arith.addf %329, %330 : vector<16x8xf32>
    %332 = arith.truncf %331 : vector<16x8xf32> to vector<16x8xbf16>
    %333 = vector.extract_strided_slice %243 {offsets = [0, 16], sizes = [16, 8], strides = [1, 1]} : vector<16x32xf32> to vector<16x8xf32>
    %334 = vector.extract_strided_slice %333 {offsets = [0, 4], sizes = [16, 4], strides = [1, 1]} : vector<16x8xf32> to vector<16x4xf32>
    %cst_108 = arith.constant 0.000000e+00 : f32
    %335 = vector.broadcast %cst_108 : f32 to vector<16x4xf32>
    %336 = arith.subf %335, %334 : vector<16x4xf32>
    %337 = vector.extract_strided_slice %333 {offsets = [0, 0], sizes = [16, 4], strides = [1, 1]} : vector<16x8xf32> to vector<16x4xf32>
    %338 = tpu.concatenate %336, %337 in 1 : vector<16x4xf32>, vector<16x4xf32> -> vector<16x8xf32>
    %339 = arith.mulf %333, %3 : vector<16x8xf32>
    %340 = arith.mulf %338, %4 : vector<16x8xf32>
    %341 = arith.addf %339, %340 : vector<16x8xf32>
    %342 = arith.truncf %341 : vector<16x8xf32> to vector<16x8xbf16>
    %343 = vector.extract_strided_slice %246 {offsets = [0, 16], sizes = [16, 8], strides = [1, 1]} : vector<16x32xf32> to vector<16x8xf32>
    %344 = arith.truncf %343 : vector<16x8xf32> to vector<16x8xbf16>
    %cst_109 = arith.constant dense<0.000000e+00> : vector<16x16xf32>
    %345 = tpu.matmul %332, %342, %cst_109 {dimension_numbers = #tpu.dot_dimension_numbers<[1], [1], [0], [0], [0, 0, 1, 0], [], []>} : vector<16x8xbf16>, vector<16x8xbf16>, vector<16x16xf32> -> vector<16x16xf32>
    %cst_110 = arith.constant 0.353553385 : f32
    %346 = vector.broadcast %cst_110 : f32 to vector<16x16xf32>
    %347 = arith.mulf %345, %346 : vector<16x16xf32>
    %cst_111 = arith.constant -1.000000e+09 : f32
    %348 = vector.broadcast %cst_111 : f32 to vector<16x16xf32>
    %349 = arith.select %2, %347, %348 : vector<16x16xi1>, vector<16x16xf32>
    %cst_112 = arith.constant dense<0xFF800000> : vector<16xf32>
    %350 = vector.multi_reduction <maximumf>, %349, %cst_112 [1] : vector<16x16xf32> to vector<16xf32>
    %351 = vector.shape_cast %350 : vector<16xf32> to vector<16x1xf32>
    %352 = vector.broadcast %351 : vector<16x1xf32> to vector<16x16xf32>
    %353 = arith.subf %349, %352 : vector<16x16xf32>
    %354 = math.exp %353 : vector<16x16xf32>
    %cst_113 = arith.constant dense<0.000000e+00> : vector<16xf32>
    %355 = vector.multi_reduction <add>, %354, %cst_113 [1] : vector<16x16xf32> to vector<16xf32>
    %356 = vector.shape_cast %355 : vector<16xf32> to vector<16x1xf32>
    %357 = vector.broadcast %356 : vector<16x1xf32> to vector<16x16xf32>
    %358 = arith.divf %354, %357 : vector<16x16xf32>
    %359 = arith.truncf %358 : vector<16x16xf32> to vector<16x16xbf16>
    %cst_114 = arith.constant dense<0.000000e+00> : vector<16x8xf32>
    %360 = tpu.matmul %359, %344, %cst_114 {dimension_numbers = #tpu.dot_dimension_numbers<[1], [0], [0], [1], [0, 0, 1, 1], [], []>} : vector<16x16xbf16>, vector<16x8xbf16>, vector<16x8xf32> -> vector<16x8xf32>
    %361 = vector.extract_strided_slice %240 {offsets = [0, 24], sizes = [16, 8], strides = [1, 1]} : vector<16x32xf32> to vector<16x8xf32>
    %362 = vector.extract_strided_slice %361 {offsets = [0, 4], sizes = [16, 4], strides = [1, 1]} : vector<16x8xf32> to vector<16x4xf32>
    %cst_115 = arith.constant 0.000000e+00 : f32
    %363 = vector.broadcast %cst_115 : f32 to vector<16x4xf32>
    %364 = arith.subf %363, %362 : vector<16x4xf32>
    %365 = vector.extract_strided_slice %361 {offsets = [0, 0], sizes = [16, 4], strides = [1, 1]} : vector<16x8xf32> to vector<16x4xf32>
    %366 = tpu.concatenate %364, %365 in 1 : vector<16x4xf32>, vector<16x4xf32> -> vector<16x8xf32>
    %367 = arith.mulf %361, %3 : vector<16x8xf32>
    %368 = arith.mulf %366, %4 : vector<16x8xf32>
    %369 = arith.addf %367, %368 : vector<16x8xf32>
    %370 = arith.truncf %369 : vector<16x8xf32> to vector<16x8xbf16>
    %371 = vector.extract_strided_slice %243 {offsets = [0, 24], sizes = [16, 8], strides = [1, 1]} : vector<16x32xf32> to vector<16x8xf32>
    %372 = vector.extract_strided_slice %371 {offsets = [0, 4], sizes = [16, 4], strides = [1, 1]} : vector<16x8xf32> to vector<16x4xf32>
    %cst_116 = arith.constant 0.000000e+00 : f32
    %373 = vector.broadcast %cst_116 : f32 to vector<16x4xf32>
    %374 = arith.subf %373, %372 : vector<16x4xf32>
    %375 = vector.extract_strided_slice %371 {offsets = [0, 0], sizes = [16, 4], strides = [1, 1]} : vector<16x8xf32> to vector<16x4xf32>
    %376 = tpu.concatenate %374, %375 in 1 : vector<16x4xf32>, vector<16x4xf32> -> vector<16x8xf32>
    %377 = arith.mulf %371, %3 : vector<16x8xf32>
    %378 = arith.mulf %376, %4 : vector<16x8xf32>
    %379 = arith.addf %377, %378 : vector<16x8xf32>
    %380 = arith.truncf %379 : vector<16x8xf32> to vector<16x8xbf16>
    %381 = vector.extract_strided_slice %246 {offsets = [0, 24], sizes = [16, 8], strides = [1, 1]} : vector<16x32xf32> to vector<16x8xf32>
    %382 = arith.truncf %381 : vector<16x8xf32> to vector<16x8xbf16>
    %cst_117 = arith.constant dense<0.000000e+00> : vector<16x16xf32>
    %383 = tpu.matmul %370, %380, %cst_117 {dimension_numbers = #tpu.dot_dimension_numbers<[1], [1], [0], [0], [0, 0, 1, 0], [], []>} : vector<16x8xbf16>, vector<16x8xbf16>, vector<16x16xf32> -> vector<16x16xf32>
    %cst_118 = arith.constant 0.353553385 : f32
    %384 = vector.broadcast %cst_118 : f32 to vector<16x16xf32>
    %385 = arith.mulf %383, %384 : vector<16x16xf32>
    %cst_119 = arith.constant -1.000000e+09 : f32
    %386 = vector.broadcast %cst_119 : f32 to vector<16x16xf32>
    %387 = arith.select %2, %385, %386 : vector<16x16xi1>, vector<16x16xf32>
    %cst_120 = arith.constant dense<0xFF800000> : vector<16xf32>
    %388 = vector.multi_reduction <maximumf>, %387, %cst_120 [1] : vector<16x16xf32> to vector<16xf32>
    %389 = vector.shape_cast %388 : vector<16xf32> to vector<16x1xf32>
    %390 = vector.broadcast %389 : vector<16x1xf32> to vector<16x16xf32>
    %391 = arith.subf %387, %390 : vector<16x16xf32>
    %392 = math.exp %391 : vector<16x16xf32>
    %cst_121 = arith.constant dense<0.000000e+00> : vector<16xf32>
    %393 = vector.multi_reduction <add>, %392, %cst_121 [1] : vector<16x16xf32> to vector<16xf32>
    %394 = vector.shape_cast %393 : vector<16xf32> to vector<16x1xf32>
    %395 = vector.broadcast %394 : vector<16x1xf32> to vector<16x16xf32>
    %396 = arith.divf %392, %395 : vector<16x16xf32>
    %397 = arith.truncf %396 : vector<16x16xf32> to vector<16x16xbf16>
    %cst_122 = arith.constant dense<0.000000e+00> : vector<16x8xf32>
    %398 = tpu.matmul %397, %382, %cst_122 {dimension_numbers = #tpu.dot_dimension_numbers<[1], [0], [0], [1], [0, 0, 1, 1], [], []>} : vector<16x16xbf16>, vector<16x8xbf16>, vector<16x8xf32> -> vector<16x8xf32>
    %399 = tpu.concatenate %284, %322, %360, %398 in 1 : vector<16x8xf32>, vector<16x8xf32>, vector<16x8xf32>, vector<16x8xf32> -> vector<16x32xf32>
    %400 = arith.truncf %399 : vector<16x32xf32> to vector<16x32xbf16>
    %c1_123 = arith.constant 1 : index
    %c0_124 = arith.constant 0 : index
    %c0_125 = arith.constant 0 : index
    %401 = vector.load %arg4[%c1_123, %c0_124, %c0_125] : memref<2x32x32xbf16, #tpu.memory_space<vmem>>, vector<1x32x32xbf16>
    %402 = vector.shape_cast %401 : vector<1x32x32xbf16> to vector<32x32xbf16>
    %cst_126 = arith.constant dense<0.000000e+00> : vector<16x32xf32>
    %403 = tpu.matmul %400, %402, %cst_126 {dimension_numbers = #tpu.dot_dimension_numbers<[1], [0], [0], [1], [0, 0, 1, 1], [], []>} : vector<16x32xbf16>, vector<32x32xbf16>, vector<16x32xf32> -> vector<16x32xf32>
    %404 = arith.addf %222, %403 : vector<16x32xf32>
    %c3_127 = arith.constant 3 : index
    %c0_128 = arith.constant 0 : index
    %c0_129 = arith.constant 0 : index
    %405 = vector.load %arg2[%c3_127, %c0_128, %c0_129] : memref<5x1x32xf32, #tpu.memory_space<vmem>>, vector<1x1x32xf32>
    %406 = vector.shape_cast %405 : vector<1x1x32xf32> to vector<1x32xf32>
    %407 = arith.mulf %404, %404 : vector<16x32xf32>
    %cst_130 = arith.constant dense<0.000000e+00> : vector<16xf32>
    %408 = vector.multi_reduction <add>, %407, %cst_130 [1] : vector<16x32xf32> to vector<16xf32>
    %409 = vector.shape_cast %408 : vector<16xf32> to vector<16x1xf32>
    %cst_131 = arith.constant 3.200000e+01 : f32
    %410 = vector.broadcast %cst_131 : f32 to vector<16x1xf32>
    %411 = arith.divf %409, %410 : vector<16x1xf32>
    %cst_132 = arith.constant 9.99999974E-6 : f32
    %412 = vector.broadcast %cst_132 : f32 to vector<16x1xf32>
    %413 = arith.addf %411, %412 : vector<16x1xf32>
    %414 = math.rsqrt %413 : vector<16x1xf32>
    %415 = vector.broadcast %414 : vector<16x1xf32> to vector<16x32xf32>
    %416 = arith.mulf %404, %415 : vector<16x32xf32>
    %417 = vector.broadcast %406 : vector<1x32xf32> to vector<16x32xf32>
    %418 = arith.mulf %416, %417 : vector<16x32xf32>
    %419 = arith.truncf %418 : vector<16x32xf32> to vector<16x32xbf16>
    %c2_133 = arith.constant 2 : index
    %c0_134 = arith.constant 0 : index
    %c0_135 = arith.constant 0 : index
    %420 = vector.load %arg5[%c2_133, %c0_134, %c0_135] : memref<4x32x64xbf16, #tpu.memory_space<vmem>>, vector<1x32x64xbf16>
    %421 = vector.shape_cast %420 : vector<1x32x64xbf16> to vector<32x64xbf16>
    %cst_136 = arith.constant dense<0.000000e+00> : vector<16x64xf32>
    %422 = tpu.matmul %419, %421, %cst_136 {dimension_numbers = #tpu.dot_dimension_numbers<[1], [0], [0], [1], [0, 0, 1, 1], [], []>} : vector<16x32xbf16>, vector<32x64xbf16>, vector<16x64xf32> -> vector<16x64xf32>
    %c3_137 = arith.constant 3 : index
    %c0_138 = arith.constant 0 : index
    %c0_139 = arith.constant 0 : index
    %423 = vector.load %arg5[%c3_137, %c0_138, %c0_139] : memref<4x32x64xbf16, #tpu.memory_space<vmem>>, vector<1x32x64xbf16>
    %424 = vector.shape_cast %423 : vector<1x32x64xbf16> to vector<32x64xbf16>
    %cst_140 = arith.constant dense<0.000000e+00> : vector<16x64xf32>
    %425 = tpu.matmul %419, %424, %cst_140 {dimension_numbers = #tpu.dot_dimension_numbers<[1], [0], [0], [1], [0, 0, 1, 1], [], []>} : vector<16x32xbf16>, vector<32x64xbf16>, vector<16x64xf32> -> vector<16x64xf32>
    %426 = arith.negf %422 : vector<16x64xf32>
    %427 = math.exp %426 : vector<16x64xf32>
    %cst_141 = arith.constant 1.000000e+00 : f32
    %428 = vector.broadcast %cst_141 : f32 to vector<16x64xf32>
    %429 = arith.addf %428, %427 : vector<16x64xf32>
    %430 = arith.divf %428, %429 : vector<16x64xf32>
    %431 = arith.mulf %422, %430 : vector<16x64xf32>
    %432 = arith.mulf %431, %425 : vector<16x64xf32>
    %433 = arith.truncf %432 : vector<16x64xf32> to vector<16x64xbf16>
    %c1_142 = arith.constant 1 : index
    %c0_143 = arith.constant 0 : index
    %c0_144 = arith.constant 0 : index
    %434 = vector.load %arg6[%c1_142, %c0_143, %c0_144] : memref<2x64x32xbf16, #tpu.memory_space<vmem>>, vector<1x64x32xbf16>
    %435 = vector.shape_cast %434 : vector<1x64x32xbf16> to vector<64x32xbf16>
    %cst_145 = arith.constant dense<0.000000e+00> : vector<16x32xf32>
    %436 = tpu.matmul %433, %435, %cst_145 {dimension_numbers = #tpu.dot_dimension_numbers<[1], [0], [0], [1], [0, 0, 1, 1], [], []>} : vector<16x64xbf16>, vector<64x32xbf16>, vector<16x32xf32> -> vector<16x32xf32>
    %437 = arith.addf %404, %436 : vector<16x32xf32>
    %c4_146 = arith.constant 4 : index
    %c0_147 = arith.constant 0 : index
    %c0_148 = arith.constant 0 : index
    %438 = vector.load %arg2[%c4_146, %c0_147, %c0_148] : memref<5x1x32xf32, #tpu.memory_space<vmem>>, vector<1x1x32xf32>
    %439 = vector.shape_cast %438 : vector<1x1x32xf32> to vector<1x32xf32>
    %440 = arith.mulf %437, %437 : vector<16x32xf32>
    %cst_149 = arith.constant dense<0.000000e+00> : vector<16xf32>
    %441 = vector.multi_reduction <add>, %440, %cst_149 [1] : vector<16x32xf32> to vector<16xf32>
    %442 = vector.shape_cast %441 : vector<16xf32> to vector<16x1xf32>
    %cst_150 = arith.constant 3.200000e+01 : f32
    %443 = vector.broadcast %cst_150 : f32 to vector<16x1xf32>
    %444 = arith.divf %442, %443 : vector<16x1xf32>
    %cst_151 = arith.constant 9.99999974E-6 : f32
    %445 = vector.broadcast %cst_151 : f32 to vector<16x1xf32>
    %446 = arith.addf %444, %445 : vector<16x1xf32>
    %447 = math.rsqrt %446 : vector<16x1xf32>
    %448 = vector.broadcast %447 : vector<16x1xf32> to vector<16x32xf32>
    %449 = arith.mulf %437, %448 : vector<16x32xf32>
    %450 = vector.broadcast %439 : vector<1x32xf32> to vector<16x32xf32>
    %451 = arith.mulf %449, %450 : vector<16x32xf32>
    %452 = arith.truncf %451 : vector<16x32xf32> to vector<16x32xbf16>
    %c0_152 = arith.constant 0 : index
    %c0_153 = arith.constant 0 : index
    %453 = vector.load %arg7[%c0_152, %c0_153] : memref<32x64xbf16, #tpu.memory_space<vmem>>, vector<32x64xbf16>
    %cst_154 = arith.constant dense<0.000000e+00> : vector<16x64xf32>
    %454 = tpu.matmul %452, %453, %cst_154 {dimension_numbers = #tpu.dot_dimension_numbers<[1], [0], [0], [1], [0, 0, 1, 1], [], []>} : vector<16x32xbf16>, vector<32x64xbf16>, vector<16x64xf32> -> vector<16x64xf32>
    %c0_155 = arith.constant 0 : index
    %c0_156 = arith.constant 0 : index
    %c0_157 = arith.constant 0 : index
    %455 = vector.load %arg10[%c0_155, %c0_156, %c0_157] : memref<1x16x64xf32, #tpu.memory_space<vmem>>, vector<1x16x64xf32>
    %456 = vector.shape_cast %455 : vector<1x16x64xf32> to vector<16x64xf32>
    %457 = vector.shape_cast %454 : vector<16x64xf32> to vector<1x16x64xf32>
    tpu.vector_store %arg10[%c0_155, %c0_156, %c0_157], %457 {strides = array<i32>} : memref<1x16x64xf32, #tpu.memory_space<vmem>>, vector<1x16x64xf32>,
    return
  }
  func.func @transform_0(%arg0: i32) -> (i32, i32, i32) {
    %c0_i32 = arith.constant 0 : i32
    %c0_i32_0 = arith.constant 0 : i32
    %c0_i32_1 = arith.constant 0 : i32
    return %arg0, %c0_i32, %c0_i32_0 : i32, i32, i32
  }
  func.func @transform_1(%arg0: i32) -> (i32, i32, i32) {
    %c0_i32 = arith.constant 0 : i32
    %c0_i32_0 = arith.constant 0 : i32
    %c0_i32_1 = arith.constant 0 : i32
    %c0_i32_2 = arith.constant 0 : i32
    return %c0_i32, %c0_i32_0, %c0_i32_1 : i32, i32, i32
  }
  func.func @transform_2(%arg0: i32) -> (i32, i32, i32) {
    %c0_i32 = arith.constant 0 : i32
    %c0_i32_0 = arith.constant 0 : i32
    %c0_i32_1 = arith.constant 0 : i32
    %c0_i32_2 = arith.constant 0 : i32
    return %c0_i32, %c0_i32_0, %c0_i32_1 : i32, i32, i32
  }
  func.func @transform_3(%arg0: i32) -> (i32, i32, i32) {
    %c0_i32 = arith.constant 0 : i32
    %c0_i32_0 = arith.constant 0 : i32
    %c0_i32_1 = arith.constant 0 : i32
    %c0_i32_2 = arith.constant 0 : i32
    return %c0_i32, %c0_i32_0, %c0_i32_1 : i32, i32, i32
  }
  func.func @transform_4(%arg0: i32) -> (i32, i32, i32) {
    %c0_i32 = arith.constant 0 : i32
    %c0_i32_0 = arith.constant 0 : i32
    %c0_i32_1 = arith.constant 0 : i32
    %c0_i32_2 = arith.constant 0 : i32
    return %c0_i32, %c0_i32_0, %c0_i32_1 : i32, i32, i32
  }
  func.func @transform_5(%arg0: i32) -> (i32, i32, i32) {
    %c0_i32 = arith.constant 0 : i32
    %c0_i32_0 = arith.constant 0 : i32
    %c0_i32_1 = arith.constant 0 : i32
    %c0_i32_2 = arith.constant 0 : i32
    return %c0_i32, %c0_i32_0, %c0_i32_1 : i32, i32, i32
  }
  func.func @transform_6(%arg0: i32) -> (i32, i32) {
    %c0_i32 = arith.constant 0 : i32
    %c0_i32_0 = arith.constant 0 : i32
    %c0_i32_1 = arith.constant 0 : i32
    return %c0_i32, %c0_i32_0 : i32, i32
  }
  func.func @transform_7(%arg0: i32) -> (i32, i32) {
    %c0_i32 = arith.constant 0 : i32
    %c0_i32_0 = arith.constant 0 : i32
    %c0_i32_1 = arith.constant 0 : i32
    return %c0_i32, %c0_i32_0 : i32, i32
  }
  func.func @transform_8(%arg0: i32) -> (i32, i32) {
    %c0_i32 = arith.constant 0 : i32
    %c0_i32_0 = arith.constant 0 : i32
    %c0_i32_1 = arith.constant 0 : i32
    return %c0_i32, %c0_i32_0 : i32, i32
  }
  func.func @transform_9(%arg0: i32) -> (i32, i32, i32) {
    %c0_i32 = arith.constant 0 : i32
    %c0_i32_0 = arith.constant 0 : i32
    %c0_i32_1 = arith.constant 0 : i32
    return %arg0, %c0_i32, %c0_i32_0 : i32, i32, i32
  }
}

</mosaic_0001>

<llo_original>
// kernel: wrapped_llama_forward.1
$region0: #{wrapped_llama_forward.1}
  #allocation0 [shape = 'u32[]', space=smem, size = 0x4, offset = 0x4, fixed_abs, tag = 'smem constant byte address 0x4 - core index']
  #allocation1 [shape = 'u32[144,128]{1,0:T(1,128)}', space=vmem, size = 0x12000, scoped, tag = 'internal scratch']
  %s0 = inlined_call_operand.vmem [shape: bf16[2,16,32], index: 0, kind: input, shape index: {}]
  %s1 = inlined_call_operand.vmem [shape: f32[5,1,32], index: 1, kind: input, shape index: {}]
  %s2 = inlined_call_operand.vmem [shape: bf16[6,32,32], index: 2, kind: input, shape index: {}]
  %s3 = inlined_call_operand.vmem [shape: bf16[2,32,32], index: 3, kind: input, shape index: {}]
  %s4 = inlined_call_operand.vmem [shape: bf16[4,32,64], index: 4, kind: input, shape index: {}]
  %s5 = inlined_call_operand.vmem [shape: bf16[2,64,32], index: 5, kind: input, shape index: {}]
  %s6 = inlined_call_operand.vmem [shape: bf16[32,64], index: 6, kind: input, shape index: {}]
  %s7 = inlined_call_operand.vmem [shape: f32[16,8], index: 7, kind: input, shape index: {}]
  %s8 = inlined_call_operand.vmem [shape: f32[16,8], index: 8, kind: input, shape index: {}]
  %s9 = inlined_call_operand.hbm [shape: f32[2,16,64], index: 9, kind: output, shape index: {}]
  %s10 = sld [smem:[#allocation0]]
  $region69: #{wrapped_llama_forward.1} parent=0
    _
  %s12 = ssub.s32 1, %s10
  %s13 = scalar_select 0, %s12, %s10
  $region1: #{wrapped_llama_forward.1} parent=0
    #allocation2 [shape = 'u8[16384]{0}', space=vmem, size = 0x4000, scoped, tag = 'output window, operand 0']
    #allocation3 [shape = 's32[2]{0}', space=sflag, size = 0x8, scoped, tag = 'scoped memory for wrapped_llama_forward.1']
    %14 = vsyncpa [#allocation3], 0
    %s15 = scalar_lea.sflag [#allocation3], 1
    %16 = vsyncpa %s15, 0
    loop: start=0, step=1, limit=4
    $region2: #{wrapped_llama_forward.1} parent=1 // loop_pre_header
      _
    $region3: #{wrapped_llama_forward.1} parent=1 // loop_header
      %s18 = sphi 0, %s22
      %p19 = scmp.ge.s32.totalorder %s18, 4
      %s28 = sphi 0, %s30
      %s31 = sphi 0, %s28
      %s32 = sphi 0, %s31
      %s48 = sphi 0, %s32
      %s52 = sphi 0, %s52
      %s54 = sphi 0, %s52
      %s55 = sphi 0, %s54
      %s69 = sphi 0, %s55
      %s73 = sphi 0, %s73
      %s75 = sphi 0, %s73
      %s76 = sphi 0, %s75
      %s90 = sphi 0, %s76
      %s94 = sphi 0, %s94
      %s96 = sphi 0, %s94
      %s97 = sphi 0, %s96
      %s111 = sphi 0, %s97
      %s115 = sphi 0, %s115
      %s117 = sphi 0, %s115
      %s118 = sphi 0, %s117
      %s132 = sphi 0, %s118
      %s136 = sphi 0, %s136
      %s138 = sphi 0, %s136
      %s139 = sphi 0, %s138
      %s153 = sphi 0, %s139
      %s157 = sphi 0, %s157
      %s159 = sphi 0, %s157
      %s160 = sphi 0, %s159
      %s174 = sphi 0, %s160
      %s178 = sphi 0, %s178
      %s180 = sphi 0, %s178
      %s181 = sphi 0, %s180
      %s195 = sphi 0, %s181
      %s199 = sphi 0, %s199
      %s201 = sphi 0, %s199
      %s202 = sphi 0, %s201
      %s216 = sphi 0, %s202
      %s222 = sphi 0, %s224
      %s225 = sphi 0, %s222
      %s226 = sphi 0, %s225
      %s242 = sphi 0, %s226
    $region4: #{wrapped_llama_forward.1} parent=1 // loop_header_branch
      %21 = sbr.rel (%p19) target = $region8
    $region5: #{wrapped_llama_forward.1} parent=1 // loop_body
      %s23 = ssub.s32 %s18, 1
      %s24 = ssub.s32 %s18, 2
      %s25 = sadd.s32 %s18, 1
      %s26 = ssub.s32 %s18, %s25
      %p27 = scmp.eq.s32.totalorder %s26, 0
      %s29 = sadd.s32 %s28, 1
      %s30 = scalar_select %p27, %s28, %s29
      %p33 = pneg %p27
      %p34 = scmp.eq.s32.totalorder %s18, 1
      %p35 = por %p33, %p34
      %p36 = scmp.ne.s32.totalorder %s28, %s31
      %p37 = scmp.eq.s32.totalorder %s18, 0
      %p38 = por %p36, %p37
      %p39 = scmp.ne.s32.totalorder %s28, %s31
      %p40 = scmp.eq.s32.totalorder %s23, 1
      %p41 = por %p39, %p40
      %p42 = scmp.ne.s32.totalorder %s31, %s32
      %p43 = scmp.eq.s32.totalorder %s23, 0
      %p44 = por %p42, %p43
      %p45 = scmp.ne.s32.totalorder %s31, %s32
      %p46 = scmp.eq.s32.totalorder %s24, 1
      %p47 = por %p45, %p46
      %p49 = scmp.ne.s32.totalorder %s32, %s48
      %p50 = scmp.eq.s32.totalorder %s24, 0
      %p51 = por %p49, %p50
      %s53 = sadd.s32 %s52, 1
      %p56 = scmp.eq.s32.totalorder %s18, 1
      %p57 = scmp.ne.s32.totalorder %s52, %s54
      %p58 = scmp.eq.s32.totalorder %s18, 0
      %p59 = por %p57, %p58
      %p60 = scmp.ne.s32.totalorder %s52, %s54
      %p61 = scmp.eq.s32.totalorder %s23, 1
      %p62 = por %p60, %p61
      %p63 = scmp.ne.s32.totalorder %s54, %s55
      %p64 = scmp.eq.s32.totalorder %s23, 0
      %p65 = por %p63, %p64
      %p66 = scmp.ne.s32.totalorder %s54, %s55
      %p67 = scmp.eq.s32.totalorder %s24, 1
      %p68 = por %p66, %p67
      %p70 = scmp.ne.s32.totalorder %s55, %s69
      %p71 = scmp.eq.s32.totalorder %s24, 0
      %p72 = por %p70, %p71
      %s74 = sadd.s32 %s73, 1
      %p77 = scmp.eq.s32.totalorder %s18, 1
      %p78 = scmp.ne.s32.totalorder %s73, %s75
      %p79 = scmp.eq.s32.totalorder %s18, 0
      %p80 = por %p78, %p79
      %p81 = scmp.ne.s32.totalorder %s73, %s75
      %p82 = scmp.eq.s32.totalorder %s23, 1
      %p83 = por %p81, %p82
      %p84 = scmp.ne.s32.totalorder %s75, %s76
      %p85 = scmp.eq.s32.totalorder %s23, 0
      %p86 = por %p84, %p85
      %p87 = scmp.ne.s32.totalorder %s75, %s76
      %p88 = scmp.eq.s32.totalorder %s24, 1
      %p89 = por %p87, %p88
      %p91 = scmp.ne.s32.totalorder %s76, %s90
      %p92 = scmp.eq.s32.totalorder %s24, 0
      %p93 = por %p91, %p92
      %s95 = sadd.s32 %s94, 1
      %p98 = scmp.eq.s32.totalorder %s18, 1
      %p99 = scmp.ne.s32.totalorder %s94, %s96
      %p100 = scmp.eq.s32.totalorder %s18, 0
      %p101 = por %p99, %p100
      %p102 = scmp.ne.s32.totalorder %s94, %s96
      %p103 = scmp.eq.s32.totalorder %s23, 1
      %p104 = por %p102, %p103
      %p105 = scmp.ne.s32.totalorder %s96, %s97
      %p106 = scmp.eq.s32.totalorder %s23, 0
      %p107 = por %p105, %p106
      %p108 = scmp.ne.s32.totalorder %s96, %s97
      %p109 = scmp.eq.s32.totalorder %s24, 1
      %p110 = por %p108, %p109
      %p112 = scmp.ne.s32.totalorder %s97, %s111
      %p113 = scmp.eq.s32.totalorder %s24, 0
      %p114 = por %p112, %p113
      %s116 = sadd.s32 %s115, 1
      %p119 = scmp.eq.s32.totalorder %s18, 1
      %p120 = scmp.ne.s32.totalorder %s115, %s117
      %p121 = scmp.eq.s32.totalorder %s18, 0
      %p122 = por %p120, %p121
      %p123 = scmp.ne.s32.totalorder %s115, %s117
      %p124 = scmp.eq.s32.totalorder %s23, 1
      %p125 = por %p123, %p124
      %p126 = scmp.ne.s32.totalorder %s117, %s118
      %p127 = scmp.eq.s32.totalorder %s23, 0
      %p128 = por %p126, %p127
      %p129 = scmp.ne.s32.totalorder %s117, %s118
      %p130 = scmp.eq.s32.totalorder %s24, 1
      %p131 = por %p129, %p130
      %p133 = scmp.ne.s32.totalorder %s118, %s132
      %p134 = scmp.eq.s32.totalorder %s24, 0
      %p135 = por %p133, %p134
      %s137 = sadd.s32 %s136, 1
      %p140 = scmp.eq.s32.totalorder %s18, 1
      %p141 = scmp.ne.s32.totalorder %s136, %s138
      %p142 = scmp.eq.s32.totalorder %s18, 0
      %p143 = por %p141, %p142
      %p144 = scmp.ne.s32.totalorder %s136, %s138
      %p145 = scmp.eq.s32.totalorder %s23, 1
      %p146 = por %p144, %p145
      %p147 = scmp.ne.s32.totalorder %s138, %s139
      %p148 = scmp.eq.s32.totalorder %s23, 0
      %p149 = por %p147, %p148
      %p150 = scmp.ne.s32.totalorder %s138, %s139
      %p151 = scmp.eq.s32.totalorder %s24, 1
      %p152 = por %p150, %p151
      %p154 = scmp.ne.s32.totalorder %s139, %s153
      %p155 = scmp.eq.s32.totalorder %s24, 0
      %p156 = por %p154, %p155
      %s158 = sadd.s32 %s157, 1
      %p161 = scmp.eq.s32.totalorder %s18, 1
      %p162 = scmp.ne.s32.totalorder %s157, %s159
      %p163 = scmp.eq.s32.totalorder %s18, 0
      %p164 = por %p162, %p163
      %p165 = scmp.ne.s32.totalorder %s157, %s159
      %p166 = scmp.eq.s32.totalorder %s23, 1
      %p167 = por %p165, %p166
      %p168 = scmp.ne.s32.totalorder %s159, %s160
      %p169 = scmp.eq.s32.totalorder %s23, 0
      %p170 = por %p168, %p169
      %p171 = scmp.ne.s32.totalorder %s159, %s160
      %p172 = scmp.eq.s32.totalorder %s24, 1
      %p173 = por %p171, %p172
      %p175 = scmp.ne.s32.totalorder %s160, %s174
      %p176 = scmp.eq.s32.totalorder %s24, 0
      %p177 = por %p175, %p176
      %s179 = sadd.s32 %s178, 1
      %p182 = scmp.eq.s32.totalorder %s18, 1
      %p183 = scmp.ne.s32.totalorder %s178, %s180
      %p184 = scmp.eq.s32.totalorder %s18, 0
      %p185 = por %p183, %p184
      %p186 = scmp.ne.s32.totalorder %s178, %s180
      %p187 = scmp.eq.s32.totalorder %s23, 1
      %p188 = por %p186, %p187
      %p189 = scmp.ne.s32.totalorder %s180, %s181
      %p190 = scmp.eq.s32.totalorder %s23, 0
      %p191 = por %p189, %p190
      %p192 = scmp.ne.s32.totalorder %s180, %s181
      %p193 = scmp.eq.s32.totalorder %s24, 1
      %p194 = por %p192, %p193
      %p196 = scmp.ne.s32.totalorder %s181, %s195
      %p197 = scmp.eq.s32.totalorder %s24, 0
      %p198 = por %p196, %p197
      %s200 = sadd.s32 %s199, 1
      %p203 = scmp.eq.s32.totalorder %s18, 1
      %p204 = scmp.ne.s32.totalorder %s199, %s201
      %p205 = scmp.eq.s32.totalorder %s18, 0
      %p206 = por %p204, %p205
      %p207 = scmp.ne.s32.totalorder %s199, %s201
      %p208 = scmp.eq.s32.totalorder %s23, 1
      %p209 = por %p207, %p208
      %p210 = scmp.ne.s32.totalorder %s201, %s202
      %p211 = scmp.eq.s32.totalorder %s23, 0
      %p212 = por %p210, %p211
      %p213 = scmp.ne.s32.totalorder %s201, %s202
      %p214 = scmp.eq.s32.totalorder %s24, 1
      %p215 = por %p213, %p214
      %p217 = scmp.ne.s32.totalorder %s202, %s216
      %p218 = scmp.eq.s32.totalorder %s24, 0
      %p219 = por %p217, %p218
      %s220 = ssub.s32 %s18, %s25
      %p221 = scmp.eq.s32.totalorder %s220, 0
      %s223 = sadd.s32 %s222, 1
      %s224 = scalar_select %p221, %s222, %s223
      %p227 = pneg %p221
      %p228 = scmp.eq.s32.totalorder %s18, 1
      %p229 = por %p227, %p228
      %p230 = scmp.ne.s32.totalorder %s222, %s225
      %p231 = scmp.eq.s32.totalorder %s18, 0
      %p232 = por %p230, %p231
      %p233 = scmp.ne.s32.totalorder %s222, %s225
      %p234 = scmp.eq.s32.totalorder %s23, 1
      %p235 = por %p233, %p234
      %p236 = scmp.ne.s32.totalorder %s225, %s226
      %p237 = scmp.eq.s32.totalorder %s23, 0
      %p238 = por %p236, %p237
      %p239 = scmp.ne.s32.totalorder %s225, %s226
      %p240 = scmp.eq.s32.totalorder %s24, 1
      %p241 = por %p239, %p240
      %p243 = scmp.ne.s32.totalorder %s226, %s242
      %p244 = scmp.eq.s32.totalorder %s24, 0
      %p245 = por %p243, %p244
      %p246 = scmp.le.s32.totalorder 1, %s18
      %p247 = scmp.lt.s32.totalorder %s18, 3
      %p248 = pnand %p246, %p247
      %p249 = pneg %p248
      // Predicated region
      $region9: #{wrapped_llama_forward.1} parent=5 // pred_check
        _
      $region10: #{wrapped_llama_forward.1} parent=5 // pred_check_branch
        %251 = sbr.rel (%p248) target = $region12
      $region11: #{wrapped_llama_forward.1} parent=5 // pred_region
        %s252 = ssub.s32 %s18, 1
        // Predicated region
        $region13: #{wrapped_llama_forward.1} parent=11 // pred_check
          %p253 = pneg %p65
        $region14: #{wrapped_llama_forward.1} parent=11 // pred_check_branch
          %255 = sbr.rel (%p253) target = $region16
        $region15: #{wrapped_llama_forward.1} parent=11 // pred_region
          _
        $region16: #{wrapped_llama_forward.1} parent=11 // pred_fallthru
          _
        // Predicated region
        $region17: #{wrapped_llama_forward.1} parent=11 // pred_check
          %p256 = pneg %p86
        $region18: #{wrapped_llama_forward.1} parent=11 // pred_check_branch
          %258 = sbr.rel (%p256) target = $region20
        $region19: #{wrapped_llama_forward.1} parent=11 // pred_region
          _
        $region20: #{wrapped_llama_forward.1} parent=11 // pred_fallthru
          _
        // Predicated region
        $region21: #{wrapped_llama_forward.1} parent=11 // pred_check
          %p259 = pneg %p107
        $region22: #{wrapped_llama_forward.1} parent=11 // pred_check_branch
          %261 = sbr.rel (%p259) target = $region24
        $region23: #{wrapped_llama_forward.1} parent=11 // pred_region
          _
        $region24: #{wrapped_llama_forward.1} parent=11 // pred_fallthru
          _
        // Predicated region
        $region25: #{wrapped_llama_forward.1} parent=11 // pred_check
          %p262 = pneg %p128
        $region26: #{wrapped_llama_forward.1} parent=11 // pred_check_branch
          %264 = sbr.rel (%p262) target = $region28
        $region27: #{wrapped_llama_forward.1} parent=11 // pred_region
          _
        $region28: #{wrapped_llama_forward.1} parent=11 // pred_fallthru
          _
        // Predicated region
        $region29: #{wrapped_llama_forward.1} parent=11 // pred_check
          %p265 = pneg %p149
        $region30: #{wrapped_llama_forward.1} parent=11 // pred_check_branch
          %267 = sbr.rel (%p265) target = $region32
        $region31: #{wrapped_llama_forward.1} parent=11 // pred_region
          _
        $region32: #{wrapped_llama_forward.1} parent=11 // pred_fallthru
          _
        // Predicated region
        $region33: #{wrapped_llama_forward.1} parent=11 // pred_check
          %p268 = pneg %p170
        $region34: #{wrapped_llama_forward.1} parent=11 // pred_check_branch
          %270 = sbr.rel (%p268) target = $region36
        $region35: #{wrapped_llama_forward.1} parent=11 // pred_region
          _
        $region36: #{wrapped_llama_forward.1} parent=11 // pred_fallthru
          _
        // Predicated region
        $region37: #{wrapped_llama_forward.1} parent=11 // pred_check
          %p271 = pneg %p191
        $region38: #{wrapped_llama_forward.1} parent=11 // pred_check_branch
          %273 = sbr.rel (%p271) target = $region40
        $region39: #{wrapped_llama_forward.1} parent=11 // pred_region
          _
        $region40: #{wrapped_llama_forward.1} parent=11 // pred_fallthru
          _
        // Predicated region
        $region41: #{wrapped_llama_forward.1} parent=11 // pred_check
          %p274 = pneg %p212
        $region42: #{wrapped_llama_forward.1} parent=11 // pred_check_branch
          %276 = sbr.rel (%p274) target = $region44
        $region43: #{wrapped_llama_forward.1} parent=11 // pred_region
          _
        $region44: #{wrapped_llama_forward.1} parent=11 // pred_fallthru
          _
      $region12: #{wrapped_llama_forward.1} parent=5 // pred_fallthru
        _
      %p277 = scmp.lt.s32.totalorder %s18, 2
      // Predicated region
      $region45: #{wrapped_llama_forward.1} parent=5 // pred_check
        %p278 = pneg %p277
      $region46: #{wrapped_llama_forward.1} parent=5 // pred_check_branch
        %280 = sbr.rel (%p278) target = $region48
      $region47: #{wrapped_llama_forward.1} parent=5 // pred_region
        // Predicated region
        $region49: #{wrapped_llama_forward.1} parent=47 // pred_check
          %p281 = pneg %p38
        $region50: #{wrapped_llama_forward.1} parent=47 // pred_check_branch
          %283 = sbr.rel (%p281) target = $region52
        $region51: #{wrapped_llama_forward.1} parent=47 // pred_region
          %p284 = scmp.lt.s32.totalorder %s18, 1
          %s285 = scalar_select %p284, %s18, 1
          %s286 = smul.addr %s285, 2
          %s287 = smul.addr %s286, 4
          %s288 = scalar_lea.vmem %s0, %s287
        $region52: #{wrapped_llama_forward.1} parent=47 // pred_fallthru
          _
      $region48: #{wrapped_llama_forward.1} parent=5 // pred_fallthru
        _
      %p289 = scmp.le.s32.totalorder 1, %s18
      %p290 = scmp.lt.s32.totalorder %s18, 3
      %p291 = pnand %p289, %p290
      %p292 = pneg %p291
      // Predicated region
      $region53: #{wrapped_llama_forward.1} parent=5 // pred_check
        _
      $region54: #{wrapped_llama_forward.1} parent=5 // pred_check_branch
        %294 = sbr.rel (%p291) target = $region56
      $region55: #{wrapped_llama_forward.1} parent=5 // pred_region
        %s295 = ssub.s32 %s18, 1
        %p296 = scmp.lt.s32.totalorder %s23, 1
        %s297 = scalar_select %p296, %s23, 1
        %s298 = smul.addr %s297, 2
        %s299 = smul.addr %s298, 4
        %s300 = scalar_lea.vmem %s0, %s299
        %p301 = pneg %p44
        %p302 = pneg %p41
        %p303 = pneg %p65
        %p304 = pneg %p62
        %p305 = pneg %p86
        %p306 = pneg %p83
        %p307 = pneg %p107
        %p308 = pneg %p104
        %p309 = pneg %p128
        %p310 = pneg %p125
        %p311 = pneg %p149
        %p312 = pneg %p146
        %p313 = pneg %p170
        %p314 = pneg %p167
        %p315 = pneg %p191
        %p316 = pneg %p188
        %p317 = pneg %p212
        %p318 = pneg %p209
        %p319 = pneg %p238
        %p320 = pneg %p235
        %s321 = sand.u32 %s225, 1
        %s322 = scalar_lea.sflag [#allocation3], %s321
        %s323 = sand.u32 %s225, 1
        %s324 = smul.addr %s323, 16
        %s325 = scalar_lea.vmem [#allocation2], %s324
        %p326 = scmp.lt.s32.totalorder %s23, 1
        %s327 = scalar_select %p326, %s23, 1
        %s328 = smul.addr %s327, 2
        %s329 = smul.addr %s328, 4
        %s330 = scalar_lea.vmem %s0, %s329
        %v332 = vlaneseq
        %v333 = vshrl.u32 %v332, 7
        %v334 = vadd.s32 %v333, 8
        %v335 = vlaneseq
        %v336 = vand.u32 %v335, 127
        %vm337 = vcmp.le.s32.totalorder %v336, %v333
        %vm338 = vcmp.le.s32.totalorder %v336, %v334
        %v339 = vld [vmem:[%s7] sm:$0xff]
        %v340 = vld [vmem:[%s7 + $0x8] sm:$0xff]
        %v341 = vld [vmem:[%s8] sm:$0xff]
        %v342 = vld [vmem:[%s8 + $0x8] sm:$0xff]
        %v343 = vld [vmem:[%s330] sm:$0xf]
        %v344 = vld [vmem:[%s330 + $0x4] sm:$0xf]
        %v345 = vunpack.c.l.bf16 %v343
        %v346 = vunpack.c.l.bf16 %v344
        %v347 = vld [vmem:[%s1] sm:$0x1]
        %v348 = vmul.f32 %v345, %v345
        %v349 = vmul.f32 %v346, %v346
        %vm350 = vcmask 261120
        %v351 = vsel %vm350, %v348, 0.0
        %352 = vadd.xlane.f32.xlu0 %v351
        %v353 = vpop.xlane.xlu0 %352
        %v354 = vsel %vm350, %v349, 0.0
        %355 = vadd.xlane.f32.xlu0 %v354
        %v356 = vpop.xlane.xlu0 %355
        %v357 = vrcp.pop 32.0
        %v358 = vmul.f32 %v353, %v357
        %v359 = vmul.f32 %v356, %v357
        %v360 = vadd.f32 %v358, 1e-05
        %v361 = vadd.f32 %v359, 1e-05
        %v362 = vrsqrt.pop %v360
        %v363 = vrsqrt.pop %v361
        %v364 = vmul.f32 %v345, %v362
        %v365 = vmul.f32 %v346, %v363
        %v367 = vlaneseq
        %v368 = vshrl.u32 %v367, 7
        %v369 = vsub.s32 0, %v368
        %v370 = vrot.slane %v347, %v369
        %v372 = vmul.f32 %v364, %v370
        %v373 = vmul.f32 %v365, %v370
        %v374 = vpack.c.bf16 %v373, %v372
        %v375 = vld [vmem:[%s2] sm:$0xf]
        %v376 = vld [vmem:[%s2 + $0x4] sm:$0xf]
        %v377 = vld [vmem:[%s2 + $0x8] sm:$0xf]
        %v378 = vld [vmem:[%s2 + $0xc] sm:$0xf]
        %v383 = vunpack.c.l.b16 %v375
        %v384 = vunpack.c.l.b16 %v376
        %v385 = vunpack.c.l.b16 %v377
        %v386 = vunpack.c.l.b16 %v378
        %v387 = vpack.c.b16 %v384, %v383
        %v388 = vpack.c.b16 %v386, %v385
        %v392 = vsel %vm350, %v374, 0
        %394 = vmatprep.subr.bf16.mxu0 0
        %395 = vmatpush1.bf16.msra.mxu0 %v387
        %396 = vmatprep.subr.bf16.mxu0 0
        %397 = vmatpush1.bf16.msra.mxu0 %v388
        %398 = vmatprep.subr.bf16.mxu0 0
        %399 = vmatpush1.bf16.msra.mxu0 0
        %400 = vmatprep.subr.bf16.mxu0 0
        %401 = vmatpush1.bf16.msra.mxu0 0
        %402 = vmatprep.subr.bf16.mxu0 0
        %403 = vmatpush1.bf16.msra.mxu0 0
        %404 = vmatprep.subr.bf16.mxu0 0
        %405 = vmatpush1.bf16.msra.mxu0 0
        %406 = vmatprep.subr.bf16.mxu0 0
        %407 = vmatpush1.bf16.msra.mxu0 0
        %408 = vmatprep.subr.bf16.mxu0 0
        %409 = vmatpush1.bf16.msra.mxu0 0
        %410 = vmatprep.subr.bf16.mxu0 0
        %411 = vmatpush1.bf16.msra.mxu0 0
        %412 = vmatprep.subr.bf16.mxu0 0
        %413 = vmatpush1.bf16.msra.mxu0 0
        %414 = vmatprep.subr.bf16.mxu0 0
        %415 = vmatpush1.bf16.msra.mxu0 0
        %416 = vmatprep.subr.bf16.mxu0 0
        %417 = vmatpush1.bf16.msra.mxu0 0
        %418 = vmatprep.subr.bf16.mxu0 0
        %419 = vmatpush1.bf16.msra.mxu0 0
        %420 = vmatprep.subr.bf16.mxu0 0
        %421 = vmatpush1.bf16.msra.mxu0 0
        %422 = vmatprep.subr.bf16.mxu0 0
        %423 = vmatpush1.bf16.msra.mxu0 0
        %424 = vmatprep.subr.bf16.mxu0 0
        %425 = vmatpush1.bf16.msra.mxu0 0
        %426 = vmatprep.mubr.bf16.mxu0 0
        %427 = vmatmul.mubr.bf16.gmra.mrb[0].mxu0 %v392
        %v428 = vpop.f32.mrb[0].mxu0
        %v429 = vadd.f32 0.0, %v428
        %v430 = vpop.f32.mrb[0].mxu0
        %v431 = vpop.f32.mrb[0].mxu0
        %v432 = vadd.f32 0.0, %v431
        %v433 = vpop.f32.mrb[0].mxu0
        %434 = vdwg.mxu0
        %s435 = scalar_lea.vmem %s2, 16
        %v436 = vld [vmem:[%s435] sm:$0xf]
        %v437 = vld [vmem:[%s435 + $0x4] sm:$0xf]
        %v438 = vld [vmem:[%s435 + $0x8] sm:$0xf]
        %v439 = vld [vmem:[%s435 + $0xc] sm:$0xf]
        %v444 = vunpack.c.l.b16 %v436
        %v445 = vunpack.c.l.b16 %v437
        %v446 = vunpack.c.l.b16 %v438
        %v447 = vunpack.c.l.b16 %v439
        %v448 = vpack.c.b16 %v445, %v444
        %v449 = vpack.c.b16 %v447, %v446
        %452 = vmatprep.subr.bf16.mxu0 0
        %453 = vmatpush1.bf16.msra.mxu0 %v448
        %454 = vmatprep.subr.bf16.mxu0 0
        %455 = vmatpush1.bf16.msra.mxu0 %v449
        %456 = vmatprep.subr.bf16.mxu0 0
        %457 = vmatpush1.bf16.msra.mxu0 0
        %458 = vmatprep.subr.bf16.mxu0 0
        %459 = vmatpush1.bf16.msra.mxu0 0
        %460 = vmatprep.subr.bf16.mxu0 0
        %461 = vmatpush1.bf16.msra.mxu0 0
        %462 = vmatprep.subr.bf16.mxu0 0
        %463 = vmatpush1.bf16.msra.mxu0 0
        %464 = vmatprep.subr.bf16.mxu0 0
        %465 = vmatpush1.bf16.msra.mxu0 0
        %466 = vmatprep.subr.bf16.mxu0 0
        %467 = vmatpush1.bf16.msra.mxu0 0
        %468 = vmatprep.subr.bf16.mxu0 0
        %469 = vmatpush1.bf16.msra.mxu0 0
        %470 = vmatprep.subr.bf16.mxu0 0
        %471 = vmatpush1.bf16.msra.mxu0 0
        %472 = vmatprep.subr.bf16.mxu0 0
        %473 = vmatpush1.bf16.msra.mxu0 0
        %474 = vmatprep.subr.bf16.mxu0 0
        %475 = vmatpush1.bf16.msra.mxu0 0
        %476 = vmatprep.subr.bf16.mxu0 0
        %477 = vmatpush1.bf16.msra.mxu0 0
        %478 = vmatprep.subr.bf16.mxu0 0
        %479 = vmatpush1.bf16.msra.mxu0 0
        %480 = vmatprep.subr.bf16.mxu0 0
        %481 = vmatpush1.bf16.msra.mxu0 0
        %482 = vmatprep.subr.bf16.mxu0 0
        %483 = vmatpush1.bf16.msra.mxu0 0
        %484 = vmatprep.mubr.bf16.mxu0 0
        %485 = vmatmul.mubr.bf16.gmra.mrb[0].mxu0 %v392
        %v486 = vpop.f32.mrb[0].mxu0
        %v487 = vadd.f32 0.0, %v486
        %v488 = vpop.f32.mrb[0].mxu0
        %v489 = vpop.f32.mrb[0].mxu0
        %v490 = vadd.f32 0.0, %v489
        %v491 = vpop.f32.mrb[0].mxu0
        %492 = vdwg.mxu0
        %s493 = scalar_lea.vmem %s2, 32
        %v494 = vld [vmem:[%s493] sm:$0xf]
        %v495 = vld [vmem:[%s493 + $0x4] sm:$0xf]
        %v496 = vld [vmem:[%s493 + $0x8] sm:$0xf]
        %v497 = vld [vmem:[%s493 + $0xc] sm:$0xf]
        %v502 = vunpack.c.l.b16 %v494
        %v503 = vunpack.c.l.b16 %v495
        %v504 = vunpack.c.l.b16 %v496
        %v505 = vunpack.c.l.b16 %v497
        %v506 = vpack.c.b16 %v503, %v502
        %v507 = vpack.c.b16 %v505, %v504
        %510 = vmatprep.subr.bf16.mxu0 0
        %511 = vmatpush1.bf16.msra.mxu0 %v506
        %512 = vmatprep.subr.bf16.mxu0 0
        %513 = vmatpush1.bf16.msra.mxu0 %v507
        %514 = vmatprep.subr.bf16.mxu0 0
        %515 = vmatpush1.bf16.msra.mxu0 0
        %516 = vmatprep.subr.bf16.mxu0 0
        %517 = vmatpush1.bf16.msra.mxu0 0
        %518 = vmatprep.subr.bf16.mxu0 0
        %519 = vmatpush1.bf16.msra.mxu0 0
        %520 = vmatprep.subr.bf16.mxu0 0
        %521 = vmatpush1.bf16.msra.mxu0 0
        %522 = vmatprep.subr.bf16.mxu0 0
        %523 = vmatpush1.bf16.msra.mxu0 0
        %524 = vmatprep.subr.bf16.mxu0 0
        %525 = vmatpush1.bf16.msra.mxu0 0
        %526 = vmatprep.subr.bf16.mxu0 0
        %527 = vmatpush1.bf16.msra.mxu0 0
        %528 = vmatprep.subr.bf16.mxu0 0
        %529 = vmatpush1.bf16.msra.mxu0 0
        %530 = vmatprep.subr.bf16.mxu0 0
        %531 = vmatpush1.bf16.msra.mxu0 0
        %532 = vmatprep.subr.bf16.mxu0 0
        %533 = vmatpush1.bf16.msra.mxu0 0
        %534 = vmatprep.subr.bf16.mxu0 0
        %535 = vmatpush1.bf16.msra.mxu0 0
        %536 = vmatprep.subr.bf16.mxu0 0
        %537 = vmatpush1.bf16.msra.mxu0 0
        %538 = vmatprep.subr.bf16.mxu0 0
        %539 = vmatpush1.bf16.msra.mxu0 0
        %540 = vmatprep.subr.bf16.mxu0 0
        %541 = vmatpush1.bf16.msra.mxu0 0
        %542 = vmatprep.mubr.bf16.mxu0 0
        %543 = vmatmul.mubr.bf16.gmra.mrb[0].mxu0 %v392
        %v544 = vpop.f32.mrb[0].mxu0
        %v545 = vadd.f32 0.0, %v544
        %v546 = vpop.f32.mrb[0].mxu0
        %v547 = vpop.f32.mrb[0].mxu0
        %v548 = vadd.f32 0.0, %v547
        %v549 = vpop.f32.mrb[0].mxu0
        %550 = vdwg.mxu0
        %v551 = vsub.f32 0.0, %v429
        %v552 = vsub.f32 0.0, %v432
        %555 = vrot.lane.b32.xlu0 %v551, 124
        %v556 = vpop.permute.xlu0 %555
        %557 = vrot.lane.b32.xlu0 %v552, 124
        %v558 = vpop.permute.xlu0 %557
        %563 = vrot.lane.b32.xlu0 %v429, 4
        %v564 = vpop.permute.xlu0 %563
        %565 = vrot.lane.b32.xlu0 %v432, 4
        %v566 = vpop.permute.xlu0 %565
        %vm569 = vcmask 31744
        %v570 = vsel %vm569, %v556, %v564
        %v571 = vsel %vm569, %v558, %v566
        %v572 = vmul.f32 %v429, %v339
        %v573 = vmul.f32 %v432, %v340
        %v574 = vmul.f32 %v570, %v341
        %v575 = vmul.f32 %v571, %v342
        %v576 = vadd.f32 %v572, %v574
        %v577 = vadd.f32 %v573, %v575
        %v578 = vpack.c.bf16 %v577, %v576
        %v579 = vsub.f32 0.0, %v487
        %v580 = vsub.f32 0.0, %v490
        %583 = vrot.lane.b32.xlu0 %v579, 124
        %v584 = vpop.permute.xlu0 %583
        %585 = vrot.lane.b32.xlu0 %v580, 124
        %v586 = vpop.permute.xlu0 %585
        %591 = vrot.lane.b32.xlu0 %v487, 4
        %v592 = vpop.permute.xlu0 %591
        %593 = vrot.lane.b32.xlu0 %v490, 4
        %v594 = vpop.permute.xlu0 %593
        %v597 = vsel %vm569, %v584, %v592
        %v598 = vsel %vm569, %v586, %v594
        %v599 = vmul.f32 %v487, %v339
        %v600 = vmul.f32 %v490, %v340
        %v601 = vmul.f32 %v597, %v341
        %v602 = vmul.f32 %v598, %v342
        %v603 = vadd.f32 %v599, %v601
        %v604 = vadd.f32 %v600, %v602
        %v605 = vpack.c.bf16 %v604, %v603
        %v606 = vpack.c.bf16 %v548, %v545
        %vm607 = vcmask 64512
        %v609 = vsel %vm607, %v578, 0
        %v612 = vsel %vm607, %v605, 0
        %614 = vmatprep.subr.bf16.mxu0 0
        %615 = vmatpush1.bf16.xpose.msra.mxu0 %v612
        %616 = vmatprep.subr.bf16.mxu0 0
        %617 = vmatpush1.bf16.xpose.msra.mxu0 0
        %618 = vmatprep.subr.bf16.mxu0 0
        %619 = vmatpush1.bf16.xpose.msra.mxu0 0
        %620 = vmatprep.subr.bf16.mxu0 0
        %621 = vmatpush1.bf16.xpose.msra.mxu0 0
        %622 = vmatprep.subr.bf16.mxu0 0
        %623 = vmatpush1.bf16.xpose.msra.mxu0 0
        %624 = vmatprep.subr.bf16.mxu0 0
        %625 = vmatpush1.bf16.xpose.msra.mxu0 0
        %626 = vmatprep.subr.bf16.mxu0 0
        %627 = vmatpush1.bf16.xpose.msra.mxu0 0
        %628 = vmatprep.subr.bf16.mxu0 0
        %629 = vmatpush1.bf16.xpose.msra.mxu0 0
        %630 = vmatprep.subr.bf16.mxu0 0
        %631 = vmatpush1.bf16.xpose.msra.mxu0 0
        %632 = vmatprep.subr.bf16.mxu0 0
        %633 = vmatpush1.bf16.xpose.msra.mxu0 0
        %634 = vmatprep.subr.bf16.mxu0 0
        %635 = vmatpush1.bf16.xpose.msra.mxu0 0
        %636 = vmatprep.subr.bf16.mxu0 0
        %637 = vmatpush1.bf16.xpose.msra.mxu0 0
        %638 = vmatprep.subr.bf16.mxu0 0
        %639 = vmatpush1.bf16.xpose.msra.mxu0 0
        %640 = vmatprep.subr.bf16.mxu0 0
        %641 = vmatpush1.bf16.xpose.msra.mxu0 0
        %642 = vmatprep.subr.bf16.mxu0 0
        %643 = vmatpush1.bf16.xpose.msra.mxu0 0
        %644 = vmatprep.subr.bf16.mxu0 0
        %645 = vmatpush1.bf16.xpose.msra.mxu0 0
        %646 = vmatprep.mubr.bf16.mxu0 0
        %647 = vmatmul.mubr.bf16.gmra.mrb[0].mxu0 %v609
        %v648 = vpop.f32.mrb[0].mxu0
        %v649 = vadd.f32 0.0, %v648
        %v650 = vpop.f32.mrb[0].mxu0
        %v651 = vpop.f32.mrb[0].mxu0
        %v652 = vadd.f32 0.0, %v651
        %v653 = vpop.f32.mrb[0].mxu0
        %654 = vdwg.mxu0
        %v655 = vmul.f32 %v649, 0.35355338
        %v656 = vmul.f32 %v652, 0.35355338
        %v657 = vsel %vm337, %v655, -1e+09
        %v658 = vsel %vm338, %v656, -1e+09
        %vm659 = vcmask 130048
        %v660 = vsel %vm659, %v657, -inf
        %661 = vmax.xlane.f32.xlu0 %v660
        %v662 = vpop.xlane.xlu0 %661
        %v663 = vsel %vm659, %v658, -inf
        %664 = vmax.xlane.f32.xlu0 %v663
        %v665 = vpop.xlane.xlu0 %664
        %v666 = vsub.f32 %v657, %v662
        %v667 = vsub.f32 %v658, %v665
        %v668 = vmul.f32 %v666, 1.442695
        %v669 = vpow.pop %v668
        %v670 = vmul.f32 %v667, 1.442695
        %v671 = vpow.pop %v670
        %v672 = vsel %vm659, %v669, 0.0
        %673 = vadd.xlane.f32.xlu0 %v672
        %v674 = vpop.xlane.xlu0 %673
        %v675 = vsel %vm659, %v671, 0.0
        %676 = vadd.xlane.f32.xlu0 %v675
        %v677 = vpop.xlane.xlu0 %676
        %v678 = vrcp.pop %v674
        %v679 = vmul.f32 %v669, %v678
        %v680 = vrcp.pop %v677
        %v681 = vmul.f32 %v671, %v680
        %v682 = vpack.c.bf16 %v681, %v679
        %v684 = vsel %vm659, %v682, 0
        %686 = vmatprep.subr.bf16.mxu0 0
        %687 = vmatpush1.bf16.msra.mxu0 %v606
        %688 = vmatprep.subr.bf16.mxu0 0
        %689 = vmatpush1.bf16.msra.mxu0 0
        %690 = vmatprep.subr.bf16.mxu0 0
        %691 = vmatpush1.bf16.msra.mxu0 0
        %692 = vmatprep.subr.bf16.mxu0 0
        %693 = vmatpush1.bf16.msra.mxu0 0
        %694 = vmatprep.subr.bf16.mxu0 0
        %695 = vmatpush1.bf16.msra.mxu0 0
        %696 = vmatprep.subr.bf16.mxu0 0
        %697 = vmatpush1.bf16.msra.mxu0 0
        %698 = vmatprep.subr.bf16.mxu0 0
        %699 = vmatpush1.bf16.msra.mxu0 0
        %700 = vmatprep.subr.bf16.mxu0 0
        %701 = vmatpush1.bf16.msra.mxu0 0
        %702 = vmatprep.subr.bf16.mxu0 0
        %703 = vmatpush1.bf16.msra.mxu0 0
        %704 = vmatprep.subr.bf16.mxu0 0
        %705 = vmatpush1.bf16.msra.mxu0 0
        %706 = vmatprep.subr.bf16.mxu0 0
        %707 = vmatpush1.bf16.msra.mxu0 0
        %708 = vmatprep.subr.bf16.mxu0 0
        %709 = vmatpush1.bf16.msra.mxu0 0
        %710 = vmatprep.subr.bf16.mxu0 0
        %711 = vmatpush1.bf16.msra.mxu0 0
        %712 = vmatprep.subr.bf16.mxu0 0
        %713 = vmatpush1.bf16.msra.mxu0 0
        %714 = vmatprep.subr.bf16.mxu0 0
        %715 = vmatpush1.bf16.msra.mxu0 0
        %716 = vmatprep.subr.bf16.mxu0 0
        %717 = vmatpush1.bf16.msra.mxu0 0
        %718 = vmatprep.mubr.bf16.mxu0 0
        %719 = vmatmul.mubr.bf16.gmra.mrb[0].mxu0 %v684
        %v720 = vpop.f32.mrb[0].mxu0
        %v721 = vadd.f32 0.0, %v720
        %v722 = vpop.f32.mrb[0].mxu0
        %v723 = vpop.f32.mrb[0].mxu0
        %v724 = vadd.f32 0.0, %v723
        %v725 = vpop.f32.mrb[0].mxu0
        %726 = vdwg.mxu0
        %727 = vrot.lane.b32.xlu0 %v551, 116
        %v728 = vpop.permute.xlu0 %727
        %729 = vrot.lane.b32.xlu0 %v552, 116
        %v730 = vpop.permute.xlu0 %729
        %733 = vrot.lane.b32.xlu0 %v429, 124
        %v734 = vpop.permute.xlu0 %733
        %735 = vrot.lane.b32.xlu0 %v432, 124
        %v736 = vpop.permute.xlu0 %735
        %v739 = vsel %vm569, %v728, %v734
        %v740 = vsel %vm569, %v730, %v736
        %743 = vrot.lane.b32.xlu0 %v339, 8
        %v744 = vpop.permute.xlu0 %743
        %745 = vrot.lane.b32.xlu0 %v340, 8
        %v746 = vpop.permute.xlu0 %745
        %v749 = vmul.f32 %v429, %v744
        %v750 = vmul.f32 %v432, %v746
        %v751 = vmul.f32 %v739, %v341
        %v752 = vmul.f32 %v740, %v342
        %755 = vrot.lane.b32.xlu0 %v751, 8
        %v756 = vpop.permute.xlu0 %755
        %757 = vrot.lane.b32.xlu0 %v752, 8
        %v758 = vpop.permute.xlu0 %757
        %v761 = vadd.f32 %v749, %v756
        %v762 = vadd.f32 %v750, %v758
        %v763 = vpack.c.bf16 %v762, %v761
        %764 = vrot.lane.b32.xlu0 %v579, 116
        %v765 = vpop.permute.xlu0 %764
        %766 = vrot.lane.b32.xlu0 %v580, 116
        %v767 = vpop.permute.xlu0 %766
        %770 = vrot.lane.b32.xlu0 %v487, 124
        %v771 = vpop.permute.xlu0 %770
        %772 = vrot.lane.b32.xlu0 %v490, 124
        %v773 = vpop.permute.xlu0 %772
        %v776 = vsel %vm569, %v765, %v771
        %v777 = vsel %vm569, %v767, %v773
        %v778 = vmul.f32 %v487, %v744
        %v779 = vmul.f32 %v490, %v746
        %v780 = vmul.f32 %v776, %v341
        %v781 = vmul.f32 %v777, %v342
        %784 = vrot.lane.b32.xlu0 %v780, 8
        %v785 = vpop.permute.xlu0 %784
        %786 = vrot.lane.b32.xlu0 %v781, 8
        %v787 = vpop.permute.xlu0 %786
        %v790 = vadd.f32 %v778, %v785
        %v791 = vadd.f32 %v779, %v787
        %v792 = vpack.c.bf16 %v791, %v790
        %794 = vrot.lane.b32.xlu0 %v763, 120
        %v795 = vpop.permute.xlu0 %794
        %797 = vrot.lane.b32.xlu0 %v792, 120
        %v798 = vpop.permute.xlu0 %797
        %v800 = vsel %vm607, %v795, 0
        %v803 = vsel %vm607, %v798, 0
        %805 = vmatprep.subr.bf16.mxu0 0
        %806 = vmatpush1.bf16.xpose.msra.mxu0 %v803
        %807 = vmatprep.subr.bf16.mxu0 0
        %808 = vmatpush1.bf16.xpose.msra.mxu0 0
        %809 = vmatprep.subr.bf16.mxu0 0
        %810 = vmatpush1.bf16.xpose.msra.mxu0 0
        %811 = vmatprep.subr.bf16.mxu0 0
        %812 = vmatpush1.bf16.xpose.msra.mxu0 0
        %813 = vmatprep.subr.bf16.mxu0 0
        %814 = vmatpush1.bf16.xpose.msra.mxu0 0
        %815 = vmatprep.subr.bf16.mxu0 0
        %816 = vmatpush1.bf16.xpose.msra.mxu0 0
        %817 = vmatprep.subr.bf16.mxu0 0
        %818 = vmatpush1.bf16.xpose.msra.mxu0 0
        %819 = vmatprep.subr.bf16.mxu0 0
        %820 = vmatpush1.bf16.xpose.msra.mxu0 0
        %821 = vmatprep.subr.bf16.mxu0 0
        %822 = vmatpush1.bf16.xpose.msra.mxu0 0
        %823 = vmatprep.subr.bf16.mxu0 0
        %824 = vmatpush1.bf16.xpose.msra.mxu0 0
        %825 = vmatprep.subr.bf16.mxu0 0
        %826 = vmatpush1.bf16.xpose.msra.mxu0 0
        %827 = vmatprep.subr.bf16.mxu0 0
        %828 = vmatpush1.bf16.xpose.msra.mxu0 0
        %829 = vmatprep.subr.bf16.mxu0 0
        %830 = vmatpush1.bf16.xpose.msra.mxu0 0
        %831 = vmatprep.subr.bf16.mxu0 0
        %832 = vmatpush1.bf16.xpose.msra.mxu0 0
        %833 = vmatprep.subr.bf16.mxu0 0
        %834 = vmatpush1.bf16.xpose.msra.mxu0 0
        %835 = vmatprep.subr.bf16.mxu0 0
        %836 = vmatpush1.bf16.xpose.msra.mxu0 0
        %837 = vmatprep.mubr.bf16.mxu0 0
        %838 = vmatmul.mubr.bf16.gmra.mrb[0].mxu0 %v800
        %v839 = vpop.f32.mrb[0].mxu0
        %v840 = vadd.f32 0.0, %v839
        %v841 = vpop.f32.mrb[0].mxu0
        %v842 = vpop.f32.mrb[0].mxu0
        %v843 = vadd.f32 0.0, %v842
        %v844 = vpop.f32.mrb[0].mxu0
        %845 = vdwg.mxu0
        %v846 = vmul.f32 %v840, 0.35355338
        %v847 = vmul.f32 %v843, 0.35355338
        %v848 = vsel %vm337, %v846, -1e+09
        %v849 = vsel %vm338, %v847, -1e+09
        %v850 = vsel %vm659, %v848, -inf
        %851 = vmax.xlane.f32.xlu0 %v850
        %v852 = vpop.xlane.xlu0 %851
        %v853 = vsel %vm659, %v849, -inf
        %854 = vmax.xlane.f32.xlu0 %v853
        %v855 = vpop.xlane.xlu0 %854
        %v856 = vsub.f32 %v848, %v852
        %v857 = vsub.f32 %v849, %v855
        %v858 = vmul.f32 %v856, 1.442695
        %v859 = vpow.pop %v858
        %v860 = vmul.f32 %v857, 1.442695
        %v861 = vpow.pop %v860
        %v862 = vsel %vm659, %v859, 0.0
        %863 = vadd.xlane.f32.xlu0 %v862
        %v864 = vpop.xlane.xlu0 %863
        %v865 = vsel %vm659, %v861, 0.0
        %866 = vadd.xlane.f32.xlu0 %v865
        %v867 = vpop.xlane.xlu0 %866
        %v868 = vrcp.pop %v864
        %v869 = vmul.f32 %v859, %v868
        %v870 = vrcp.pop %v867
        %v871 = vmul.f32 %v861, %v870
        %v872 = vpack.c.bf16 %v871, %v869
        %874 = vrot.lane.b32.xlu0 %v606, 120
        %v875 = vpop.permute.xlu0 %874
        %v878 = vsel %vm659, %v872, 0
        %880 = vmatprep.subr.bf16.mxu0 0
        %881 = vmatpush1.bf16.msra.mxu0 %v875
        %882 = vmatprep.subr.bf16.mxu0 0
        %883 = vmatpush1.bf16.msra.mxu0 0
        %884 = vmatprep.subr.bf16.mxu0 0
        %885 = vmatpush1.bf16.msra.mxu0 0
        %886 = vmatprep.subr.bf16.mxu0 0
        %887 = vmatpush1.bf16.msra.mxu0 0
        %888 = vmatprep.subr.bf16.mxu0 0
        %889 = vmatpush1.bf16.msra.mxu0 0
        %890 = vmatprep.subr.bf16.mxu0 0
        %891 = vmatpush1.bf16.msra.mxu0 0
        %892 = vmatprep.subr.bf16.mxu0 0
        %893 = vmatpush1.bf16.msra.mxu0 0
        %894 = vmatprep.subr.bf16.mxu0 0
        %895 = vmatpush1.bf16.msra.mxu0 0
        %896 = vmatprep.subr.bf16.mxu0 0
        %897 = vmatpush1.bf16.msra.mxu0 0
        %898 = vmatprep.subr.bf16.mxu0 0
        %899 = vmatpush1.bf16.msra.mxu0 0
        %900 = vmatprep.subr.bf16.mxu0 0
        %901 = vmatpush1.bf16.msra.mxu0 0
        %902 = vmatprep.subr.bf16.mxu0 0
        %903 = vmatpush1.bf16.msra.mxu0 0
        %904 = vmatprep.subr.bf16.mxu0 0
        %905 = vmatpush1.bf16.msra.mxu0 0
        %906 = vmatprep.subr.bf16.mxu0 0
        %907 = vmatpush1.bf16.msra.mxu0 0
        %908 = vmatprep.subr.bf16.mxu0 0
        %909 = vmatpush1.bf16.msra.mxu0 0
        %910 = vmatprep.subr.bf16.mxu0 0
        %911 = vmatpush1.bf16.msra.mxu0 0
        %912 = vmatprep.mubr.bf16.mxu0 0
        %913 = vmatmul.mubr.bf16.gmra.mrb[0].mxu0 %v878
        %v914 = vpop.f32.mrb[0].mxu0
        %v915 = vadd.f32 0.0, %v914
        %v916 = vpop.f32.mrb[0].mxu0
        %v917 = vpop.f32.mrb[0].mxu0
        %v918 = vadd.f32 0.0, %v917
        %v919 = vpop.f32.mrb[0].mxu0
        %920 = vdwg.mxu0
        %921 = vrot.lane.b32.xlu0 %v551, 108
        %v922 = vpop.permute.xlu0 %921
        %923 = vrot.lane.b32.xlu0 %v552, 108
        %v924 = vpop.permute.xlu0 %923
        %927 = vrot.lane.b32.xlu0 %v429, 116
        %v928 = vpop.permute.xlu0 %927
        %929 = vrot.lane.b32.xlu0 %v432, 116
        %v930 = vpop.permute.xlu0 %929
        %v933 = vsel %vm569, %v922, %v928
        %v934 = vsel %vm569, %v924, %v930
        %935 = vrot.lane.b32.xlu0 %v339, 16
        %v936 = vpop.permute.xlu0 %935
        %937 = vrot.lane.b32.xlu0 %v340, 16
        %v938 = vpop.permute.xlu0 %937
        %v941 = vmul.f32 %v429, %v936
        %v942 = vmul.f32 %v432, %v938
        %v943 = vmul.f32 %v933, %v341
        %v944 = vmul.f32 %v934, %v342
        %947 = vrot.lane.b32.xlu0 %v943, 16
        %v948 = vpop.permute.xlu0 %947
        %949 = vrot.lane.b32.xlu0 %v944, 16
        %v950 = vpop.permute.xlu0 %949
        %v953 = vadd.f32 %v941, %v948
        %v954 = vadd.f32 %v942, %v950
        %v955 = vpack.c.bf16 %v954, %v953
        %956 = vrot.lane.b32.xlu0 %v579, 108
        %v957 = vpop.permute.xlu0 %956
        %958 = vrot.lane.b32.xlu0 %v580, 108
        %v959 = vpop.permute.xlu0 %958
        %962 = vrot.lane.b32.xlu0 %v487, 116
        %v963 = vpop.permute.xlu0 %962
        %964 = vrot.lane.b32.xlu0 %v490, 116
        %v965 = vpop.permute.xlu0 %964
        %v968 = vsel %vm569, %v957, %v963
        %v969 = vsel %vm569, %v959, %v965
        %v970 = vmul.f32 %v487, %v936
        %v971 = vmul.f32 %v490, %v938
        %v972 = vmul.f32 %v968, %v341
        %v973 = vmul.f32 %v969, %v342
        %976 = vrot.lane.b32.xlu0 %v972, 16
        %v977 = vpop.permute.xlu0 %976
        %978 = vrot.lane.b32.xlu0 %v973, 16
        %v979 = vpop.permute.xlu0 %978
        %v982 = vadd.f32 %v970, %v977
        %v983 = vadd.f32 %v971, %v979
        %v984 = vpack.c.bf16 %v983, %v982
        %986 = vrot.lane.b32.xlu0 %v955, 112
        %v987 = vpop.permute.xlu0 %986
        %989 = vrot.lane.b32.xlu0 %v984, 112
        %v990 = vpop.permute.xlu0 %989
        %v992 = vsel %vm607, %v987, 0
        %v995 = vsel %vm607, %v990, 0
        %997 = vmatprep.subr.bf16.mxu0 0
        %998 = vmatpush1.bf16.xpose.msra.mxu0 %v995
        %999 = vmatprep.subr.bf16.mxu0 0
        %1000 = vmatpush1.bf16.xpose.msra.mxu0 0
        %1001 = vmatprep.subr.bf16.mxu0 0
        %1002 = vmatpush1.bf16.xpose.msra.mxu0 0
        %1003 = vmatprep.subr.bf16.mxu0 0
        %1004 = vmatpush1.bf16.xpose.msra.mxu0 0
        %1005 = vmatprep.subr.bf16.mxu0 0
        %1006 = vmatpush1.bf16.xpose.msra.mxu0 0
        %1007 = vmatprep.subr.bf16.mxu0 0
        %1008 = vmatpush1.bf16.xpose.msra.mxu0 0
        %1009 = vmatprep.subr.bf16.mxu0 0
        %1010 = vmatpush1.bf16.xpose.msra.mxu0 0
        %1011 = vmatprep.subr.bf16.mxu0 0
        %1012 = vmatpush1.bf16.xpose.msra.mxu0 0
        %1013 = vmatprep.subr.bf16.mxu0 0
        %1014 = vmatpush1.bf16.xpose.msra.mxu0 0
        %1015 = vmatprep.subr.bf16.mxu0 0
        %1016 = vmatpush1.bf16.xpose.msra.mxu0 0
        %1017 = vmatprep.subr.bf16.mxu0 0
        %1018 = vmatpush1.bf16.xpose.msra.mxu0 0
        %1019 = vmatprep.subr.bf16.mxu0 0
        %1020 = vmatpush1.bf16.xpose.msra.mxu0 0
        %1021 = vmatprep.subr.bf16.mxu0 0
        %1022 = vmatpush1.bf16.xpose.msra.mxu0 0
        %1023 = vmatprep.subr.bf16.mxu0 0
        %1024 = vmatpush1.bf16.xpose.msra.mxu0 0
        %1025 = vmatprep.subr.bf16.mxu0 0
        %1026 = vmatpush1.bf16.xpose.msra.mxu0 0
        %1027 = vmatprep.subr.bf16.mxu0 0
        %1028 = vmatpush1.bf16.xpose.msra.mxu0 0
        %1029 = vmatprep.mubr.bf16.mxu0 0
        %1030 = vmatmul.mubr.bf16.gmra.mrb[0].mxu0 %v992
        %v1031 = vpop.f32.mrb[0].mxu0
        %v1032 = vadd.f32 0.0, %v1031
        %v1033 = vpop.f32.mrb[0].mxu0
        %v1034 = vpop.f32.mrb[0].mxu0
        %v1035 = vadd.f32 0.0, %v1034
        %v1036 = vpop.f32.mrb[0].mxu0
        %1037 = vdwg.mxu0
        %v1038 = vmul.f32 %v1032, 0.35355338
        %v1039 = vmul.f32 %v1035, 0.35355338
        %v1040 = vsel %vm337, %v1038, -1e+09
        %v1041 = vsel %vm338, %v1039, -1e+09
        %v1042 = vsel %vm659, %v1040, -inf
        %1043 = vmax.xlane.f32.xlu0 %v1042
        %v1044 = vpop.xlane.xlu0 %1043
        %v1045 = vsel %vm659, %v1041, -inf
        %1046 = vmax.xlane.f32.xlu0 %v1045
        %v1047 = vpop.xlane.xlu0 %1046
        %v1048 = vsub.f32 %v1040, %v1044
        %v1049 = vsub.f32 %v1041, %v1047
        %v1050 = vmul.f32 %v1048, 1.442695
        %v1051 = vpow.pop %v1050
        %v1052 = vmul.f32 %v1049, 1.442695
        %v1053 = vpow.pop %v1052
        %v1054 = vsel %vm659, %v1051, 0.0
        %1055 = vadd.xlane.f32.xlu0 %v1054
        %v1056 = vpop.xlane.xlu0 %1055
        %v1057 = vsel %vm659, %v1053, 0.0
        %1058 = vadd.xlane.f32.xlu0 %v1057
        %v1059 = vpop.xlane.xlu0 %1058
        %v1060 = vrcp.pop %v1056
        %v1061 = vmul.f32 %v1051, %v1060
        %v1062 = vrcp.pop %v1059
        %v1063 = vmul.f32 %v1053, %v1062
        %v1064 = vpack.c.bf16 %v1063, %v1061
        %1065 = vrot.lane.b32.xlu0 %v606, 112
        %v1066 = vpop.permute.xlu0 %1065
        %v1069 = vsel %vm659, %v1064, 0
        %1071 = vmatprep.subr.bf16.mxu0 0
        %1072 = vmatpush1.bf16.msra.mxu0 %v1066
        %1073 = vmatprep.subr.bf16.mxu0 0
        %1074 = vmatpush1.bf16.msra.mxu0 0
        %1075 = vmatprep.subr.bf16.mxu0 0
        %1076 = vmatpush1.bf16.msra.mxu0 0
        %1077 = vmatprep.subr.bf16.mxu0 0
        %1078 = vmatpush1.bf16.msra.mxu0 0
        %1079 = vmatprep.subr.bf16.mxu0 0
        %1080 = vmatpush1.bf16.msra.mxu0 0
        %1081 = vmatprep.subr.bf16.mxu0 0
        %1082 = vmatpush1.bf16.msra.mxu0 0
        %1083 = vmatprep.subr.bf16.mxu0 0
        %1084 = vmatpush1.bf16.msra.mxu0 0
        %1085 = vmatprep.subr.bf16.mxu0 0
        %1086 = vmatpush1.bf16.msra.mxu0 0
        %1087 = vmatprep.subr.bf16.mxu0 0
        %1088 = vmatpush1.bf16.msra.mxu0 0
        %1089 = vmatprep.subr.bf16.mxu0 0
        %1090 = vmatpush1.bf16.msra.mxu0 0
        %1091 = vmatprep.subr.bf16.mxu0 0
        %1092 = vmatpush1.bf16.msra.mxu0 0
        %1093 = vmatprep.subr.bf16.mxu0 0
        %1094 = vmatpush1.bf16.msra.mxu0 0
        %1095 = vmatprep.subr.bf16.mxu0 0
        %1096 = vmatpush1.bf16.msra.mxu0 0
        %1097 = vmatprep.subr.bf16.mxu0 0
        %1098 = vmatpush1.bf16.msra.mxu0 0
        %1099 = vmatprep.subr.bf16.mxu0 0
        %1100 = vmatpush1.bf16.msra.mxu0 0
        %1101 = vmatprep.subr.bf16.mxu0 0
        %1102 = vmatpush1.bf16.msra.mxu0 0
        %1103 = vmatprep.mubr.bf16.mxu0 0
        %1104 = vmatmul.mubr.bf16.gmra.mrb[0].mxu0 %v1069
        %v1105 = vpop.f32.mrb[0].mxu0
        %v1106 = vadd.f32 0.0, %v1105
        %v1107 = vpop.f32.mrb[0].mxu0
        %v1108 = vpop.f32.mrb[0].mxu0
        %v1109 = vadd.f32 0.0, %v1108
        %v1110 = vpop.f32.mrb[0].mxu0
        %1111 = vdwg.mxu0
        %1112 = vrot.lane.b32.xlu0 %v551, 100
        %v1113 = vpop.permute.xlu0 %1112
        %1114 = vrot.lane.b32.xlu0 %v552, 100
        %v1115 = vpop.permute.xlu0 %1114
        %1118 = vrot.lane.b32.xlu0 %v429, 108
        %v1119 = vpop.permute.xlu0 %1118
        %1120 = vrot.lane.b32.xlu0 %v432, 108
        %v1121 = vpop.permute.xlu0 %1120
        %v1124 = vsel %vm569, %v1113, %v1119
        %v1125 = vsel %vm569, %v1115, %v1121
        %1126 = vrot.lane.b32.xlu0 %v339, 24
        %v1127 = vpop.permute.xlu0 %1126
        %1128 = vrot.lane.b32.xlu0 %v340, 24
        %v1129 = vpop.permute.xlu0 %1128
        %v1132 = vmul.f32 %v429, %v1127
        %v1133 = vmul.f32 %v432, %v1129
        %v1134 = vmul.f32 %v1124, %v341
        %v1135 = vmul.f32 %v1125, %v342
        %1138 = vrot.lane.b32.xlu0 %v1134, 24
        %v1139 = vpop.permute.xlu0 %1138
        %1140 = vrot.lane.b32.xlu0 %v1135, 24
        %v1141 = vpop.permute.xlu0 %1140
        %v1144 = vadd.f32 %v1132, %v1139
        %v1145 = vadd.f32 %v1133, %v1141
        %v1146 = vpack.c.bf16 %v1145, %v1144
        %1147 = vrot.lane.b32.xlu0 %v579, 100
        %v1148 = vpop.permute.xlu0 %1147
        %1149 = vrot.lane.b32.xlu0 %v580, 100
        %v1150 = vpop.permute.xlu0 %1149
        %1153 = vrot.lane.b32.xlu0 %v487, 108
        %v1154 = vpop.permute.xlu0 %1153
        %1155 = vrot.lane.b32.xlu0 %v490, 108
        %v1156 = vpop.permute.xlu0 %1155
        %v1159 = vsel %vm569, %v1148, %v1154
        %v1160 = vsel %vm569, %v1150, %v1156
        %v1161 = vmul.f32 %v487, %v1127
        %v1162 = vmul.f32 %v490, %v1129
        %v1163 = vmul.f32 %v1159, %v341
        %v1164 = vmul.f32 %v1160, %v342
        %1167 = vrot.lane.b32.xlu0 %v1163, 24
        %v1168 = vpop.permute.xlu0 %1167
        %1169 = vrot.lane.b32.xlu0 %v1164, 24
        %v1170 = vpop.permute.xlu0 %1169
        %v1173 = vadd.f32 %v1161, %v1168
        %v1174 = vadd.f32 %v1162, %v1170
        %v1175 = vpack.c.bf16 %v1174, %v1173
        %1177 = vrot.lane.b32.xlu0 %v1146, 104
        %v1178 = vpop.permute.xlu0 %1177
        %1180 = vrot.lane.b32.xlu0 %v1175, 104
        %v1181 = vpop.permute.xlu0 %1180
        %v1183 = vsel %vm607, %v1178, 0
        %v1186 = vsel %vm607, %v1181, 0
        %1188 = vmatprep.subr.bf16.mxu0 0
        %1189 = vmatpush1.bf16.xpose.msra.mxu0 %v1186
        %1190 = vmatprep.subr.bf16.mxu0 0
        %1191 = vmatpush1.bf16.xpose.msra.mxu0 0
        %1192 = vmatprep.subr.bf16.mxu0 0
        %1193 = vmatpush1.bf16.xpose.msra.mxu0 0
        %1194 = vmatprep.subr.bf16.mxu0 0
        %1195 = vmatpush1.bf16.xpose.msra.mxu0 0
        %1196 = vmatprep.subr.bf16.mxu0 0
        %1197 = vmatpush1.bf16.xpose.msra.mxu0 0
        %1198 = vmatprep.subr.bf16.mxu0 0
        %1199 = vmatpush1.bf16.xpose.msra.mxu0 0
        %1200 = vmatprep.subr.bf16.mxu0 0
        %1201 = vmatpush1.bf16.xpose.msra.mxu0 0
        %1202 = vmatprep.subr.bf16.mxu0 0
        %1203 = vmatpush1.bf16.xpose.msra.mxu0 0
        %1204 = vmatprep.subr.bf16.mxu0 0
        %1205 = vmatpush1.bf16.xpose.msra.mxu0 0
        %1206 = vmatprep.subr.bf16.mxu0 0
        %1207 = vmatpush1.bf16.xpose.msra.mxu0 0
        %1208 = vmatprep.subr.bf16.mxu0 0
        %1209 = vmatpush1.bf16.xpose.msra.mxu0 0
        %1210 = vmatprep.subr.bf16.mxu0 0
        %1211 = vmatpush1.bf16.xpose.msra.mxu0 0
        %1212 = vmatprep.subr.bf16.mxu0 0
        %1213 = vmatpush1.bf16.xpose.msra.mxu0 0
        %1214 = vmatprep.subr.bf16.mxu0 0
        %1215 = vmatpush1.bf16.xpose.msra.mxu0 0
        %1216 = vmatprep.subr.bf16.mxu0 0
        %1217 = vmatpush1.bf16.xpose.msra.mxu0 0
        %1218 = vmatprep.subr.bf16.mxu0 0
        %1219 = vmatpush1.bf16.xpose.msra.mxu0 0
        %1220 = vmatprep.mubr.bf16.mxu0 0
        %1221 = vmatmul.mubr.bf16.gmra.mrb[0].mxu0 %v1183
        %v1222 = vpop.f32.mrb[0].mxu0
        %v1223 = vadd.f32 0.0, %v1222
        %v1224 = vpop.f32.mrb[0].mxu0
        %v1225 = vpop.f32.mrb[0].mxu0
        %v1226 = vadd.f32 0.0, %v1225
        %v1227 = vpop.f32.mrb[0].mxu0
        %1228 = vdwg.mxu0
        %v1229 = vmul.f32 %v1223, 0.35355338
        %v1230 = vmul.f32 %v1226, 0.35355338
        %v1231 = vsel %vm337, %v1229, -1e+09
        %v1232 = vsel %vm338, %v1230, -1e+09
        %v1233 = vsel %vm659, %v1231, -inf
        %1234 = vmax.xlane.f32.xlu0 %v1233
        %v1235 = vpop.xlane.xlu0 %1234
        %v1236 = vsel %vm659, %v1232, -inf
        %1237 = vmax.xlane.f32.xlu0 %v1236
        %v1238 = vpop.xlane.xlu0 %1237
        %v1239 = vsub.f32 %v1231, %v1235
        %v1240 = vsub.f32 %v1232, %v1238
        %v1241 = vmul.f32 %v1239, 1.442695
        %v1242 = vpow.pop %v1241
        %v1243 = vmul.f32 %v1240, 1.442695
        %v1244 = vpow.pop %v1243
        %v1245 = vsel %vm659, %v1242, 0.0
        %1246 = vadd.xlane.f32.xlu0 %v1245
        %v1247 = vpop.xlane.xlu0 %1246
        %v1248 = vsel %vm659, %v1244, 0.0
        %1249 = vadd.xlane.f32.xlu0 %v1248
        %v1250 = vpop.xlane.xlu0 %1249
        %v1251 = vrcp.pop %v1247
        %v1252 = vmul.f32 %v1242, %v1251
        %v1253 = vrcp.pop %v1250
        %v1254 = vmul.f32 %v1244, %v1253
        %v1255 = vpack.c.bf16 %v1254, %v1252
        %1256 = vrot.lane.b32.xlu0 %v606, 104
        %v1257 = vpop.permute.xlu0 %1256
        %v1260 = vsel %vm659, %v1255, 0
        %1262 = vmatprep.subr.bf16.mxu0 0
        %1263 = vmatpush1.bf16.msra.mxu0 %v1257
        %1264 = vmatprep.subr.bf16.mxu0 0
        %1265 = vmatpush1.bf16.msra.mxu0 0
        %1266 = vmatprep.subr.bf16.mxu0 0
        %1267 = vmatpush1.bf16.msra.mxu0 0
        %1268 = vmatprep.subr.bf16.mxu0 0
        %1269 = vmatpush1.bf16.msra.mxu0 0
        %1270 = vmatprep.subr.bf16.mxu0 0
        %1271 = vmatpush1.bf16.msra.mxu0 0
        %1272 = vmatprep.subr.bf16.mxu0 0
        %1273 = vmatpush1.bf16.msra.mxu0 0
        %1274 = vmatprep.subr.bf16.mxu0 0
        %1275 = vmatpush1.bf16.msra.mxu0 0
        %1276 = vmatprep.subr.bf16.mxu0 0
        %1277 = vmatpush1.bf16.msra.mxu0 0
        %1278 = vmatprep.subr.bf16.mxu0 0
        %1279 = vmatpush1.bf16.msra.mxu0 0
        %1280 = vmatprep.subr.bf16.mxu0 0
        %1281 = vmatpush1.bf16.msra.mxu0 0
        %1282 = vmatprep.subr.bf16.mxu0 0
        %1283 = vmatpush1.bf16.msra.mxu0 0
        %1284 = vmatprep.subr.bf16.mxu0 0
        %1285 = vmatpush1.bf16.msra.mxu0 0
        %1286 = vmatprep.subr.bf16.mxu0 0
        %1287 = vmatpush1.bf16.msra.mxu0 0
        %1288 = vmatprep.subr.bf16.mxu0 0
        %1289 = vmatpush1.bf16.msra.mxu0 0
        %1290 = vmatprep.subr.bf16.mxu0 0
        %1291 = vmatpush1.bf16.msra.mxu0 0
        %1292 = vmatprep.subr.bf16.mxu0 0
        %1293 = vmatpush1.bf16.msra.mxu0 0
        %1294 = vmatprep.mubr.bf16.mxu0 0
        %1295 = vmatmul.mubr.bf16.gmra.mrb[0].mxu0 %v1260
        %v1296 = vpop.f32.mrb[0].mxu0
        %v1297 = vadd.f32 0.0, %v1296
        %v1298 = vpop.f32.mrb[0].mxu0
        %v1299 = vpop.f32.mrb[0].mxu0
        %v1300 = vadd.f32 0.0, %v1299
        %v1301 = vpop.f32.mrb[0].mxu0
        %1302 = vdwg.mxu0
        %1305 = vrot.lane.b32.xlu0 %v915, 8
        %v1306 = vpop.permute.xlu0 %1305
        %1307 = vrot.lane.b32.xlu0 %v918, 8
        %v1308 = vpop.permute.xlu0 %1307
        %1313 = vrot.lane.b32.xlu0 %v1106, 16
        %v1314 = vpop.permute.xlu0 %1313
        %1315 = vrot.lane.b32.xlu0 %v1109, 16
        %v1316 = vpop.permute.xlu0 %1315
        %1321 = vrot.lane.b32.xlu0 %v1297, 24
        %v1322 = vpop.permute.xlu0 %1321
        %1323 = vrot.lane.b32.xlu0 %v1300, 24
        %v1324 = vpop.permute.xlu0 %1323
        %v1327 = vsel %vm607, %v721, %v1306
        %v1328 = vsel %vm607, %v724, %v1308
        %v1329 = vsel %vm659, %v1327, %v1314
        %v1330 = vsel %vm659, %v1328, %v1316
        %vm1331 = vcmask 195584
        %v1332 = vsel %vm1331, %v1329, %v1322
        %v1333 = vsel %vm1331, %v1330, %v1324
        %v1334 = vpack.c.bf16 %v1333, %v1332
        %v1335 = vld [vmem:[%s3] sm:$0xf]
        %v1336 = vld [vmem:[%s3 + $0x4] sm:$0xf]
        %v1337 = vld [vmem:[%s3 + $0x8] sm:$0xf]
        %v1338 = vld [vmem:[%s3 + $0xc] sm:$0xf]
        %v1343 = vunpack.c.l.b16 %v1335
        %v1344 = vunpack.c.l.b16 %v1336
        %v1345 = vunpack.c.l.b16 %v1337
        %v1346 = vunpack.c.l.b16 %v1338
        %v1347 = vpack.c.b16 %v1344, %v1343
        %v1348 = vpack.c.b16 %v1346, %v1345
        %v1352 = vsel %vm350, %v1334, 0
        %1354 = vmatprep.subr.bf16.mxu0 0
        %1355 = vmatpush1.bf16.msra.mxu0 %v1347
        %1356 = vmatprep.subr.bf16.mxu0 0
        %1357 = vmatpush1.bf16.msra.mxu0 %v1348
        %1358 = vmatprep.subr.bf16.mxu0 0
        %1359 = vmatpush1.bf16.msra.mxu0 0
        %1360 = vmatprep.subr.bf16.mxu0 0
        %1361 = vmatpush1.bf16.msra.mxu0 0
        %1362 = vmatprep.subr.bf16.mxu0 0
        %1363 = vmatpush1.bf16.msra.mxu0 0
        %1364 = vmatprep.subr.bf16.mxu0 0
        %1365 = vmatpush1.bf16.msra.mxu0 0
        %1366 = vmatprep.subr.bf16.mxu0 0
        %1367 = vmatpush1.bf16.msra.mxu0 0
        %1368 = vmatprep.subr.bf16.mxu0 0
        %1369 = vmatpush1.bf16.msra.mxu0 0
        %1370 = vmatprep.subr.bf16.mxu0 0
        %1371 = vmatpush1.bf16.msra.mxu0 0
        %1372 = vmatprep.subr.bf16.mxu0 0
        %1373 = vmatpush1.bf16.msra.mxu0 0
        %1374 = vmatprep.subr.bf16.mxu0 0
        %1375 = vmatpush1.bf16.msra.mxu0 0
        %1376 = vmatprep.subr.bf16.mxu0 0
        %1377 = vmatpush1.bf16.msra.mxu0 0
        %1378 = vmatprep.subr.bf16.mxu0 0
        %1379 = vmatpush1.bf16.msra.mxu0 0
        %1380 = vmatprep.subr.bf16.mxu0 0
        %1381 = vmatpush1.bf16.msra.mxu0 0
        %1382 = vmatprep.subr.bf16.mxu0 0
        %1383 = vmatpush1.bf16.msra.mxu0 0
        %1384 = vmatprep.subr.bf16.mxu0 0
        %1385 = vmatpush1.bf16.msra.mxu0 0
        %1386 = vmatprep.mubr.bf16.mxu0 0
        %1387 = vmatmul.mubr.bf16.gmra.mrb[0].mxu0 %v1352
        %v1388 = vpop.f32.mrb[0].mxu0
        %v1389 = vadd.f32 0.0, %v1388
        %v1390 = vpop.f32.mrb[0].mxu0
        %v1391 = vpop.f32.mrb[0].mxu0
        %v1392 = vadd.f32 0.0, %v1391
        %v1393 = vpop.f32.mrb[0].mxu0
        %1394 = vdwg.mxu0
        %v1395 = vadd.f32 %v345, %v1389
        %v1396 = vadd.f32 %v346, %v1392
        %s1397 = scalar_lea.vmem %s1, 1
        %v1398 = vld [vmem:[%s1397] sm:$0x1]
        %v1399 = vmul.f32 %v1395, %v1395
        %v1400 = vmul.f32 %v1396, %v1396
        %v1401 = vsel %vm350, %v1399, 0.0
        %1402 = vadd.xlane.f32.xlu0 %v1401
        %v1403 = vpop.xlane.xlu0 %1402
        %v1404 = vsel %vm350, %v1400, 0.0
        %1405 = vadd.xlane.f32.xlu0 %v1404
        %v1406 = vpop.xlane.xlu0 %1405
        %v1407 = vmul.f32 %v1403, %v357
        %v1408 = vmul.f32 %v1406, %v357
        %v1409 = vadd.f32 %v1407, 1e-05
        %v1410 = vadd.f32 %v1408, 1e-05
        %v1411 = vrsqrt.pop %v1409
        %v1412 = vrsqrt.pop %v1410
        %v1413 = vmul.f32 %v1395, %v1411
        %v1414 = vmul.f32 %v1396, %v1412
        %v1416 = vlaneseq
        %v1417 = vshrl.u32 %v1416, 7
        %v1418 = vsub.s32 0, %v1417
        %v1419 = vrot.slane %v1398, %v1418
        %v1421 = vmul.f32 %v1413, %v1419
        %v1422 = vmul.f32 %v1414, %v1419
        %v1423 = vpack.c.bf16 %v1422, %v1421
        %v1424 = vld [vmem:[%s4] sm:$0xf]
        %v1425 = vld [vmem:[%s4 + $0x4] sm:$0xf]
        %v1426 = vld [vmem:[%s4 + $0x8] sm:$0xf]
        %v1427 = vld [vmem:[%s4 + $0xc] sm:$0xf]
        %v1432 = vunpack.c.l.b16 %v1424
        %v1433 = vunpack.c.l.b16 %v1425
        %v1434 = vunpack.c.l.b16 %v1426
        %v1435 = vunpack.c.l.b16 %v1427
        %v1436 = vpack.c.b16 %v1433, %v1432
        %v1437 = vpack.c.b16 %v1435, %v1434
        %v1441 = vsel %vm350, %v1423, 0
        %1443 = vmatprep.subr.bf16.mxu0 0
        %1444 = vmatpush1.bf16.msra.mxu0 %v1436
        %1445 = vmatprep.subr.bf16.mxu0 0
        %1446 = vmatpush1.bf16.msra.mxu0 %v1437
        %1447 = vmatprep.subr.bf16.mxu0 0
        %1448 = vmatpush1.bf16.msra.mxu0 0
        %1449 = vmatprep.subr.bf16.mxu0 0
        %1450 = vmatpush1.bf16.msra.mxu0 0
        %1451 = vmatprep.subr.bf16.mxu0 0
        %1452 = vmatpush1.bf16.msra.mxu0 0
        %1453 = vmatprep.subr.bf16.mxu0 0
        %1454 = vmatpush1.bf16.msra.mxu0 0
        %1455 = vmatprep.subr.bf16.mxu0 0
        %1456 = vmatpush1.bf16.msra.mxu0 0
        %1457 = vmatprep.subr.bf16.mxu0 0
        %1458 = vmatpush1.bf16.msra.mxu0 0
        %1459 = vmatprep.subr.bf16.mxu0 0
        %1460 = vmatpush1.bf16.msra.mxu0 0
        %1461 = vmatprep.subr.bf16.mxu0 0
        %1462 = vmatpush1.bf16.msra.mxu0 0
        %1463 = vmatprep.subr.bf16.mxu0 0
        %1464 = vmatpush1.bf16.msra.mxu0 0
        %1465 = vmatprep.subr.bf16.mxu0 0
        %1466 = vmatpush1.bf16.msra.mxu0 0
        %1467 = vmatprep.subr.bf16.mxu0 0
        %1468 = vmatpush1.bf16.msra.mxu0 0
        %1469 = vmatprep.subr.bf16.mxu0 0
        %1470 = vmatpush1.bf16.msra.mxu0 0
        %1471 = vmatprep.subr.bf16.mxu0 0
        %1472 = vmatpush1.bf16.msra.mxu0 0
        %1473 = vmatprep.subr.bf16.mxu0 0
        %1474 = vmatpush1.bf16.msra.mxu0 0
        %1475 = vmatprep.mubr.bf16.mxu0 0
        %1476 = vmatmul.mubr.bf16.gmra.mrb[0].mxu0 %v1441
        %v1477 = vpop.f32.mrb[0].mxu0
        %v1478 = vadd.f32 0.0, %v1477
        %v1479 = vpop.f32.mrb[0].mxu0
        %v1480 = vpop.f32.mrb[0].mxu0
        %v1481 = vadd.f32 0.0, %v1480
        %v1482 = vpop.f32.mrb[0].mxu0
        %1483 = vdwg.mxu0
        %s1484 = scalar_lea.vmem %s4, 16
        %v1485 = vld [vmem:[%s1484] sm:$0xf]
        %v1486 = vld [vmem:[%s1484 + $0x4] sm:$0xf]
        %v1487 = vld [vmem:[%s1484 + $0x8] sm:$0xf]
        %v1488 = vld [vmem:[%s1484 + $0xc] sm:$0xf]
        %v1493 = vunpack.c.l.b16 %v1485
        %v1494 = vunpack.c.l.b16 %v1486
        %v1495 = vunpack.c.l.b16 %v1487
        %v1496 = vunpack.c.l.b16 %v1488
        %v1497 = vpack.c.b16 %v1494, %v1493
        %v1498 = vpack.c.b16 %v1496, %v1495
        %1501 = vmatprep.subr.bf16.mxu0 0
        %1502 = vmatpush1.bf16.msra.mxu0 %v1497
        %1503 = vmatprep.subr.bf16.mxu0 0
        %1504 = vmatpush1.bf16.msra.mxu0 %v1498
        %1505 = vmatprep.subr.bf16.mxu0 0
        %1506 = vmatpush1.bf16.msra.mxu0 0
        %1507 = vmatprep.subr.bf16.mxu0 0
        %1508 = vmatpush1.bf16.msra.mxu0 0
        %1509 = vmatprep.subr.bf16.mxu0 0
        %1510 = vmatpush1.bf16.msra.mxu0 0
        %1511 = vmatprep.subr.bf16.mxu0 0
        %1512 = vmatpush1.bf16.msra.mxu0 0
        %1513 = vmatprep.subr.bf16.mxu0 0
        %1514 = vmatpush1.bf16.msra.mxu0 0
        %1515 = vmatprep.subr.bf16.mxu0 0
        %1516 = vmatpush1.bf16.msra.mxu0 0
        %1517 = vmatprep.subr.bf16.mxu0 0
        %1518 = vmatpush1.bf16.msra.mxu0 0
        %1519 = vmatprep.subr.bf16.mxu0 0
        %1520 = vmatpush1.bf16.msra.mxu0 0
        %1521 = vmatprep.subr.bf16.mxu0 0
        %1522 = vmatpush1.bf16.msra.mxu0 0
        %1523 = vmatprep.subr.bf16.mxu0 0
        %1524 = vmatpush1.bf16.msra.mxu0 0
        %1525 = vmatprep.subr.bf16.mxu0 0
        %1526 = vmatpush1.bf16.msra.mxu0 0
        %1527 = vmatprep.subr.bf16.mxu0 0
        %1528 = vmatpush1.bf16.msra.mxu0 0
        %1529 = vmatprep.subr.bf16.mxu0 0
        %1530 = vmatpush1.bf16.msra.mxu0 0
        %1531 = vmatprep.subr.bf16.mxu0 0
        %1532 = vmatpush1.bf16.msra.mxu0 0
        %1533 = vmatprep.mubr.bf16.mxu0 0
        %1534 = vmatmul.mubr.bf16.gmra.mrb[0].mxu0 %v1441
        %v1535 = vpop.f32.mrb[0].mxu0
        %v1536 = vadd.f32 0.0, %v1535
        %v1537 = vpop.f32.mrb[0].mxu0
        %v1538 = vpop.f32.mrb[0].mxu0
        %v1539 = vadd.f32 0.0, %v1538
        %v1540 = vpop.f32.mrb[0].mxu0
        %1541 = vdwg.mxu0
        %v1542 = vxor.u32 %v1478, 2147483648
        %v1543 = vxor.u32 %v1481, 2147483648
        %v1544 = vmul.f32 %v1542, 1.442695
        %v1545 = vpow.pop %v1544
        %v1546 = vmul.f32 %v1543, 1.442695
        %v1547 = vpow.pop %v1546
        %v1548 = vadd.f32 %v1545, 1.0
        %v1549 = vadd.f32 %v1547, 1.0
        %v1550 = vrcp.pop %v1548
        %v1551 = vmul.f32 1.0, %v1550
        %v1552 = vrcp.pop %v1549
        %v1553 = vmul.f32 1.0, %v1552
        %v1554 = vmul.f32 %v1478, %v1551
        %v1555 = vmul.f32 %v1481, %v1553
        %v1556 = vmul.f32 %v1554, %v1536
        %v1557 = vmul.f32 %v1555, %v1539
        %v1558 = vpack.c.bf16 %v1557, %v1556
        %v1559 = vld [vmem:[%s5] sm:$0xf]
        %v1560 = vld [vmem:[%s5 + $0x4] sm:$0xf]
        %v1561 = vld [vmem:[%s5 + $0x8] sm:$0xf]
        %v1562 = vld [vmem:[%s5 + $0xc] sm:$0xf]
        %v1563 = vld [vmem:[%s5 + $0x10] sm:$0xf]
        %v1564 = vld [vmem:[%s5 + $0x14] sm:$0xf]
        %v1565 = vld [vmem:[%s5 + $0x18] sm:$0xf]
        %v1566 = vld [vmem:[%s5 + $0x1c] sm:$0xf]
        %v1575 = vunpack.c.l.b16 %v1559
        %v1576 = vunpack.c.l.b16 %v1560
        %v1577 = vunpack.c.l.b16 %v1561
        %v1578 = vunpack.c.l.b16 %v1562
        %v1579 = vunpack.c.l.b16 %v1563
        %v1580 = vunpack.c.l.b16 %v1564
        %v1581 = vunpack.c.l.b16 %v1565
        %v1582 = vunpack.c.l.b16 %v1566
        %v1583 = vpack.c.b16 %v1576, %v1575
        %v1584 = vpack.c.b16 %v1578, %v1577
        %v1585 = vpack.c.b16 %v1580, %v1579
        %v1586 = vpack.c.b16 %v1582, %v1581
        %vm1591 = vcmask 523264
        %v1593 = vsel %vm1591, %v1558, 0
        %1595 = vmatprep.subr.bf16.mxu0 0
        %1596 = vmatpush1.bf16.msra.mxu0 %v1583
        %1597 = vmatprep.subr.bf16.mxu0 0
        %1598 = vmatpush1.bf16.msra.mxu0 %v1584
        %1599 = vmatprep.subr.bf16.mxu0 0
        %1600 = vmatpush1.bf16.msra.mxu0 %v1585
        %1601 = vmatprep.subr.bf16.mxu0 0
        %1602 = vmatpush1.bf16.msra.mxu0 %v1586
        %1603 = vmatprep.subr.bf16.mxu0 0
        %1604 = vmatpush1.bf16.msra.mxu0 0
        %1605 = vmatprep.subr.bf16.mxu0 0
        %1606 = vmatpush1.bf16.msra.mxu0 0
        %1607 = vmatprep.subr.bf16.mxu0 0
        %1608 = vmatpush1.bf16.msra.mxu0 0
        %1609 = vmatprep.subr.bf16.mxu0 0
        %1610 = vmatpush1.bf16.msra.mxu0 0
        %1611 = vmatprep.subr.bf16.mxu0 0
        %1612 = vmatpush1.bf16.msra.mxu0 0
        %1613 = vmatprep.subr.bf16.mxu0 0
        %1614 = vmatpush1.bf16.msra.mxu0 0
        %1615 = vmatprep.subr.bf16.mxu0 0
        %1616 = vmatpush1.bf16.msra.mxu0 0
        %1617 = vmatprep.subr.bf16.mxu0 0
        %1618 = vmatpush1.bf16.msra.mxu0 0
        %1619 = vmatprep.subr.bf16.mxu0 0
        %1620 = vmatpush1.bf16.msra.mxu0 0
        %1621 = vmatprep.subr.bf16.mxu0 0
        %1622 = vmatpush1.bf16.msra.mxu0 0
        %1623 = vmatprep.subr.bf16.mxu0 0
        %1624 = vmatpush1.bf16.msra.mxu0 0
        %1625 = vmatprep.subr.bf16.mxu0 0
        %1626 = vmatpush1.bf16.msra.mxu0 0
        %1627 = vmatprep.mubr.bf16.mxu0 0
        %1628 = vmatmul.mubr.bf16.gmra.mrb[0].mxu0 %v1593
        %v1629 = vpop.f32.mrb[0].mxu0
        %v1630 = vadd.f32 0.0, %v1629
        %v1631 = vpop.f32.mrb[0].mxu0
        %v1632 = vpop.f32.mrb[0].mxu0
        %v1633 = vadd.f32 0.0, %v1632
        %v1634 = vpop.f32.mrb[0].mxu0
        %1635 = vdwg.mxu0
        %v1636 = vadd.f32 %v1395, %v1630
        %v1637 = vadd.f32 %v1396, %v1633
        %s1638 = scalar_lea.vmem %s1, 2
        %v1639 = vld [vmem:[%s1638] sm:$0x1]
        %v1640 = vmul.f32 %v1636, %v1636
        %v1641 = vmul.f32 %v1637, %v1637
        %v1642 = vsel %vm350, %v1640, 0.0
        %1643 = vadd.xlane.f32.xlu0 %v1642
        %v1644 = vpop.xlane.xlu0 %1643
        %v1645 = vsel %vm350, %v1641, 0.0
        %1646 = vadd.xlane.f32.xlu0 %v1645
        %v1647 = vpop.xlane.xlu0 %1646
        %v1648 = vmul.f32 %v1644, %v357
        %v1649 = vmul.f32 %v1647, %v357
        %v1650 = vadd.f32 %v1648, 1e-05
        %v1651 = vadd.f32 %v1649, 1e-05
        %v1652 = vrsqrt.pop %v1650
        %v1653 = vrsqrt.pop %v1651
        %v1654 = vmul.f32 %v1636, %v1652
        %v1655 = vmul.f32 %v1637, %v1653
        %v1657 = vlaneseq
        %v1658 = vshrl.u32 %v1657, 7
        %v1659 = vsub.s32 0, %v1658
        %v1660 = vrot.slane %v1639, %v1659
        %v1662 = vmul.f32 %v1654, %v1660
        %v1663 = vmul.f32 %v1655, %v1660
        %v1664 = vpack.c.bf16 %v1663, %v1662
        %s1665 = scalar_lea.vmem %s2, 48
        %v1666 = vld [vmem:[%s1665] sm:$0xf]
        %v1667 = vld [vmem:[%s1665 + $0x4] sm:$0xf]
        %v1668 = vld [vmem:[%s1665 + $0x8] sm:$0xf]
        %v1669 = vld [vmem:[%s1665 + $0xc] sm:$0xf]
        %v1674 = vunpack.c.l.b16 %v1666
        %v1675 = vunpack.c.l.b16 %v1667
        %v1676 = vunpack.c.l.b16 %v1668
        %v1677 = vunpack.c.l.b16 %v1669
        %v1678 = vpack.c.b16 %v1675, %v1674
        %v1679 = vpack.c.b16 %v1677, %v1676
        %v1683 = vsel %vm350, %v1664, 0
        %1685 = vmatprep.subr.bf16.mxu0 0
        %1686 = vmatpush1.bf16.msra.mxu0 %v1678
        %1687 = vmatprep.subr.bf16.mxu0 0
        %1688 = vmatpush1.bf16.msra.mxu0 %v1679
        %1689 = vmatprep.subr.bf16.mxu0 0
        %1690 = vmatpush1.bf16.msra.mxu0 0
        %1691 = vmatprep.subr.bf16.mxu0 0
        %1692 = vmatpush1.bf16.msra.mxu0 0
        %1693 = vmatprep.subr.bf16.mxu0 0
        %1694 = vmatpush1.bf16.msra.mxu0 0
        %1695 = vmatprep.subr.bf16.mxu0 0
        %1696 = vmatpush1.bf16.msra.mxu0 0
        %1697 = vmatprep.subr.bf16.mxu0 0
        %1698 = vmatpush1.bf16.msra.mxu0 0
        %1699 = vmatprep.subr.bf16.mxu0 0
        %1700 = vmatpush1.bf16.msra.mxu0 0
        %1701 = vmatprep.subr.bf16.mxu0 0
        %1702 = vmatpush1.bf16.msra.mxu0 0
        %1703 = vmatprep.subr.bf16.mxu0 0
        %1704 = vmatpush1.bf16.msra.mxu0 0
        %1705 = vmatprep.subr.bf16.mxu0 0
        %1706 = vmatpush1.bf16.msra.mxu0 0
        %1707 = vmatprep.subr.bf16.mxu0 0
        %1708 = vmatpush1.bf16.msra.mxu0 0
        %1709 = vmatprep.subr.bf16.mxu0 0
        %1710 = vmatpush1.bf16.msra.mxu0 0
        %1711 = vmatprep.subr.bf16.mxu0 0
        %1712 = vmatpush1.bf16.msra.mxu0 0
        %1713 = vmatprep.subr.bf16.mxu0 0
        %1714 = vmatpush1.bf16.msra.mxu0 0
        %1715 = vmatprep.subr.bf16.mxu0 0
        %1716 = vmatpush1.bf16.msra.mxu0 0
        %1717 = vmatprep.mubr.bf16.mxu0 0
        %1718 = vmatmul.mubr.bf16.gmra.mrb[0].mxu0 %v1683
        %v1719 = vpop.f32.mrb[0].mxu0
        %v1720 = vadd.f32 0.0, %v1719
        %v1721 = vpop.f32.mrb[0].mxu0
        %v1722 = vpop.f32.mrb[0].mxu0
        %v1723 = vadd.f32 0.0, %v1722
        %v1724 = vpop.f32.mrb[0].mxu0
        %1725 = vdwg.mxu0
        %s1726 = scalar_lea.vmem %s2, 64
        %v1727 = vld [vmem:[%s1726] sm:$0xf]
        %v1728 = vld [vmem:[%s1726 + $0x4] sm:$0xf]
        %v1729 = vld [vmem:[%s1726 + $0x8] sm:$0xf]
        %v1730 = vld [vmem:[%s1726 + $0xc] sm:$0xf]
        %v1735 = vunpack.c.l.b16 %v1727
        %v1736 = vunpack.c.l.b16 %v1728
        %v1737 = vunpack.c.l.b16 %v1729
        %v1738 = vunpack.c.l.b16 %v1730
        %v1739 = vpack.c.b16 %v1736, %v1735
        %v1740 = vpack.c.b16 %v1738, %v1737
        %1743 = vmatprep.subr.bf16.mxu0 0
        %1744 = vmatpush1.bf16.msra.mxu0 %v1739
        %1745 = vmatprep.subr.bf16.mxu0 0
        %1746 = vmatpush1.bf16.msra.mxu0 %v1740
        %1747 = vmatprep.subr.bf16.mxu0 0
        %1748 = vmatpush1.bf16.msra.mxu0 0
        %1749 = vmatprep.subr.bf16.mxu0 0
        %1750 = vmatpush1.bf16.msra.mxu0 0
        %1751 = vmatprep.subr.bf16.mxu0 0
        %1752 = vmatpush1.bf16.msra.mxu0 0
        %1753 = vmatprep.subr.bf16.mxu0 0
        %1754 = vmatpush1.bf16.msra.mxu0 0
        %1755 = vmatprep.subr.bf16.mxu0 0
        %1756 = vmatpush1.bf16.msra.mxu0 0
        %1757 = vmatprep.subr.bf16.mxu0 0
        %1758 = vmatpush1.bf16.msra.mxu0 0
        %1759 = vmatprep.subr.bf16.mxu0 0
        %1760 = vmatpush1.bf16.msra.mxu0 0
        %1761 = vmatprep.subr.bf16.mxu0 0
        %1762 = vmatpush1.bf16.msra.mxu0 0
        %1763 = vmatprep.subr.bf16.mxu0 0
        %1764 = vmatpush1.bf16.msra.mxu0 0
        %1765 = vmatprep.subr.bf16.mxu0 0
        %1766 = vmatpush1.bf16.msra.mxu0 0
        %1767 = vmatprep.subr.bf16.mxu0 0
        %1768 = vmatpush1.bf16.msra.mxu0 0
        %1769 = vmatprep.subr.bf16.mxu0 0
        %1770 = vmatpush1.bf16.msra.mxu0 0
        %1771 = vmatprep.subr.bf16.mxu0 0
        %1772 = vmatpush1.bf16.msra.mxu0 0
        %1773 = vmatprep.subr.bf16.mxu0 0
        %1774 = vmatpush1.bf16.msra.mxu0 0
        %1775 = vmatprep.mubr.bf16.mxu0 0
        %1776 = vmatmul.mubr.bf16.gmra.mrb[0].mxu0 %v1683
        %v1777 = vpop.f32.mrb[0].mxu0
        %v1778 = vadd.f32 0.0, %v1777
        %v1779 = vpop.f32.mrb[0].mxu0
        %v1780 = vpop.f32.mrb[0].mxu0
        %v1781 = vadd.f32 0.0, %v1780
        %v1782 = vpop.f32.mrb[0].mxu0
        %1783 = vdwg.mxu0
        %s1784 = scalar_lea.vmem %s2, 80
        %v1785 = vld [vmem:[%s1784] sm:$0xf]
        %v1786 = vld [vmem:[%s1784 + $0x4] sm:$0xf]
        %v1787 = vld [vmem:[%s1784 + $0x8] sm:$0xf]
        %v1788 = vld [vmem:[%s1784 + $0xc] sm:$0xf]
        %v1793 = vunpack.c.l.b16 %v1785
        %v1794 = vunpack.c.l.b16 %v1786
        %v1795 = vunpack.c.l.b16 %v1787
        %v1796 = vunpack.c.l.b16 %v1788
        %v1797 = vpack.c.b16 %v1794, %v1793
        %v1798 = vpack.c.b16 %v1796, %v1795
        %1801 = vmatprep.subr.bf16.mxu0 0
        %1802 = vmatpush1.bf16.msra.mxu0 %v1797
        %1803 = vmatprep.subr.bf16.mxu0 0
        %1804 = vmatpush1.bf16.msra.mxu0 %v1798
        %1805 = vmatprep.subr.bf16.mxu0 0
        %1806 = vmatpush1.bf16.msra.mxu0 0
        %1807 = vmatprep.subr.bf16.mxu0 0
        %1808 = vmatpush1.bf16.msra.mxu0 0
        %1809 = vmatprep.subr.bf16.mxu0 0
        %1810 = vmatpush1.bf16.msra.mxu0 0
        %1811 = vmatprep.subr.bf16.mxu0 0
        %1812 = vmatpush1.bf16.msra.mxu0 0
        %1813 = vmatprep.subr.bf16.mxu0 0
        %1814 = vmatpush1.bf16.msra.mxu0 0
        %1815 = vmatprep.subr.bf16.mxu0 0
        %1816 = vmatpush1.bf16.msra.mxu0 0
        %1817 = vmatprep.subr.bf16.mxu0 0
        %1818 = vmatpush1.bf16.msra.mxu0 0
        %1819 = vmatprep.subr.bf16.mxu0 0
        %1820 = vmatpush1.bf16.msra.mxu0 0
        %1821 = vmatprep.subr.bf16.mxu0 0
        %1822 = vmatpush1.bf16.msra.mxu0 0
        %1823 = vmatprep.subr.bf16.mxu0 0
        %1824 = vmatpush1.bf16.msra.mxu0 0
        %1825 = vmatprep.subr.bf16.mxu0 0
        %1826 = vmatpush1.bf16.msra.mxu0 0
        %1827 = vmatprep.subr.bf16.mxu0 0
        %1828 = vmatpush1.bf16.msra.mxu0 0
        %1829 = vmatprep.subr.bf16.mxu0 0
        %1830 = vmatpush1.bf16.msra.mxu0 0
        %1831 = vmatprep.subr.bf16.mxu0 0
        %1832 = vmatpush1.bf16.msra.mxu0 0
        %1833 = vmatprep.mubr.bf16.mxu0 0
        %1834 = vmatmul.mubr.bf16.gmra.mrb[0].mxu0 %v1683
        %v1835 = vpop.f32.mrb[0].mxu0
        %v1836 = vadd.f32 0.0, %v1835
        %v1837 = vpop.f32.mrb[0].mxu0
        %v1838 = vpop.f32.mrb[0].mxu0
        %v1839 = vadd.f32 0.0, %v1838
        %v1840 = vpop.f32.mrb[0].mxu0
        %1841 = vdwg.mxu0
        %v1842 = vsub.f32 0.0, %v1720
        %v1843 = vsub.f32 0.0, %v1723
        %1846 = vrot.lane.b32.xlu0 %v1842, 124
        %v1847 = vpop.permute.xlu0 %1846
        %1848 = vrot.lane.b32.xlu0 %v1843, 124
        %v1849 = vpop.permute.xlu0 %1848
        %1854 = vrot.lane.b32.xlu0 %v1720, 4
        %v1855 = vpop.permute.xlu0 %1854
        %1856 = vrot.lane.b32.xlu0 %v1723, 4
        %v1857 = vpop.permute.xlu0 %1856
        %v1860 = vsel %vm569, %v1847, %v1855
        %v1861 = vsel %vm569, %v1849, %v1857
        %v1862 = vmul.f32 %v1720, %v339
        %v1863 = vmul.f32 %v1723, %v340
        %v1864 = vmul.f32 %v1860, %v341
        %v1865 = vmul.f32 %v1861, %v342
        %v1866 = vadd.f32 %v1862, %v1864
        %v1867 = vadd.f32 %v1863, %v1865
        %v1868 = vpack.c.bf16 %v1867, %v1866
        %v1869 = vsub.f32 0.0, %v1778
        %v1870 = vsub.f32 0.0, %v1781
        %1873 = vrot.lane.b32.xlu0 %v1869, 124
        %v1874 = vpop.permute.xlu0 %1873
        %1875 = vrot.lane.b32.xlu0 %v1870, 124
        %v1876 = vpop.permute.xlu0 %1875
        %1881 = vrot.lane.b32.xlu0 %v1778, 4
        %v1882 = vpop.permute.xlu0 %1881
        %1883 = vrot.lane.b32.xlu0 %v1781, 4
        %v1884 = vpop.permute.xlu0 %1883
        %v1887 = vsel %vm569, %v1874, %v1882
        %v1888 = vsel %vm569, %v1876, %v1884
        %v1889 = vmul.f32 %v1778, %v339
        %v1890 = vmul.f32 %v1781, %v340
        %v1891 = vmul.f32 %v1887, %v341
        %v1892 = vmul.f32 %v1888, %v342
        %v1893 = vadd.f32 %v1889, %v1891
        %v1894 = vadd.f32 %v1890, %v1892
        %v1895 = vpack.c.bf16 %v1894, %v1893
        %v1896 = vpack.c.bf16 %v1839, %v1836
        %v1898 = vsel %vm607, %v1868, 0
        %v1901 = vsel %vm607, %v1895, 0
        %1903 = vmatprep.subr.bf16.mxu0 0
        %1904 = vmatpush1.bf16.xpose.msra.mxu0 %v1901
        %1905 = vmatprep.subr.bf16.mxu0 0
        %1906 = vmatpush1.bf16.xpose.msra.mxu0 0
        %1907 = vmatprep.subr.bf16.mxu0 0
        %1908 = vmatpush1.bf16.xpose.msra.mxu0 0
        %1909 = vmatprep.subr.bf16.mxu0 0
        %1910 = vmatpush1.bf16.xpose.msra.mxu0 0
        %1911 = vmatprep.subr.bf16.mxu0 0
        %1912 = vmatpush1.bf16.xpose.msra.mxu0 0
        %1913 = vmatprep.subr.bf16.mxu0 0
        %1914 = vmatpush1.bf16.xpose.msra.mxu0 0
        %1915 = vmatprep.subr.bf16.mxu0 0
        %1916 = vmatpush1.bf16.xpose.msra.mxu0 0
        %1917 = vmatprep.subr.bf16.mxu0 0
        %1918 = vmatpush1.bf16.xpose.msra.mxu0 0
        %1919 = vmatprep.subr.bf16.mxu0 0
        %1920 = vmatpush1.bf16.xpose.msra.mxu0 0
        %1921 = vmatprep.subr.bf16.mxu0 0
        %1922 = vmatpush1.bf16.xpose.msra.mxu0 0
        %1923 = vmatprep.subr.bf16.mxu0 0
        %1924 = vmatpush1.bf16.xpose.msra.mxu0 0
        %1925 = vmatprep.subr.bf16.mxu0 0
        %1926 = vmatpush1.bf16.xpose.msra.mxu0 0
        %1927 = vmatprep.subr.bf16.mxu0 0
        %1928 = vmatpush1.bf16.xpose.msra.mxu0 0
        %1929 = vmatprep.subr.bf16.mxu0 0
        %1930 = vmatpush1.bf16.xpose.msra.mxu0 0
        %1931 = vmatprep.subr.bf16.mxu0 0
        %1932 = vmatpush1.bf16.xpose.msra.mxu0 0
        %1933 = vmatprep.subr.bf16.mxu0 0
        %1934 = vmatpush1.bf16.xpose.msra.mxu0 0
        %1935 = vmatprep.mubr.bf16.mxu0 0
        %1936 = vmatmul.mubr.bf16.gmra.mrb[0].mxu0 %v1898
        %v1937 = vpop.f32.mrb[0].mxu0
        %v1938 = vadd.f32 0.0, %v1937
        %v1939 = vpop.f32.mrb[0].mxu0
        %v1940 = vpop.f32.mrb[0].mxu0
        %v1941 = vadd.f32 0.0, %v1940
        %v1942 = vpop.f32.mrb[0].mxu0
        %1943 = vdwg.mxu0
        %v1944 = vmul.f32 %v1938, 0.35355338
        %v1945 = vmul.f32 %v1941, 0.35355338
        %v1946 = vsel %vm337, %v1944, -1e+09
        %v1947 = vsel %vm338, %v1945, -1e+09
        %v1948 = vsel %vm659, %v1946, -inf
        %1949 = vmax.xlane.f32.xlu0 %v1948
        %v1950 = vpop.xlane.xlu0 %1949
        %v1951 = vsel %vm659, %v1947, -inf
        %1952 = vmax.xlane.f32.xlu0 %v1951
        %v1953 = vpop.xlane.xlu0 %1952
        %v1954 = vsub.f32 %v1946, %v1950
        %v1955 = vsub.f32 %v1947, %v1953
        %v1956 = vmul.f32 %v1954, 1.442695
        %v1957 = vpow.pop %v1956
        %v1958 = vmul.f32 %v1955, 1.442695
        %v1959 = vpow.pop %v1958
        %v1960 = vsel %vm659, %v1957, 0.0
        %1961 = vadd.xlane.f32.xlu0 %v1960
        %v1962 = vpop.xlane.xlu0 %1961
        %v1963 = vsel %vm659, %v1959, 0.0
        %1964 = vadd.xlane.f32.xlu0 %v1963
        %v1965 = vpop.xlane.xlu0 %1964
        %v1966 = vrcp.pop %v1962
        %v1967 = vmul.f32 %v1957, %v1966
        %v1968 = vrcp.pop %v1965
        %v1969 = vmul.f32 %v1959, %v1968
        %v1970 = vpack.c.bf16 %v1969, %v1967
        %v1972 = vsel %vm659, %v1970, 0
        %1974 = vmatprep.subr.bf16.mxu0 0
        %1975 = vmatpush1.bf16.msra.mxu0 %v1896
        %1976 = vmatprep.subr.bf16.mxu0 0
        %1977 = vmatpush1.bf16.msra.mxu0 0
        %1978 = vmatprep.subr.bf16.mxu0 0
        %1979 = vmatpush1.bf16.msra.mxu0 0
        %1980 = vmatprep.subr.bf16.mxu0 0
        %1981 = vmatpush1.bf16.msra.mxu0 0
        %1982 = vmatprep.subr.bf16.mxu0 0
        %1983 = vmatpush1.bf16.msra.mxu0 0
        %1984 = vmatprep.subr.bf16.mxu0 0
        %1985 = vmatpush1.bf16.msra.mxu0 0
        %1986 = vmatprep.subr.bf16.mxu0 0
        %1987 = vmatpush1.bf16.msra.mxu0 0
        %1988 = vmatprep.subr.bf16.mxu0 0
        %1989 = vmatpush1.bf16.msra.mxu0 0
        %1990 = vmatprep.subr.bf16.mxu0 0
        %1991 = vmatpush1.bf16.msra.mxu0 0
        %1992 = vmatprep.subr.bf16.mxu0 0
        %1993 = vmatpush1.bf16.msra.mxu0 0
        %1994 = vmatprep.subr.bf16.mxu0 0
        %1995 = vmatpush1.bf16.msra.mxu0 0
        %1996 = vmatprep.subr.bf16.mxu0 0
        %1997 = vmatpush1.bf16.msra.mxu0 0
        %1998 = vmatprep.subr.bf16.mxu0 0
        %1999 = vmatpush1.bf16.msra.mxu0 0
        %2000 = vmatprep.subr.bf16.mxu0 0
        %2001 = vmatpush1.bf16.msra.mxu0 0
        %2002 = vmatprep.subr.bf16.mxu0 0
        %2003 = vmatpush1.bf16.msra.mxu0 0
        %2004 = vmatprep.subr.bf16.mxu0 0
        %2005 = vmatpush1.bf16.msra.mxu0 0
        %2006 = vmatprep.mubr.bf16.mxu0 0
        %2007 = vmatmul.mubr.bf16.gmra.mrb[0].mxu0 %v1972
        %v2008 = vpop.f32.mrb[0].mxu0
        %v2009 = vadd.f32 0.0, %v2008
        %v2010 = vpop.f32.mrb[0].mxu0
        %v2011 = vpop.f32.mrb[0].mxu0
        %v2012 = vadd.f32 0.0, %v2011
        %v2013 = vpop.f32.mrb[0].mxu0
        %2014 = vdwg.mxu0
        %2015 = vrot.lane.b32.xlu0 %v1842, 116
        %v2016 = vpop.permute.xlu0 %2015
        %2017 = vrot.lane.b32.xlu0 %v1843, 116
        %v2018 = vpop.permute.xlu0 %2017
        %2021 = vrot.lane.b32.xlu0 %v1720, 124
        %v2022 = vpop.permute.xlu0 %2021
        %2023 = vrot.lane.b32.xlu0 %v1723, 124
        %v2024 = vpop.permute.xlu0 %2023
        %v2027 = vsel %vm569, %v2016, %v2022
        %v2028 = vsel %vm569, %v2018, %v2024
        %v2029 = vmul.f32 %v1720, %v744
        %v2030 = vmul.f32 %v1723, %v746
        %v2031 = vmul.f32 %v2027, %v341
        %v2032 = vmul.f32 %v2028, %v342
        %2035 = vrot.lane.b32.xlu0 %v2031, 8
        %v2036 = vpop.permute.xlu0 %2035
        %2037 = vrot.lane.b32.xlu0 %v2032, 8
        %v2038 = vpop.permute.xlu0 %2037
        %v2041 = vadd.f32 %v2029, %v2036
        %v2042 = vadd.f32 %v2030, %v2038
        %v2043 = vpack.c.bf16 %v2042, %v2041
        %2044 = vrot.lane.b32.xlu0 %v1869, 116
        %v2045 = vpop.permute.xlu0 %2044
        %2046 = vrot.lane.b32.xlu0 %v1870, 116
        %v2047 = vpop.permute.xlu0 %2046
        %2050 = vrot.lane.b32.xlu0 %v1778, 124
        %v2051 = vpop.permute.xlu0 %2050
        %2052 = vrot.lane.b32.xlu0 %v1781, 124
        %v2053 = vpop.permute.xlu0 %2052
        %v2056 = vsel %vm569, %v2045, %v2051
        %v2057 = vsel %vm569, %v2047, %v2053
        %v2058 = vmul.f32 %v1778, %v744
        %v2059 = vmul.f32 %v1781, %v746
        %v2060 = vmul.f32 %v2056, %v341
        %v2061 = vmul.f32 %v2057, %v342
        %2064 = vrot.lane.b32.xlu0 %v2060, 8
        %v2065 = vpop.permute.xlu0 %2064
        %2066 = vrot.lane.b32.xlu0 %v2061, 8
        %v2067 = vpop.permute.xlu0 %2066
        %v2070 = vadd.f32 %v2058, %v2065
        %v2071 = vadd.f32 %v2059, %v2067
        %v2072 = vpack.c.bf16 %v2071, %v2070
        %2074 = vrot.lane.b32.xlu0 %v2043, 120
        %v2075 = vpop.permute.xlu0 %2074
        %2077 = vrot.lane.b32.xlu0 %v2072, 120
        %v2078 = vpop.permute.xlu0 %2077
        %v2080 = vsel %vm607, %v2075, 0
        %v2083 = vsel %vm607, %v2078, 0
        %2085 = vmatprep.subr.bf16.mxu0 0
        %2086 = vmatpush1.bf16.xpose.msra.mxu0 %v2083
        %2087 = vmatprep.subr.bf16.mxu0 0
        %2088 = vmatpush1.bf16.xpose.msra.mxu0 0
        %2089 = vmatprep.subr.bf16.mxu0 0
        %2090 = vmatpush1.bf16.xpose.msra.mxu0 0
        %2091 = vmatprep.subr.bf16.mxu0 0
        %2092 = vmatpush1.bf16.xpose.msra.mxu0 0
        %2093 = vmatprep.subr.bf16.mxu0 0
        %2094 = vmatpush1.bf16.xpose.msra.mxu0 0
        %2095 = vmatprep.subr.bf16.mxu0 0
        %2096 = vmatpush1.bf16.xpose.msra.mxu0 0
        %2097 = vmatprep.subr.bf16.mxu0 0
        %2098 = vmatpush1.bf16.xpose.msra.mxu0 0
        %2099 = vmatprep.subr.bf16.mxu0 0
        %2100 = vmatpush1.bf16.xpose.msra.mxu0 0
        %2101 = vmatprep.subr.bf16.mxu0 0
        %2102 = vmatpush1.bf16.xpose.msra.mxu0 0
        %2103 = vmatprep.subr.bf16.mxu0 0
        %2104 = vmatpush1.bf16.xpose.msra.mxu0 0
        %2105 = vmatprep.subr.bf16.mxu0 0
        %2106 = vmatpush1.bf16.xpose.msra.mxu0 0
        %2107 = vmatprep.subr.bf16.mxu0 0
        %2108 = vmatpush1.bf16.xpose.msra.mxu0 0
        %2109 = vmatprep.subr.bf16.mxu0 0
        %2110 = vmatpush1.bf16.xpose.msra.mxu0 0
        %2111 = vmatprep.subr.bf16.mxu0 0
        %2112 = vmatpush1.bf16.xpose.msra.mxu0 0
        %2113 = vmatprep.subr.bf16.mxu0 0
        %2114 = vmatpush1.bf16.xpose.msra.mxu0 0
        %2115 = vmatprep.subr.bf16.mxu0 0
        %2116 = vmatpush1.bf16.xpose.msra.mxu0 0
        %2117 = vmatprep.mubr.bf16.mxu0 0
        %2118 = vmatmul.mubr.bf16.gmra.mrb[0].mxu0 %v2080
        %v2119 = vpop.f32.mrb[0].mxu0
        %v2120 = vadd.f32 0.0, %v2119
        %v2121 = vpop.f32.mrb[0].mxu0
        %v2122 = vpop.f32.mrb[0].mxu0
        %v2123 = vadd.f32 0.0, %v2122
        %v2124 = vpop.f32.mrb[0].mxu0
        %2125 = vdwg.mxu0
        %v2126 = vmul.f32 %v2120, 0.35355338
        %v2127 = vmul.f32 %v2123, 0.35355338
        %v2128 = vsel %vm337, %v2126, -1e+09
        %v2129 = vsel %vm338, %v2127, -1e+09
        %v2130 = vsel %vm659, %v2128, -inf
        %2131 = vmax.xlane.f32.xlu0 %v2130
        %v2132 = vpop.xlane.xlu0 %2131
        %v2133 = vsel %vm659, %v2129, -inf
        %2134 = vmax.xlane.f32.xlu0 %v2133
        %v2135 = vpop.xlane.xlu0 %2134
        %v2136 = vsub.f32 %v2128, %v2132
        %v2137 = vsub.f32 %v2129, %v2135
        %v2138 = vmul.f32 %v2136, 1.442695
        %v2139 = vpow.pop %v2138
        %v2140 = vmul.f32 %v2137, 1.442695
        %v2141 = vpow.pop %v2140
        %v2142 = vsel %vm659, %v2139, 0.0
        %2143 = vadd.xlane.f32.xlu0 %v2142
        %v2144 = vpop.xlane.xlu0 %2143
        %v2145 = vsel %vm659, %v2141, 0.0
        %2146 = vadd.xlane.f32.xlu0 %v2145
        %v2147 = vpop.xlane.xlu0 %2146
        %v2148 = vrcp.pop %v2144
        %v2149 = vmul.f32 %v2139, %v2148
        %v2150 = vrcp.pop %v2147
        %v2151 = vmul.f32 %v2141, %v2150
        %v2152 = vpack.c.bf16 %v2151, %v2149
        %2154 = vrot.lane.b32.xlu0 %v1896, 120
        %v2155 = vpop.permute.xlu0 %2154
        %v2158 = vsel %vm659, %v2152, 0
        %2160 = vmatprep.subr.bf16.mxu0 0
        %2161 = vmatpush1.bf16.msra.mxu0 %v2155
        %2162 = vmatprep.subr.bf16.mxu0 0
        %2163 = vmatpush1.bf16.msra.mxu0 0
        %2164 = vmatprep.subr.bf16.mxu0 0
        %2165 = vmatpush1.bf16.msra.mxu0 0
        %2166 = vmatprep.subr.bf16.mxu0 0
        %2167 = vmatpush1.bf16.msra.mxu0 0
        %2168 = vmatprep.subr.bf16.mxu0 0
        %2169 = vmatpush1.bf16.msra.mxu0 0
        %2170 = vmatprep.subr.bf16.mxu0 0
        %2171 = vmatpush1.bf16.msra.mxu0 0
        %2172 = vmatprep.subr.bf16.mxu0 0
        %2173 = vmatpush1.bf16.msra.mxu0 0
        %2174 = vmatprep.subr.bf16.mxu0 0
        %2175 = vmatpush1.bf16.msra.mxu0 0
        %2176 = vmatprep.subr.bf16.mxu0 0
        %2177 = vmatpush1.bf16.msra.mxu0 0
        %2178 = vmatprep.subr.bf16.mxu0 0
        %2179 = vmatpush1.bf16.msra.mxu0 0
        %2180 = vmatprep.subr.bf16.mxu0 0
        %2181 = vmatpush1.bf16.msra.mxu0 0
        %2182 = vmatprep.subr.bf16.mxu0 0
        %2183 = vmatpush1.bf16.msra.mxu0 0
        %2184 = vmatprep.subr.bf16.mxu0 0
        %2185 = vmatpush1.bf16.msra.mxu0 0
        %2186 = vmatprep.subr.bf16.mxu0 0
        %2187 = vmatpush1.bf16.msra.mxu0 0
        %2188 = vmatprep.subr.bf16.mxu0 0
        %2189 = vmatpush1.bf16.msra.mxu0 0
        %2190 = vmatprep.subr.bf16.mxu0 0
        %2191 = vmatpush1.bf16.msra.mxu0 0
        %2192 = vmatprep.mubr.bf16.mxu0 0
        %2193 = vmatmul.mubr.bf16.gmra.mrb[0].mxu0 %v2158
        %v2194 = vpop.f32.mrb[0].mxu0
        %v2195 = vadd.f32 0.0, %v2194
        %v2196 = vpop.f32.mrb[0].mxu0
        %v2197 = vpop.f32.mrb[0].mxu0
        %v2198 = vadd.f32 0.0, %v2197
        %v2199 = vpop.f32.mrb[0].mxu0
        %2200 = vdwg.mxu0
        %2201 = vrot.lane.b32.xlu0 %v1842, 108
        %v2202 = vpop.permute.xlu0 %2201
        %2203 = vrot.lane.b32.xlu0 %v1843, 108
        %v2204 = vpop.permute.xlu0 %2203
        %2207 = vrot.lane.b32.xlu0 %v1720, 116
        %v2208 = vpop.permute.xlu0 %2207
        %2209 = vrot.lane.b32.xlu0 %v1723, 116
        %v2210 = vpop.permute.xlu0 %2209
        %v2213 = vsel %vm569, %v2202, %v2208
        %v2214 = vsel %vm569, %v2204, %v2210
        %v2215 = vmul.f32 %v1720, %v936
        %v2216 = vmul.f32 %v1723, %v938
        %v2217 = vmul.f32 %v2213, %v341
        %v2218 = vmul.f32 %v2214, %v342
        %2221 = vrot.lane.b32.xlu0 %v2217, 16
        %v2222 = vpop.permute.xlu0 %2221
        %2223 = vrot.lane.b32.xlu0 %v2218, 16
        %v2224 = vpop.permute.xlu0 %2223
        %v2227 = vadd.f32 %v2215, %v2222
        %v2228 = vadd.f32 %v2216, %v2224
        %v2229 = vpack.c.bf16 %v2228, %v2227
        %2230 = vrot.lane.b32.xlu0 %v1869, 108
        %v2231 = vpop.permute.xlu0 %2230
        %2232 = vrot.lane.b32.xlu0 %v1870, 108
        %v2233 = vpop.permute.xlu0 %2232
        %2236 = vrot.lane.b32.xlu0 %v1778, 116
        %v2237 = vpop.permute.xlu0 %2236
        %2238 = vrot.lane.b32.xlu0 %v1781, 116
        %v2239 = vpop.permute.xlu0 %2238
        %v2242 = vsel %vm569, %v2231, %v2237
        %v2243 = vsel %vm569, %v2233, %v2239
        %v2244 = vmul.f32 %v1778, %v936
        %v2245 = vmul.f32 %v1781, %v938
        %v2246 = vmul.f32 %v2242, %v341
        %v2247 = vmul.f32 %v2243, %v342
        %2250 = vrot.lane.b32.xlu0 %v2246, 16
        %v2251 = vpop.permute.xlu0 %2250
        %2252 = vrot.lane.b32.xlu0 %v2247, 16
        %v2253 = vpop.permute.xlu0 %2252
        %v2256 = vadd.f32 %v2244, %v2251
        %v2257 = vadd.f32 %v2245, %v2253
        %v2258 = vpack.c.bf16 %v2257, %v2256
        %2260 = vrot.lane.b32.xlu0 %v2229, 112
        %v2261 = vpop.permute.xlu0 %2260
        %2263 = vrot.lane.b32.xlu0 %v2258, 112
        %v2264 = vpop.permute.xlu0 %2263
        %v2266 = vsel %vm607, %v2261, 0
        %v2269 = vsel %vm607, %v2264, 0
        %2271 = vmatprep.subr.bf16.mxu0 0
        %2272 = vmatpush1.bf16.xpose.msra.mxu0 %v2269
        %2273 = vmatprep.subr.bf16.mxu0 0
        %2274 = vmatpush1.bf16.xpose.msra.mxu0 0
        %2275 = vmatprep.subr.bf16.mxu0 0
        %2276 = vmatpush1.bf16.xpose.msra.mxu0 0
        %2277 = vmatprep.subr.bf16.mxu0 0
        %2278 = vmatpush1.bf16.xpose.msra.mxu0 0
        %2279 = vmatprep.subr.bf16.mxu0 0
        %2280 = vmatpush1.bf16.xpose.msra.mxu0 0
        %2281 = vmatprep.subr.bf16.mxu0 0
        %2282 = vmatpush1.bf16.xpose.msra.mxu0 0
        %2283 = vmatprep.subr.bf16.mxu0 0
        %2284 = vmatpush1.bf16.xpose.msra.mxu0 0
        %2285 = vmatprep.subr.bf16.mxu0 0
        %2286 = vmatpush1.bf16.xpose.msra.mxu0 0
        %2287 = vmatprep.subr.bf16.mxu0 0
        %2288 = vmatpush1.bf16.xpose.msra.mxu0 0
        %2289 = vmatprep.subr.bf16.mxu0 0
        %2290 = vmatpush1.bf16.xpose.msra.mxu0 0
        %2291 = vmatprep.subr.bf16.mxu0 0
        %2292 = vmatpush1.bf16.xpose.msra.mxu0 0
        %2293 = vmatprep.subr.bf16.mxu0 0
        %2294 = vmatpush1.bf16.xpose.msra.mxu0 0
        %2295 = vmatprep.subr.bf16.mxu0 0
        %2296 = vmatpush1.bf16.xpose.msra.mxu0 0
        %2297 = vmatprep.subr.bf16.mxu0 0
        %2298 = vmatpush1.bf16.xpose.msra.mxu0 0
        %2299 = vmatprep.subr.bf16.mxu0 0
        %2300 = vmatpush1.bf16.xpose.msra.mxu0 0
        %2301 = vmatprep.subr.bf16.mxu0 0
        %2302 = vmatpush1.bf16.xpose.msra.mxu0 0
        %2303 = vmatprep.mubr.bf16.mxu0 0
        %2304 = vmatmul.mubr.bf16.gmra.mrb[0].mxu0 %v2266
        %v2305 = vpop.f32.mrb[0].mxu0
        %v2306 = vadd.f32 0.0, %v2305
        %v2307 = vpop.f32.mrb[0].mxu0
        %v2308 = vpop.f32.mrb[0].mxu0
        %v2309 = vadd.f32 0.0, %v2308
        %v2310 = vpop.f32.mrb[0].mxu0
        %2311 = vdwg.mxu0
        %v2312 = vmul.f32 %v2306, 0.35355338
        %v2313 = vmul.f32 %v2309, 0.35355338
        %v2314 = vsel %vm337, %v2312, -1e+09
        %v2315 = vsel %vm338, %v2313, -1e+09
        %v2316 = vsel %vm659, %v2314, -inf
        %2317 = vmax.xlane.f32.xlu0 %v2316
        %v2318 = vpop.xlane.xlu0 %2317
        %v2319 = vsel %vm659, %v2315, -inf
        %2320 = vmax.xlane.f32.xlu0 %v2319
        %v2321 = vpop.xlane.xlu0 %2320
        %v2322 = vsub.f32 %v2314, %v2318
        %v2323 = vsub.f32 %v2315, %v2321
        %v2324 = vmul.f32 %v2322, 1.442695
        %v2325 = vpow.pop %v2324
        %v2326 = vmul.f32 %v2323, 1.442695
        %v2327 = vpow.pop %v2326
        %v2328 = vsel %vm659, %v2325, 0.0
        %2329 = vadd.xlane.f32.xlu0 %v2328
        %v2330 = vpop.xlane.xlu0 %2329
        %v2331 = vsel %vm659, %v2327, 0.0
        %2332 = vadd.xlane.f32.xlu0 %v2331
        %v2333 = vpop.xlane.xlu0 %2332
        %v2334 = vrcp.pop %v2330
        %v2335 = vmul.f32 %v2325, %v2334
        %v2336 = vrcp.pop %v2333
        %v2337 = vmul.f32 %v2327, %v2336
        %v2338 = vpack.c.bf16 %v2337, %v2335
        %2339 = vrot.lane.b32.xlu0 %v1896, 112
        %v2340 = vpop.permute.xlu0 %2339
        %v2343 = vsel %vm659, %v2338, 0
        %2345 = vmatprep.subr.bf16.mxu0 0
        %2346 = vmatpush1.bf16.msra.mxu0 %v2340
        %2347 = vmatprep.subr.bf16.mxu0 0
        %2348 = vmatpush1.bf16.msra.mxu0 0
        %2349 = vmatprep.subr.bf16.mxu0 0
        %2350 = vmatpush1.bf16.msra.mxu0 0
        %2351 = vmatprep.subr.bf16.mxu0 0
        %2352 = vmatpush1.bf16.msra.mxu0 0
        %2353 = vmatprep.subr.bf16.mxu0 0
        %2354 = vmatpush1.bf16.msra.mxu0 0
        %2355 = vmatprep.subr.bf16.mxu0 0
        %2356 = vmatpush1.bf16.msra.mxu0 0
        %2357 = vmatprep.subr.bf16.mxu0 0
        %2358 = vmatpush1.bf16.msra.mxu0 0
        %2359 = vmatprep.subr.bf16.mxu0 0
        %2360 = vmatpush1.bf16.msra.mxu0 0
        %2361 = vmatprep.subr.bf16.mxu0 0
        %2362 = vmatpush1.bf16.msra.mxu0 0
        %2363 = vmatprep.subr.bf16.mxu0 0
        %2364 = vmatpush1.bf16.msra.mxu0 0
        %2365 = vmatprep.subr.bf16.mxu0 0
        %2366 = vmatpush1.bf16.msra.mxu0 0
        %2367 = vmatprep.subr.bf16.mxu0 0
        %2368 = vmatpush1.bf16.msra.mxu0 0
        %2369 = vmatprep.subr.bf16.mxu0 0
        %2370 = vmatpush1.bf16.msra.mxu0 0
        %2371 = vmatprep.subr.bf16.mxu0 0
        %2372 = vmatpush1.bf16.msra.mxu0 0
        %2373 = vmatprep.subr.bf16.mxu0 0
        %2374 = vmatpush1.bf16.msra.mxu0 0
        %2375 = vmatprep.subr.bf16.mxu0 0
        %2376 = vmatpush1.bf16.msra.mxu0 0
        %2377 = vmatprep.mubr.bf16.mxu0 0
        %2378 = vmatmul.mubr.bf16.gmra.mrb[0].mxu0 %v2343
        %v2379 = vpop.f32.mrb[0].mxu0
        %v2380 = vadd.f32 0.0, %v2379
        %v2381 = vpop.f32.mrb[0].mxu0
        %v2382 = vpop.f32.mrb[0].mxu0
        %v2383 = vadd.f32 0.0, %v2382
        %v2384 = vpop.f32.mrb[0].mxu0
        %2385 = vdwg.mxu0
        %2386 = vrot.lane.b32.xlu0 %v1842, 100
        %v2387 = vpop.permute.xlu0 %2386
        %2388 = vrot.lane.b32.xlu0 %v1843, 100
        %v2389 = vpop.permute.xlu0 %2388
        %2392 = vrot.lane.b32.xlu0 %v1720, 108
        %v2393 = vpop.permute.xlu0 %2392
        %2394 = vrot.lane.b32.xlu0 %v1723, 108
        %v2395 = vpop.permute.xlu0 %2394
        %v2398 = vsel %vm569, %v2387, %v2393
        %v2399 = vsel %vm569, %v2389, %v2395
        %v2400 = vmul.f32 %v1720, %v1127
        %v2401 = vmul.f32 %v1723, %v1129
        %v2402 = vmul.f32 %v2398, %v341
        %v2403 = vmul.f32 %v2399, %v342
        %2406 = vrot.lane.b32.xlu0 %v2402, 24
        %v2407 = vpop.permute.xlu0 %2406
        %2408 = vrot.lane.b32.xlu0 %v2403, 24
        %v2409 = vpop.permute.xlu0 %2408
        %v2412 = vadd.f32 %v2400, %v2407
        %v2413 = vadd.f32 %v2401, %v2409
        %v2414 = vpack.c.bf16 %v2413, %v2412
        %2415 = vrot.lane.b32.xlu0 %v1869, 100
        %v2416 = vpop.permute.xlu0 %2415
        %2417 = vrot.lane.b32.xlu0 %v1870, 100
        %v2418 = vpop.permute.xlu0 %2417
        %2421 = vrot.lane.b32.xlu0 %v1778, 108
        %v2422 = vpop.permute.xlu0 %2421
        %2423 = vrot.lane.b32.xlu0 %v1781, 108
        %v2424 = vpop.permute.xlu0 %2423
        %v2427 = vsel %vm569, %v2416, %v2422
        %v2428 = vsel %vm569, %v2418, %v2424
        %v2429 = vmul.f32 %v1778, %v1127
        %v2430 = vmul.f32 %v1781, %v1129
        %v2431 = vmul.f32 %v2427, %v341
        %v2432 = vmul.f32 %v2428, %v342
        %2435 = vrot.lane.b32.xlu0 %v2431, 24
        %v2436 = vpop.permute.xlu0 %2435
        %2437 = vrot.lane.b32.xlu0 %v2432, 24
        %v2438 = vpop.permute.xlu0 %2437
        %v2441 = vadd.f32 %v2429, %v2436
        %v2442 = vadd.f32 %v2430, %v2438
        %v2443 = vpack.c.bf16 %v2442, %v2441
        %2445 = vrot.lane.b32.xlu0 %v2414, 104
        %v2446 = vpop.permute.xlu0 %2445
        %2448 = vrot.lane.b32.xlu0 %v2443, 104
        %v2449 = vpop.permute.xlu0 %2448
        %v2451 = vsel %vm607, %v2446, 0
        %v2454 = vsel %vm607, %v2449, 0
        %2456 = vmatprep.subr.bf16.mxu0 0
        %2457 = vmatpush1.bf16.xpose.msra.mxu0 %v2454
        %2458 = vmatprep.subr.bf16.mxu0 0
        %2459 = vmatpush1.bf16.xpose.msra.mxu0 0
        %2460 = vmatprep.subr.bf16.mxu0 0
        %2461 = vmatpush1.bf16.xpose.msra.mxu0 0
        %2462 = vmatprep.subr.bf16.mxu0 0
        %2463 = vmatpush1.bf16.xpose.msra.mxu0 0
        %2464 = vmatprep.subr.bf16.mxu0 0
        %2465 = vmatpush1.bf16.xpose.msra.mxu0 0
        %2466 = vmatprep.subr.bf16.mxu0 0
        %2467 = vmatpush1.bf16.xpose.msra.mxu0 0
        %2468 = vmatprep.subr.bf16.mxu0 0
        %2469 = vmatpush1.bf16.xpose.msra.mxu0 0
        %2470 = vmatprep.subr.bf16.mxu0 0
        %2471 = vmatpush1.bf16.xpose.msra.mxu0 0
        %2472 = vmatprep.subr.bf16.mxu0 0
        %2473 = vmatpush1.bf16.xpose.msra.mxu0 0
        %2474 = vmatprep.subr.bf16.mxu0 0
        %2475 = vmatpush1.bf16.xpose.msra.mxu0 0
        %2476 = vmatprep.subr.bf16.mxu0 0
        %2477 = vmatpush1.bf16.xpose.msra.mxu0 0
        %2478 = vmatprep.subr.bf16.mxu0 0
        %2479 = vmatpush1.bf16.xpose.msra.mxu0 0
        %2480 = vmatprep.subr.bf16.mxu0 0
        %2481 = vmatpush1.bf16.xpose.msra.mxu0 0
        %2482 = vmatprep.subr.bf16.mxu0 0
        %2483 = vmatpush1.bf16.xpose.msra.mxu0 0
        %2484 = vmatprep.subr.bf16.mxu0 0
        %2485 = vmatpush1.bf16.xpose.msra.mxu0 0
        %2486 = vmatprep.subr.bf16.mxu0 0
        %2487 = vmatpush1.bf16.xpose.msra.mxu0 0
        %2488 = vmatprep.mubr.bf16.mxu0 0
        %2489 = vmatmul.mubr.bf16.gmra.mrb[0].mxu0 %v2451
        %v2490 = vpop.f32.mrb[0].mxu0
        %v2491 = vadd.f32 0.0, %v2490
        %v2492 = vpop.f32.mrb[0].mxu0
        %v2493 = vpop.f32.mrb[0].mxu0
        %v2494 = vadd.f32 0.0, %v2493
        %v2495 = vpop.f32.mrb[0].mxu0
        %2496 = vdwg.mxu0
        %v2497 = vmul.f32 %v2491, 0.35355338
        %v2498 = vmul.f32 %v2494, 0.35355338
        %v2499 = vsel %vm337, %v2497, -1e+09
        %v2500 = vsel %vm338, %v2498, -1e+09
        %v2501 = vsel %vm659, %v2499, -inf
        %2502 = vmax.xlane.f32.xlu0 %v2501
        %v2503 = vpop.xlane.xlu0 %2502
        %v2504 = vsel %vm659, %v2500, -inf
        %2505 = vmax.xlane.f32.xlu0 %v2504
        %v2506 = vpop.xlane.xlu0 %2505
        %v2507 = vsub.f32 %v2499, %v2503
        %v2508 = vsub.f32 %v2500, %v2506
        %v2509 = vmul.f32 %v2507, 1.442695
        %v2510 = vpow.pop %v2509
        %v2511 = vmul.f32 %v2508, 1.442695
        %v2512 = vpow.pop %v2511
        %v2513 = vsel %vm659, %v2510, 0.0
        %2514 = vadd.xlane.f32.xlu0 %v2513
        %v2515 = vpop.xlane.xlu0 %2514
        %v2516 = vsel %vm659, %v2512, 0.0
        %2517 = vadd.xlane.f32.xlu0 %v2516
        %v2518 = vpop.xlane.xlu0 %2517
        %v2519 = vrcp.pop %v2515
        %v2520 = vmul.f32 %v2510, %v2519
        %v2521 = vrcp.pop %v2518
        %v2522 = vmul.f32 %v2512, %v2521
        %v2523 = vpack.c.bf16 %v2522, %v2520
        %2524 = vrot.lane.b32.xlu0 %v1896, 104
        %v2525 = vpop.permute.xlu0 %2524
        %v2528 = vsel %vm659, %v2523, 0
        %2530 = vmatprep.subr.bf16.mxu0 0
        %2531 = vmatpush1.bf16.msra.mxu0 %v2525
        %2532 = vmatprep.subr.bf16.mxu0 0
        %2533 = vmatpush1.bf16.msra.mxu0 0
        %2534 = vmatprep.subr.bf16.mxu0 0
        %2535 = vmatpush1.bf16.msra.mxu0 0
        %2536 = vmatprep.subr.bf16.mxu0 0
        %2537 = vmatpush1.bf16.msra.mxu0 0
        %2538 = vmatprep.subr.bf16.mxu0 0
        %2539 = vmatpush1.bf16.msra.mxu0 0
        %2540 = vmatprep.subr.bf16.mxu0 0
        %2541 = vmatpush1.bf16.msra.mxu0 0
        %2542 = vmatprep.subr.bf16.mxu0 0
        %2543 = vmatpush1.bf16.msra.mxu0 0
        %2544 = vmatprep.subr.bf16.mxu0 0
        %2545 = vmatpush1.bf16.msra.mxu0 0
        %2546 = vmatprep.subr.bf16.mxu0 0
        %2547 = vmatpush1.bf16.msra.mxu0 0
        %2548 = vmatprep.subr.bf16.mxu0 0
        %2549 = vmatpush1.bf16.msra.mxu0 0
        %2550 = vmatprep.subr.bf16.mxu0 0
        %2551 = vmatpush1.bf16.msra.mxu0 0
        %2552 = vmatprep.subr.bf16.mxu0 0
        %2553 = vmatpush1.bf16.msra.mxu0 0
        %2554 = vmatprep.subr.bf16.mxu0 0
        %2555 = vmatpush1.bf16.msra.mxu0 0
        %2556 = vmatprep.subr.bf16.mxu0 0
        %2557 = vmatpush1.bf16.msra.mxu0 0
        %2558 = vmatprep.subr.bf16.mxu0 0
        %2559 = vmatpush1.bf16.msra.mxu0 0
        %2560 = vmatprep.subr.bf16.mxu0 0
        %2561 = vmatpush1.bf16.msra.mxu0 0
        %2562 = vmatprep.mubr.bf16.mxu0 0
        %2563 = vmatmul.mubr.bf16.gmra.mrb[0].mxu0 %v2528
        %v2564 = vpop.f32.mrb[0].mxu0
        %v2565 = vadd.f32 0.0, %v2564
        %v2566 = vpop.f32.mrb[0].mxu0
        %v2567 = vpop.f32.mrb[0].mxu0
        %v2568 = vadd.f32 0.0, %v2567
        %v2569 = vpop.f32.mrb[0].mxu0
        %2570 = vdwg.mxu0
        %2573 = vrot.lane.b32.xlu0 %v2195, 8
        %v2574 = vpop.permute.xlu0 %2573
        %2575 = vrot.lane.b32.xlu0 %v2198, 8
        %v2576 = vpop.permute.xlu0 %2575
        %2581 = vrot.lane.b32.xlu0 %v2380, 16
        %v2582 = vpop.permute.xlu0 %2581
        %2583 = vrot.lane.b32.xlu0 %v2383, 16
        %v2584 = vpop.permute.xlu0 %2583
        %2589 = vrot.lane.b32.xlu0 %v2565, 24
        %v2590 = vpop.permute.xlu0 %2589
        %2591 = vrot.lane.b32.xlu0 %v2568, 24
        %v2592 = vpop.permute.xlu0 %2591
        %v2595 = vsel %vm607, %v2009, %v2574
        %v2596 = vsel %vm607, %v2012, %v2576
        %v2597 = vsel %vm659, %v2595, %v2582
        %v2598 = vsel %vm659, %v2596, %v2584
        %v2599 = vsel %vm1331, %v2597, %v2590
        %v2600 = vsel %vm1331, %v2598, %v2592
        %v2601 = vpack.c.bf16 %v2600, %v2599
        %s2602 = scalar_lea.vmem %s3, 16
        %v2603 = vld [vmem:[%s2602] sm:$0xf]
        %v2604 = vld [vmem:[%s2602 + $0x4] sm:$0xf]
        %v2605 = vld [vmem:[%s2602 + $0x8] sm:$0xf]
        %v2606 = vld [vmem:[%s2602 + $0xc] sm:$0xf]
        %v2611 = vunpack.c.l.b16 %v2603
        %v2612 = vunpack.c.l.b16 %v2604
        %v2613 = vunpack.c.l.b16 %v2605
        %v2614 = vunpack.c.l.b16 %v2606
        %v2615 = vpack.c.b16 %v2612, %v2611
        %v2616 = vpack.c.b16 %v2614, %v2613
        %v2620 = vsel %vm350, %v2601, 0
        %2622 = vmatprep.subr.bf16.mxu0 0
        %2623 = vmatpush1.bf16.msra.mxu0 %v2615
        %2624 = vmatprep.subr.bf16.mxu0 0
        %2625 = vmatpush1.bf16.msra.mxu0 %v2616
        %2626 = vmatprep.subr.bf16.mxu0 0
        %2627 = vmatpush1.bf16.msra.mxu0 0
        %2628 = vmatprep.subr.bf16.mxu0 0
        %2629 = vmatpush1.bf16.msra.mxu0 0
        %2630 = vmatprep.subr.bf16.mxu0 0
        %2631 = vmatpush1.bf16.msra.mxu0 0
        %2632 = vmatprep.subr.bf16.mxu0 0
        %2633 = vmatpush1.bf16.msra.mxu0 0
        %2634 = vmatprep.subr.bf16.mxu0 0
        %2635 = vmatpush1.bf16.msra.mxu0 0
        %2636 = vmatprep.subr.bf16.mxu0 0
        %2637 = vmatpush1.bf16.msra.mxu0 0
        %2638 = vmatprep.subr.bf16.mxu0 0
        %2639 = vmatpush1.bf16.msra.mxu0 0
        %2640 = vmatprep.subr.bf16.mxu0 0
        %2641 = vmatpush1.bf16.msra.mxu0 0
        %2642 = vmatprep.subr.bf16.mxu0 0
        %2643 = vmatpush1.bf16.msra.mxu0 0
        %2644 = vmatprep.subr.bf16.mxu0 0
        %2645 = vmatpush1.bf16.msra.mxu0 0
        %2646 = vmatprep.subr.bf16.mxu0 0
        %2647 = vmatpush1.bf16.msra.mxu0 0
        %2648 = vmatprep.subr.bf16.mxu0 0
        %2649 = vmatpush1.bf16.msra.mxu0 0
        %2650 = vmatprep.subr.bf16.mxu0 0
        %2651 = vmatpush1.bf16.msra.mxu0 0
        %2652 = vmatprep.subr.bf16.mxu0 0
        %2653 = vmatpush1.bf16.msra.mxu0 0
        %2654 = vmatprep.mubr.bf16.mxu0 0
        %2655 = vmatmul.mubr.bf16.gmra.mrb[0].mxu0 %v2620
        %v2656 = vpop.f32.mrb[0].mxu0
        %v2657 = vadd.f32 0.0, %v2656
        %v2658 = vpop.f32.mrb[0].mxu0
        %v2659 = vpop.f32.mrb[0].mxu0
        %v2660 = vadd.f32 0.0, %v2659
        %v2661 = vpop.f32.mrb[0].mxu0
        %2662 = vdwg.mxu0
        %v2663 = vadd.f32 %v1636, %v2657
        %v2664 = vadd.f32 %v1637, %v2660
        %s2665 = scalar_lea.vmem %s1, 3
        %v2666 = vld [vmem:[%s2665] sm:$0x1]
        %v2667 = vmul.f32 %v2663, %v2663
        %v2668 = vmul.f32 %v2664, %v2664
        %v2669 = vsel %vm350, %v2667, 0.0
        %2670 = vadd.xlane.f32.xlu0 %v2669
        %v2671 = vpop.xlane.xlu0 %2670
        %v2672 = vsel %vm350, %v2668, 0.0
        %2673 = vadd.xlane.f32.xlu0 %v2672
        %v2674 = vpop.xlane.xlu0 %2673
        %v2675 = vmul.f32 %v2671, %v357
        %v2676 = vmul.f32 %v2674, %v357
        %v2677 = vadd.f32 %v2675, 1e-05
        %v2678 = vadd.f32 %v2676, 1e-05
        %v2679 = vrsqrt.pop %v2677
        %v2680 = vrsqrt.pop %v2678
        %v2681 = vmul.f32 %v2663, %v2679
        %v2682 = vmul.f32 %v2664, %v2680
        %v2684 = vlaneseq
        %v2685 = vshrl.u32 %v2684, 7
        %v2686 = vsub.s32 0, %v2685
        %v2687 = vrot.slane %v2666, %v2686
        %v2689 = vmul.f32 %v2681, %v2687
        %v2690 = vmul.f32 %v2682, %v2687
        %v2691 = vpack.c.bf16 %v2690, %v2689
        %s2692 = scalar_lea.vmem %s4, 32
        %v2693 = vld [vmem:[%s2692] sm:$0xf]
        %v2694 = vld [vmem:[%s2692 + $0x4] sm:$0xf]
        %v2695 = vld [vmem:[%s2692 + $0x8] sm:$0xf]
        %v2696 = vld [vmem:[%s2692 + $0xc] sm:$0xf]
        %v2701 = vunpack.c.l.b16 %v2693
        %v2702 = vunpack.c.l.b16 %v2694
        %v2703 = vunpack.c.l.b16 %v2695
        %v2704 = vunpack.c.l.b16 %v2696
        %v2705 = vpack.c.b16 %v2702, %v2701
        %v2706 = vpack.c.b16 %v2704, %v2703
        %v2710 = vsel %vm350, %v2691, 0
        %2712 = vmatprep.subr.bf16.mxu0 0
        %2713 = vmatpush1.bf16.msra.mxu0 %v2705
        %2714 = vmatprep.subr.bf16.mxu0 0
        %2715 = vmatpush1.bf16.msra.mxu0 %v2706
        %2716 = vmatprep.subr.bf16.mxu0 0
        %2717 = vmatpush1.bf16.msra.mxu0 0
        %2718 = vmatprep.subr.bf16.mxu0 0
        %2719 = vmatpush1.bf16.msra.mxu0 0
        %2720 = vmatprep.subr.bf16.mxu0 0
        %2721 = vmatpush1.bf16.msra.mxu0 0
        %2722 = vmatprep.subr.bf16.mxu0 0
        %2723 = vmatpush1.bf16.msra.mxu0 0
        %2724 = vmatprep.subr.bf16.mxu0 0
        %2725 = vmatpush1.bf16.msra.mxu0 0
        %2726 = vmatprep.subr.bf16.mxu0 0
        %2727 = vmatpush1.bf16.msra.mxu0 0
        %2728 = vmatprep.subr.bf16.mxu0 0
        %2729 = vmatpush1.bf16.msra.mxu0 0
        %2730 = vmatprep.subr.bf16.mxu0 0
        %2731 = vmatpush1.bf16.msra.mxu0 0
        %2732 = vmatprep.subr.bf16.mxu0 0
        %2733 = vmatpush1.bf16.msra.mxu0 0
        %2734 = vmatprep.subr.bf16.mxu0 0
        %2735 = vmatpush1.bf16.msra.mxu0 0
        %2736 = vmatprep.subr.bf16.mxu0 0
        %2737 = vmatpush1.bf16.msra.mxu0 0
        %2738 = vmatprep.subr.bf16.mxu0 0
        %2739 = vmatpush1.bf16.msra.mxu0 0
        %2740 = vmatprep.subr.bf16.mxu0 0
        %2741 = vmatpush1.bf16.msra.mxu0 0
        %2742 = vmatprep.subr.bf16.mxu0 0
        %2743 = vmatpush1.bf16.msra.mxu0 0
        %2744 = vmatprep.mubr.bf16.mxu0 0
        %2745 = vmatmul.mubr.bf16.gmra.mrb[0].mxu0 %v2710
        %v2746 = vpop.f32.mrb[0].mxu0
        %v2747 = vadd.f32 0.0, %v2746
        %v2748 = vpop.f32.mrb[0].mxu0
        %v2749 = vpop.f32.mrb[0].mxu0
        %v2750 = vadd.f32 0.0, %v2749
        %v2751 = vpop.f32.mrb[0].mxu0
        %2752 = vdwg.mxu0
        %s2753 = scalar_lea.vmem %s4, 48
        %v2754 = vld [vmem:[%s2753] sm:$0xf]
        %v2755 = vld [vmem:[%s2753 + $0x4] sm:$0xf]
        %v2756 = vld [vmem:[%s2753 + $0x8] sm:$0xf]
        %v2757 = vld [vmem:[%s2753 + $0xc] sm:$0xf]
        %v2762 = vunpack.c.l.b16 %v2754
        %v2763 = vunpack.c.l.b16 %v2755
        %v2764 = vunpack.c.l.b16 %v2756
        %v2765 = vunpack.c.l.b16 %v2757
        %v2766 = vpack.c.b16 %v2763, %v2762
        %v2767 = vpack.c.b16 %v2765, %v2764
        %2770 = vmatprep.subr.bf16.mxu0 0
        %2771 = vmatpush1.bf16.msra.mxu0 %v2766
        %2772 = vmatprep.subr.bf16.mxu0 0
        %2773 = vmatpush1.bf16.msra.mxu0 %v2767
        %2774 = vmatprep.subr.bf16.mxu0 0
        %2775 = vmatpush1.bf16.msra.mxu0 0
        %2776 = vmatprep.subr.bf16.mxu0 0
        %2777 = vmatpush1.bf16.msra.mxu0 0
        %2778 = vmatprep.subr.bf16.mxu0 0
        %2779 = vmatpush1.bf16.msra.mxu0 0
        %2780 = vmatprep.subr.bf16.mxu0 0
        %2781 = vmatpush1.bf16.msra.mxu0 0
        %2782 = vmatprep.subr.bf16.mxu0 0
        %2783 = vmatpush1.bf16.msra.mxu0 0
        %2784 = vmatprep.subr.bf16.mxu0 0
        %2785 = vmatpush1.bf16.msra.mxu0 0
        %2786 = vmatprep.subr.bf16.mxu0 0
        %2787 = vmatpush1.bf16.msra.mxu0 0
        %2788 = vmatprep.subr.bf16.mxu0 0
        %2789 = vmatpush1.bf16.msra.mxu0 0
        %2790 = vmatprep.subr.bf16.mxu0 0
        %2791 = vmatpush1.bf16.msra.mxu0 0
        %2792 = vmatprep.subr.bf16.mxu0 0
        %2793 = vmatpush1.bf16.msra.mxu0 0
        %2794 = vmatprep.subr.bf16.mxu0 0
        %2795 = vmatpush1.bf16.msra.mxu0 0
        %2796 = vmatprep.subr.bf16.mxu0 0
        %2797 = vmatpush1.bf16.msra.mxu0 0
        %2798 = vmatprep.subr.bf16.mxu0 0
        %2799 = vmatpush1.bf16.msra.mxu0 0
        %2800 = vmatprep.subr.bf16.mxu0 0
        %2801 = vmatpush1.bf16.msra.mxu0 0
        %2802 = vmatprep.mubr.bf16.mxu0 0
        %2803 = vmatmul.mubr.bf16.gmra.mrb[0].mxu0 %v2710
        %v2804 = vpop.f32.mrb[0].mxu0
        %v2805 = vadd.f32 0.0, %v2804
        %v2806 = vpop.f32.mrb[0].mxu0
        %v2807 = vpop.f32.mrb[0].mxu0
        %v2808 = vadd.f32 0.0, %v2807
        %v2809 = vpop.f32.mrb[0].mxu0
        %2810 = vdwg.mxu0
        %v2811 = vxor.u32 %v2747, 2147483648
        %v2812 = vxor.u32 %v2750, 2147483648
        %v2813 = vmul.f32 %v2811, 1.442695
        %v2814 = vpow.pop %v2813
        %v2815 = vmul.f32 %v2812, 1.442695
        %v2816 = vpow.pop %v2815
        %v2817 = vadd.f32 %v2814, 1.0
        %v2818 = vadd.f32 %v2816, 1.0
        %v2819 = vrcp.pop %v2817
        %v2820 = vmul.f32 1.0, %v2819
        %v2821 = vrcp.pop %v2818
        %v2822 = vmul.f32 1.0, %v2821
        %v2823 = vmul.f32 %v2747, %v2820
        %v2824 = vmul.f32 %v2750, %v2822
        %v2825 = vmul.f32 %v2823, %v2805
        %v2826 = vmul.f32 %v2824, %v2808
        %v2827 = vpack.c.bf16 %v2826, %v2825
        %s2828 = scalar_lea.vmem %s5, 32
        %v2829 = vld [vmem:[%s2828] sm:$0xf]
        %v2830 = vld [vmem:[%s2828 + $0x4] sm:$0xf]
        %v2831 = vld [vmem:[%s2828 + $0x8] sm:$0xf]
        %v2832 = vld [vmem:[%s2828 + $0xc] sm:$0xf]
        %v2833 = vld [vmem:[%s2828 + $0x10] sm:$0xf]
        %v2834 = vld [vmem:[%s2828 + $0x14] sm:$0xf]
        %v2835 = vld [vmem:[%s2828 + $0x18] sm:$0xf]
        %v2836 = vld [vmem:[%s2828 + $0x1c] sm:$0xf]
        %v2845 = vunpack.c.l.b16 %v2829
        %v2846 = vunpack.c.l.b16 %v2830
        %v2847 = vunpack.c.l.b16 %v2831
        %v2848 = vunpack.c.l.b16 %v2832
        %v2849 = vunpack.c.l.b16 %v2833
        %v2850 = vunpack.c.l.b16 %v2834
        %v2851 = vunpack.c.l.b16 %v2835
        %v2852 = vunpack.c.l.b16 %v2836
        %v2853 = vpack.c.b16 %v2846, %v2845
        %v2854 = vpack.c.b16 %v2848, %v2847
        %v2855 = vpack.c.b16 %v2850, %v2849
        %v2856 = vpack.c.b16 %v2852, %v2851
        %v2862 = vsel %vm1591, %v2827, 0
        %2864 = vmatprep.subr.bf16.mxu0 0
        %2865 = vmatpush1.bf16.msra.mxu0 %v2853
        %2866 = vmatprep.subr.bf16.mxu0 0
        %2867 = vmatpush1.bf16.msra.mxu0 %v2854
        %2868 = vmatprep.subr.bf16.mxu0 0
        %2869 = vmatpush1.bf16.msra.mxu0 %v2855
        %2870 = vmatprep.subr.bf16.mxu0 0
        %2871 = vmatpush1.bf16.msra.mxu0 %v2856
        %2872 = vmatprep.subr.bf16.mxu0 0
        %2873 = vmatpush1.bf16.msra.mxu0 0
        %2874 = vmatprep.subr.bf16.mxu0 0
        %2875 = vmatpush1.bf16.msra.mxu0 0
        %2876 = vmatprep.subr.bf16.mxu0 0
        %2877 = vmatpush1.bf16.msra.mxu0 0
        %2878 = vmatprep.subr.bf16.mxu0 0
        %2879 = vmatpush1.bf16.msra.mxu0 0
        %2880 = vmatprep.subr.bf16.mxu0 0
        %2881 = vmatpush1.bf16.msra.mxu0 0
        %2882 = vmatprep.subr.bf16.mxu0 0
        %2883 = vmatpush1.bf16.msra.mxu0 0
        %2884 = vmatprep.subr.bf16.mxu0 0
        %2885 = vmatpush1.bf16.msra.mxu0 0
        %2886 = vmatprep.subr.bf16.mxu0 0
        %2887 = vmatpush1.bf16.msra.mxu0 0
        %2888 = vmatprep.subr.bf16.mxu0 0
        %2889 = vmatpush1.bf16.msra.mxu0 0
        %2890 = vmatprep.subr.bf16.mxu0 0
        %2891 = vmatpush1.bf16.msra.mxu0 0
        %2892 = vmatprep.subr.bf16.mxu0 0
        %2893 = vmatpush1.bf16.msra.mxu0 0
        %2894 = vmatprep.subr.bf16.mxu0 0
        %2895 = vmatpush1.bf16.msra.mxu0 0
        %2896 = vmatprep.mubr.bf16.mxu0 0
        %2897 = vmatmul.mubr.bf16.gmra.mrb[0].mxu0 %v2862
        %v2898 = vpop.f32.mrb[0].mxu0
        %v2899 = vadd.f32 0.0, %v2898
        %v2900 = vpop.f32.mrb[0].mxu0
        %v2901 = vpop.f32.mrb[0].mxu0
        %v2902 = vadd.f32 0.0, %v2901
        %v2903 = vpop.f32.mrb[0].mxu0
        %2904 = vdwg.mxu0
        %v2905 = vadd.f32 %v2663, %v2899
        %v2906 = vadd.f32 %v2664, %v2902
        %s2907 = scalar_lea.vmem %s1, 4
        %v2908 = vld [vmem:[%s2907] sm:$0x1]
        %v2909 = vmul.f32 %v2905, %v2905
        %v2910 = vmul.f32 %v2906, %v2906
        %v2911 = vsel %vm350, %v2909, 0.0
        %2912 = vadd.xlane.f32.xlu0 %v2911
        %v2913 = vpop.xlane.xlu0 %2912
        %v2914 = vsel %vm350, %v2910, 0.0
        %2915 = vadd.xlane.f32.xlu0 %v2914
        %v2916 = vpop.xlane.xlu0 %2915
        %v2917 = vmul.f32 %v2913, %v357
        %v2918 = vmul.f32 %v2916, %v357
        %v2919 = vadd.f32 %v2917, 1e-05
        %v2920 = vadd.f32 %v2918, 1e-05
        %v2921 = vrsqrt.pop %v2919
        %v2922 = vrsqrt.pop %v2920
        %v2923 = vmul.f32 %v2905, %v2921
        %v2924 = vmul.f32 %v2906, %v2922
        %v2926 = vlaneseq
        %v2927 = vshrl.u32 %v2926, 7
        %v2928 = vsub.s32 0, %v2927
        %v2929 = vrot.slane %v2908, %v2928
        %v2931 = vmul.f32 %v2923, %v2929
        %v2932 = vmul.f32 %v2924, %v2929
        %v2933 = vpack.c.bf16 %v2932, %v2931
        %v2934 = vld [vmem:[%s6] sm:$0xf]
        %v2935 = vld [vmem:[%s6 + $0x4] sm:$0xf]
        %v2936 = vld [vmem:[%s6 + $0x8] sm:$0xf]
        %v2937 = vld [vmem:[%s6 + $0xc] sm:$0xf]
        %v2942 = vunpack.c.l.b16 %v2934
        %v2943 = vunpack.c.l.b16 %v2935
        %v2944 = vunpack.c.l.b16 %v2936
        %v2945 = vunpack.c.l.b16 %v2937
        %v2946 = vpack.c.b16 %v2943, %v2942
        %v2947 = vpack.c.b16 %v2945, %v2944
        %v2951 = vsel %vm350, %v2933, 0
        %2953 = vmatprep.subr.bf16.mxu0 0
        %2954 = vmatpush1.bf16.msra.mxu0 %v2946
        %2955 = vmatprep.subr.bf16.mxu0 0
        %2956 = vmatpush1.bf16.msra.mxu0 %v2947
        %2957 = vmatprep.subr.bf16.mxu0 0
        %2958 = vmatpush1.bf16.msra.mxu0 0
        %2959 = vmatprep.subr.bf16.mxu0 0
        %2960 = vmatpush1.bf16.msra.mxu0 0
        %2961 = vmatprep.subr.bf16.mxu0 0
        %2962 = vmatpush1.bf16.msra.mxu0 0
        %2963 = vmatprep.subr.bf16.mxu0 0
        %2964 = vmatpush1.bf16.msra.mxu0 0
        %2965 = vmatprep.subr.bf16.mxu0 0
        %2966 = vmatpush1.bf16.msra.mxu0 0
        %2967 = vmatprep.subr.bf16.mxu0 0
        %2968 = vmatpush1.bf16.msra.mxu0 0
        %2969 = vmatprep.subr.bf16.mxu0 0
        %2970 = vmatpush1.bf16.msra.mxu0 0
        %2971 = vmatprep.subr.bf16.mxu0 0
        %2972 = vmatpush1.bf16.msra.mxu0 0
        %2973 = vmatprep.subr.bf16.mxu0 0
        %2974 = vmatpush1.bf16.msra.mxu0 0
        %2975 = vmatprep.subr.bf16.mxu0 0
        %2976 = vmatpush1.bf16.msra.mxu0 0
        %2977 = vmatprep.subr.bf16.mxu0 0
        %2978 = vmatpush1.bf16.msra.mxu0 0
        %2979 = vmatprep.subr.bf16.mxu0 0
        %2980 = vmatpush1.bf16.msra.mxu0 0
        %2981 = vmatprep.subr.bf16.mxu0 0
        %2982 = vmatpush1.bf16.msra.mxu0 0
        %2983 = vmatprep.subr.bf16.mxu0 0
        %2984 = vmatpush1.bf16.msra.mxu0 0
        %2985 = vmatprep.mubr.bf16.mxu0 0
        %2986 = vmatmul.mubr.bf16.gmra.mrb[0].mxu0 %v2951
        %v2987 = vpop.f32.mrb[0].mxu0
        %v2988 = vadd.f32 0.0, %v2987
        %v2989 = vpop.f32.mrb[0].mxu0
        %v2990 = vpop.f32.mrb[0].mxu0
        %v2991 = vadd.f32 0.0, %v2990
        %v2992 = vpop.f32.mrb[0].mxu0
        %2993 = vdwg.mxu0
        %2994 = vst.msk [vmem:[%s325] sm:$0xff] %vm1591, %v2988
        %2995 = vst.msk [vmem:[%s325 + $0x8] sm:$0xff] %vm1591, %v2991
        %s2996 = sand.u32 %s225, 1
        %s2997 = scalar_lea.sflag [#allocation3], %s2996
        %s2998 = sand.u32 %s225, 1
        %s2999 = smul.addr %s2998, 16
        %s3000 = scalar_lea.vmem [#allocation2], %s2999
        // Predicated region
        $region57: #{wrapped_llama_forward.1} parent=55 // pred_check
          %p3001 = pneg %p235
        $region58: #{wrapped_llama_forward.1} parent=55 // pred_check_branch
          %3003 = sbr.rel (%p3001) target = $region60
        $region59: #{wrapped_llama_forward.1} parent=55 // pred_region
          %s3005 = ssub.s32 256, 256
          %3006 = vsyncadd %s2997, %s3005
          %s3007 = smul.addr %s23, 2
          %s3008 = smul.addr %s3007, 128
          %s3009 = scalar_lea.hbm %s9, %s3008
          %s3010 = sshll.u32 %s3000, 4
          %s3011 = int_to_ptr.vmem [resolvable:$true] %s3010
          %3016 = dma.vmem_to_hbm [thread:$0]  %s3011, 256, %s3009, %s2997, 128, 128, 8
        $region60: #{wrapped_llama_forward.1} parent=55 // pred_fallthru
          _
      $region56: #{wrapped_llama_forward.1} parent=5 // pred_fallthru
        _
      %p3017 = scmp.le.s32.totalorder 2, %s18
      // Predicated region
      $region61: #{wrapped_llama_forward.1} parent=5 // pred_check
        %p3018 = pneg %p3017
      $region62: #{wrapped_llama_forward.1} parent=5 // pred_check_branch
        %3020 = sbr.rel (%p3018) target = $region64
      $region63: #{wrapped_llama_forward.1} parent=5 // pred_region
        %s3021 = ssub.s32 %s18, 2
        // Predicated region
        $region65: #{wrapped_llama_forward.1} parent=63 // pred_check
          %p3022 = pneg %p241
        $region66: #{wrapped_llama_forward.1} parent=63 // pred_check_branch
          %3024 = sbr.rel (%p3022) target = $region68
        $region67: #{wrapped_llama_forward.1} parent=63 // pred_region
          %s3025 = sand.u32 %s226, 1
          %s3026 = scalar_lea.sflag [#allocation3], %s3025
          %s3027 = sand.u32 %s226, 1
          %s3028 = smul.addr %s3027, 16
          %s3029 = scalar_lea.vmem [#allocation2], %s3028
          %3030 = dma.done %s3026, 256
        $region68: #{wrapped_llama_forward.1} parent=63 // pred_fallthru
          _
      $region64: #{wrapped_llama_forward.1} parent=5 // pred_fallthru
        _
    $region6: #{wrapped_llama_forward.1} parent=1 // loop_footer
      %s22 = sadd.s32 1, %s18
    $region7: #{wrapped_llama_forward.1} parent=1 // loop_footer_branch
      %17 = sbr.rel target = $region3
    $region8: #{wrapped_llama_forward.1} parent=1 // loop_exit
      _
    %3031 = vsyncpa [#allocation3], 1
    %s3032 = scalar_lea.sflag [#allocation3], 1
    %3033 = vsyncpa %s3032, 1

</llo_original>
